<compile_context>
chip_gen: v7x
topology: tpu7x:2x2x1
jax: 0.10.0
libtpu: 0.0.40
codegen_flags: <defaults>
</compile_context>

<pallas_src>
import jax
import jax.numpy as jnp
from jax import lax
from jax.experimental import pallas as pl
from jax.experimental.pallas import tpu as pltpu

INPUT_IMG_SIZE = 28            # conv output spatial size -> 784 features
CONV_IN = INPUT_IMG_SIZE + 2   # 30: 3x3 no-pad conv needs 30x30 input
BN_EPS = 1e-5
LANE = 128


def LINEAR_LAYERS(nb_layers: int, output_size: int):
    return (
        [('L', INPUT_IMG_SIZE * INPUT_IMG_SIZE, 92), ('R',), ('B', 92)]
        + [('L', 92, 92), ('R',), ('B', 92)] * (nb_layers - 3)
        + [('L', 92, output_size)]
    )


def _round_up(x, m):
    return (x + m - 1) // m * m


def _cdiv(a, b):
    return -(-a // b)


# ---------------------------------------------------------------------------
# Feature probe: can this JAX build single-buffer a grid-invariant input via
# pipeline_mode=pl.Buffered(1)?  Probed once (eagerly, even under jit tracing);
# falls back to default double buffering if unsupported.
# ---------------------------------------------------------------------------
_SINGLE_BUFFER_OK = None


def _probe_kernel(w_ref, o_ref):
    o_ref[...] = w_ref[...] + 1.0


def _single_buffer_supported():
    global _SINGLE_BUFFER_OK
    if _SINGLE_BUFFER_OK is None:
        try:
            with jax.ensure_compile_time_eval():
                spec = pl.BlockSpec((8, 128), lambda i: (0, 0),
                                    pipeline_mode=pl.Buffered(1))
                fn = pl.pallas_call(
                    _probe_kernel,
                    out_shape=jax.ShapeDtypeStruct((8, 128), jnp.float32),
                    grid=(2,),
                    in_specs=[spec],
                    out_specs=pl.BlockSpec((8, 128), lambda i: (0, 0)),
                )
                jax.block_until_ready(fn(jnp.zeros((8, 128), jnp.float32)))
            _SINGLE_BUFFER_OK = True
        except Exception:
            _SINGLE_BUFFER_OK = False
    return _SINGLE_BUFFER_OK


# ---------------------------------------------------------------------------
# Fused kernel: the whole network is a chain of lane-dense matmuls + ReLU.
#   refs = (x_ref, W0, b0, W1, b1, ..., W_{n-1}, b_{n-1}, out_ref)
#   x_ref: bf16 (B_blk, IN_PAD)
#   Wk   : bf16 (Kpad, Npad) in VMEM, constant index_map -> fetched once.
#   bk   : f32  (1, Npad)
# ---------------------------------------------------------------------------
def _fused_forward_kernel(*refs):
    x_ref, out_ref = refs[0], refs[-1]
    params = refs[1:-1]
    n_layers = len(params) // 2
    h = x_ref[...]                                        # bf16 activations
    for li in range(n_layers):
        w = params[2 * li][...]                           # bf16 weights (MXU)
        b = params[2 * li + 1][...]                       # f32 bias (1, N)
        acc = jnp.dot(h, w, preferred_element_type=jnp.float32) + b
        if li < n_layers - 1:
            # ReLU in f32 on the VPU, then back to bf16 for the next MXU pass.
            h = jnp.maximum(acc, 0.0).astype(jnp.bfloat16)
        else:
            out_ref[...] = acc.astype(out_ref.dtype)


def fp32_mnist_forward(x_nchw, kernel_params, output_size, block_batch=512):
    """x_nchw: (B, 1, 30, 30) f32 -> (B, output_size) f32 logits."""
    B = x_nchw.shape[0]
    in_pad = kernel_params[0].shape[0]       # 1024 (900 padded)
    out_pad = kernel_params[-1].shape[1]     # 128-padded output width

    # Balanced batch blocking: <= 7 zero pad rows per block instead of padding
    # all the way to a multiple of block_batch.
    n_blocks = max(1, _cdiv(B, block_batch))
    b_blk = _round_up(_cdiv(B, n_blocks), 8)
    b_tot = n_blocks * b_blk

    # bf16 input activations + single fused pad (no zeros+scatter roundtrip).
    x_flat = x_nchw.reshape(B, -1).astype(jnp.bfloat16)          # (B, 900)
    x_pad = jnp.pad(x_flat, ((0, b_tot - B), (0, in_pad - x_flat.shape[1])))

    single_buf = _single_buffer_supported()

    def _const_spec(shape):
        # Grid-invariant operand: constant index_map; single-buffer if possible.
        if single_buf:
            return pl.BlockSpec(shape, lambda i: (0, 0),
                                pipeline_mode=pl.Buffered(1))
        return pl.BlockSpec(shape, lambda i: (0, 0))

    grid = (n_blocks,)
    in_specs = [pl.BlockSpec((b_blk, in_pad), lambda i: (i, 0))]
    for p in kernel_params:                  # weights/biases: VMEM-resident
        in_specs.append(_const_spec(p.shape))
    out_specs = pl.BlockSpec((b_blk, out_pad), lambda i: (i, 0))

    flops = 0
    bytes_accessed = int(x_pad.size) * 2 + b_tot * out_pad * 4
    for li in range(len(kernel_params) // 2):
        w = kernel_params[2 * li]
        b = kernel_params[2 * li + 1]
        flops += 2 * b_tot * w.shape[0] * w.shape[1]
        bytes_accessed += int(w.size) * w.dtype.itemsize
        bytes_accessed += int(b.size) * b.dtype.itemsize

    out = pl.pallas_call(
        _fused_forward_kernel,
        out_shape=jax.ShapeDtypeStruct((b_tot, out_pad), jnp.float32),
        grid=grid,
        in_specs=in_specs,
        out_specs=out_specs,
        compiler_params=pltpu.CompilerParams(
            dimension_semantics=("parallel",),     # megacore-shard batch (v7x)
            vmem_limit_bytes=32 * 1024 * 1024,
        ),
        cost_estimate=pl.CostEstimate(
            flops=int(flops), transcendentals=0,
            bytes_accessed=int(bytes_accessed)),
    )(x_pad, *kernel_params)
    return out[:B, :output_size]


# ---------------------------------------------------------------------------
# Parameter init (raw, torch-like shapes) + init-time lowering to kernel form.
# ---------------------------------------------------------------------------
def init_raw_params(key, nb_layers, output_size):
    assert nb_layers >= 3, "LINEAR_LAYERS requires nb_layers >= 3"
    spec = LINEAR_LAYERS(nb_layers, output_size)

    key, k1, k2 = jax.random.split(key, 3)
    conv_w = jax.random.uniform(k1, (3, 3), jnp.float32, -1.0 / 3, 1.0 / 3)
    conv_b = jax.random.uniform(k2, (), jnp.float32, -1.0 / 3, 1.0 / 3)

    key, kg, kb, km, kv = jax.random.split(key, 5)
    g = jax.random.uniform(kg, (), jnp.float32, 0.5, 1.5)
    beta = jax.random.uniform(kb, (), jnp.float32, -0.5, 0.5)
    mean = jax.random.uniform(km, (), jnp.float32, -0.5, 0.5)
    var = jax.random.uniform(kv, (), jnp.float32, 0.5, 1.5)
    bn2d_scale = g / jnp.sqrt(var + BN_EPS)
    bn2d_shift = beta - mean * bn2d_scale

    linears, bn1d = [], []
    for t in spec:
        if t[0] == 'L':
            fan_in, fan_out = t[1], t[2]
            key, kw, kb_ = jax.random.split(key, 3)
            bound = 1.0 / (fan_in ** 0.5)
            W = jax.random.uniform(kw, (fan_in, fan_out), jnp.float32, -bound, bound)
            b = jax.random.uniform(kb_, (fan_out,), jnp.float32, -bound, bound)
            linears.append((W, b))
        elif t[0] == 'B':
            n = t[1]
            key, kg, kb_, km, kv = jax.random.split(key, 5)
            g = jax.random.uniform(kg, (n,), jnp.float32, 0.5, 1.5)
            beta = jax.random.uniform(kb_, (n,), jnp.float32, -0.5, 0.5)
            mean = jax.random.uniform(km, (n,), jnp.float32, -0.5, 0.5)
            var = jax.random.uniform(kv, (n,), jnp.float32, 0.5, 1.5)
            scale = g / jnp.sqrt(var + BN_EPS)
            shift = beta - mean * scale
            bn1d.append((scale, shift))
    return dict(conv_w=conv_w, conv_b=conv_b,
                bn2d_scale=bn2d_scale, bn2d_shift=bn2d_shift,
                linears=linears, bn1d=bn1d)


def build_kernel_params(raw):
    """Init-time lowering: conv -> exact Toeplitz matmul, eval-mode BN folded
    into the following Linear, feature dims zero-padded to 128 lanes, weights
    cast to bf16 (biases stay f32).  NOTE: bf16 weights (including the folded
    BN scales) give ~0.5-1% relative error vs the f32 reference; fine for
    inference under the 3e-2 tolerance."""
    H = W = CONV_IN
    Ho = Wo = INPUT_IMG_SIZE
    conv_w, conv_b = raw['conv_w'], raw['conv_b']

    # 3x3 valid conv as an exact (900, 784) matrix acting on flattened inputs.
    ii, jj = jnp.meshgrid(jnp.arange(Ho), jnp.arange(Wo), indexing='ij')
    out_flat = (ii * Wo + jj).reshape(-1)
    M = jnp.zeros((H * W, Ho * Wo), jnp.float32)
    for di in range(3):
        for dj in range(3):
            in_flat = ((ii + di) * W + (jj + dj)).reshape(-1)
            M = M.at[in_flat, out_flat].add(conv_w[di, dj])

    in_pad = _round_up(H * W, LANE)       # 900 -> 1024
    f0_pad = _round_up(Ho * Wo, LANE)     # 784 -> 896

    flat = []
    Wc = jnp.zeros((in_pad, f0_pad), jnp.float32).at[:H * W, :Ho * Wo].set(M)
    bc = jnp.zeros((1, f0_pad), jnp.float32).at[0, :Ho * Wo].set(conv_b)
    flat += [Wc.astype(jnp.bfloat16), bc]

    # Pending affine (eval-mode BN) applied to the *input* of the next Linear.
    pend_scale = jnp.full((Ho * Wo,), raw['bn2d_scale'], jnp.float32)
    pend_shift = jnp.full((Ho * Wo,), raw['bn2d_shift'], jnp.float32)

    linears, bn1d = raw['linears'], raw['bn1d']
    for k, (Wk, bk) in enumerate(linears):
        Wf = pend_scale[:, None] * Wk
        bf = bk + pend_shift @ Wk
        rows = _round_up(Wf.shape[0], LANE)
        cols = _round_up(Wf.shape[1], LANE)
        Wp = jnp.zeros((rows, cols), jnp.float32).at[:Wf.shape[0], :Wf.shape[1]].set(Wf)
        bp = jnp.zeros((1, cols), jnp.float32).at[0, :bf.shape[0]].set(bf)
        flat += [Wp.astype(jnp.bfloat16), bp]
        if k < len(linears) - 1:
            pend_scale, pend_shift = bn1d[k]
    return flat


# Pure-JAX reference (original layer order, f32 HIGHEST) for correctness check.
def reference_forward(x_nchw, raw):
    conv_w, conv_b = raw['conv_w'], raw['conv_b']
    x = x_nchw[:, 0].astype(jnp.float32)
    B, H, W = x.shape
    Ho, Wo = H - 2, W - 2
    acc = jnp.zeros((B, Ho, Wo), jnp.float32)
    for di in range(3):
        for dj in range(3):
            acc = acc + conv_w[di, dj] * x[:, di:di + Ho, dj:dj + Wo]
    h = jnp.maximum(acc + conv_b, 0.0)
    h = h * raw['bn2d_scale'] + raw['bn2d_shift']
    h = h.reshape(B, -1)
    linears, bn1d = raw['linears'], raw['bn1d']
    for k, (Wk, bk) in enumerate(linears):
        h = jnp.dot(h, Wk, precision=lax.Precision.HIGHEST) + bk
        if k < len(linears) - 1:
            h = jnp.maximum(h, 0.0)
            sc, sh = bn1d[k]
            h = h * sc + sh
    return h


if __name__ == "__main__":
    nb_layers = 4
    output_size = 10
    batch = 2

    key = jax.random.PRNGKey(0)
    kp, kx = jax.random.split(key)
    raw = init_raw_params(kp, nb_layers, output_size)
    kernel_params = build_kernel_params(raw)

    # 30x30 input: 3x3 no-pad conv -> 28x28 = 784 features, matching Linear(784, 92).
    x = jax.random.normal(kx, (batch, 1, CONV_IN, CONV_IN), jnp.float32)

    # jit the wrapper so reshape + bf16 cast + pad fuse with the pallas_call.
    fwd = jax.jit(lambda xx: fp32_mnist_forward(xx, kernel_params, output_size))
    out = jax.block_until_ready(fwd(x))

    ref = jax.block_until_ready(reference_forward(x, raw))
    assert out.shape == (batch, output_size), out.shape
    assert jnp.allclose(out, ref, rtol=3e-2, atol=3e-2), (out, ref)

    print("KERNEL_OK")
</pallas_src>

<mosaic_0001>
module attributes {stable_mosaic.version = 11 : i64} {
  func.func @_fused_forward_kernel(%arg0: i32, %arg1: memref<8x1024xbf16, #tpu.memory_space<vmem>>, %arg2: memref<1024x896xbf16, #tpu.memory_space<vmem>>, %arg3: memref<1x896xf32, #tpu.memory_space<vmem>>, %arg4: memref<896x128xbf16, #tpu.memory_space<vmem>>, %arg5: memref<1x128xf32, #tpu.memory_space<vmem>>, %arg6: memref<128x128xbf16, #tpu.memory_space<vmem>>, %arg7: memref<1x128xf32, #tpu.memory_space<vmem>>, %arg8: memref<128x128xbf16, #tpu.memory_space<vmem>>, %arg9: memref<1x128xf32, #tpu.memory_space<vmem>>, %arg10: memref<8x128xf32, #tpu.memory_space<vmem>>) attributes {dimension_semantics = [#tpu.dimension_semantics<parallel>], iteration_bounds = array<i64: 1>, scalar_prefetch = 0 : i64, scratch_operands = 0 : i64, tpu.core_type = #tpu.core_type<tc>, window_params = [{transform_indices = @transform_0, window_bounds = array<i64: 8, 1024>}, {pipeline_mode = #tpu.pipeline_mode<synchronous>, transform_indices = @transform_1, window_bounds = array<i64: 1024, 896>}, {pipeline_mode = #tpu.pipeline_mode<synchronous>, transform_indices = @transform_2, window_bounds = array<i64: 1, 896>}, {pipeline_mode = #tpu.pipeline_mode<synchronous>, transform_indices = @transform_3, window_bounds = array<i64: 896, 128>}, {pipeline_mode = #tpu.pipeline_mode<synchronous>, transform_indices = @transform_4, window_bounds = array<i64: 1, 128>}, {pipeline_mode = #tpu.pipeline_mode<synchronous>, transform_indices = @transform_5, window_bounds = array<i64: 128, 128>}, {pipeline_mode = #tpu.pipeline_mode<synchronous>, transform_indices = @transform_6, window_bounds = array<i64: 1, 128>}, {pipeline_mode = #tpu.pipeline_mode<synchronous>, transform_indices = @transform_7, window_bounds = array<i64: 128, 128>}, {pipeline_mode = #tpu.pipeline_mode<synchronous>, transform_indices = @transform_8, window_bounds = array<i64: 1, 128>}, {transform_indices = @transform_9, window_bounds = array<i64: 8, 128>}]} {
    %c0 = arith.constant 0 : index
    %c0_0 = arith.constant 0 : index
    %0 = vector.load %arg1[%c0, %c0_0] : memref<8x1024xbf16, #tpu.memory_space<vmem>>, vector<8x1024xbf16>
    %c0_1 = arith.constant 0 : index
    %c0_2 = arith.constant 0 : index
    %1 = vector.load %arg2[%c0_1, %c0_2] : memref<1024x896xbf16, #tpu.memory_space<vmem>>, vector<1024x896xbf16>
    %c0_3 = arith.constant 0 : index
    %c0_4 = arith.constant 0 : index
    %2 = vector.load %arg3[%c0_3, %c0_4] : memref<1x896xf32, #tpu.memory_space<vmem>>, vector<1x896xf32>
    %cst = arith.constant dense<0.000000e+00> : vector<8x896xf32>
    %3 = tpu.matmul %0, %1, %cst {dimension_numbers = #tpu.dot_dimension_numbers<[1], [0], [0], [1], [0, 0, 1, 1], [], []>} : vector<8x1024xbf16>, vector<1024x896xbf16>, vector<8x896xf32> -> vector<8x896xf32>
    %4 = vector.broadcast %2 : vector<1x896xf32> to vector<8x896xf32>
    %5 = arith.addf %3, %4 : vector<8x896xf32>
    %cst_5 = arith.constant 0.000000e+00 : f32
    %6 = vector.broadcast %cst_5 : f32 to vector<8x896xf32>
    %7 = arith.maximumf %5, %6 : vector<8x896xf32>
    %8 = arith.truncf %7 : vector<8x896xf32> to vector<8x896xbf16>
    %c0_6 = arith.constant 0 : index
    %c0_7 = arith.constant 0 : index
    %9 = vector.load %arg4[%c0_6, %c0_7] : memref<896x128xbf16, #tpu.memory_space<vmem>>, vector<896x128xbf16>
    %c0_8 = arith.constant 0 : index
    %c0_9 = arith.constant 0 : index
    %10 = vector.load %arg5[%c0_8, %c0_9] : memref<1x128xf32, #tpu.memory_space<vmem>>, vector<1x128xf32>
    %cst_10 = arith.constant dense<0.000000e+00> : vector<8x128xf32>
    %11 = tpu.matmul %8, %9, %cst_10 {dimension_numbers = #tpu.dot_dimension_numbers<[1], [0], [0], [1], [0, 0, 1, 1], [], []>} : vector<8x896xbf16>, vector<896x128xbf16>, vector<8x128xf32> -> vector<8x128xf32>
    %12 = vector.broadcast %10 : vector<1x128xf32> to vector<8x128xf32>
    %13 = arith.addf %11, %12 : vector<8x128xf32>
    %cst_11 = arith.constant 0.000000e+00 : f32
    %14 = vector.broadcast %cst_11 : f32 to vector<8x128xf32>
    %15 = arith.maximumf %13, %14 : vector<8x128xf32>
    %16 = arith.truncf %15 : vector<8x128xf32> to vector<8x128xbf16>
    %c0_12 = arith.constant 0 : index
    %c0_13 = arith.constant 0 : index
    %17 = vector.load %arg6[%c0_12, %c0_13] : memref<128x128xbf16, #tpu.memory_space<vmem>>, vector<128x128xbf16>
    %c0_14 = arith.constant 0 : index
    %c0_15 = arith.constant 0 : index
    %18 = vector.load %arg7[%c0_14, %c0_15] : memref<1x128xf32, #tpu.memory_space<vmem>>, vector<1x128xf32>
    %cst_16 = arith.constant dense<0.000000e+00> : vector<8x128xf32>
    %19 = tpu.matmul %16, %17, %cst_16 {dimension_numbers = #tpu.dot_dimension_numbers<[1], [0], [0], [1], [0, 0, 1, 1], [], []>} : vector<8x128xbf16>, vector<128x128xbf16>, vector<8x128xf32> -> vector<8x128xf32>
    %20 = vector.broadcast %18 : vector<1x128xf32> to vector<8x128xf32>
    %21 = arith.addf %19, %20 : vector<8x128xf32>
    %cst_17 = arith.constant 0.000000e+00 : f32
    %22 = vector.broadcast %cst_17 : f32 to vector<8x128xf32>
    %23 = arith.maximumf %21, %22 : vector<8x128xf32>
    %24 = arith.truncf %23 : vector<8x128xf32> to vector<8x128xbf16>
    %c0_18 = arith.constant 0 : index
    %c0_19 = arith.constant 0 : index
    %25 = vector.load %arg8[%c0_18, %c0_19] : memref<128x128xbf16, #tpu.memory_space<vmem>>, vector<128x128xbf16>
    %c0_20 = arith.constant 0 : index
    %c0_21 = arith.constant 0 : index
    %26 = vector.load %arg9[%c0_20, %c0_21] : memref<1x128xf32, #tpu.memory_space<vmem>>, vector<1x128xf32>
    %cst_22 = arith.constant dense<0.000000e+00> : vector<8x128xf32>
    %27 = tpu.matmul %24, %25, %cst_22 {dimension_numbers = #tpu.dot_dimension_numbers<[1], [0], [0], [1], [0, 0, 1, 1], [], []>} : vector<8x128xbf16>, vector<128x128xbf16>, vector<8x128xf32> -> vector<8x128xf32>
    %28 = vector.broadcast %26 : vector<1x128xf32> to vector<8x128xf32>
    %29 = arith.addf %27, %28 : vector<8x128xf32>
    %c0_23 = arith.constant 0 : index
    %c0_24 = arith.constant 0 : index
    %30 = vector.load %arg10[%c0_23, %c0_24] : memref<8x128xf32, #tpu.memory_space<vmem>>, vector<8x128xf32>
    tpu.vector_store %arg10[%c0_23, %c0_24], %29 {strides = array<i32>} : memref<8x128xf32, #tpu.memory_space<vmem>>, vector<8x128xf32>,
    return
  }
  func.func @transform_0(%arg0: i32) -> (i32, i32) {
    %c0_i32 = arith.constant 0 : i32
    %c0_i32_0 = arith.constant 0 : i32
    return %arg0, %c0_i32 : i32, i32
  }
  func.func @transform_1(%arg0: i32) -> (i32, i32) {
    %c0_i32 = arith.constant 0 : i32
    %c0_i32_0 = arith.constant 0 : i32
    %c0_i32_1 = arith.constant 0 : i32
    return %c0_i32, %c0_i32_0 : i32, i32
  }
  func.func @transform_2(%arg0: i32) -> (i32, i32) {
    %c0_i32 = arith.constant 0 : i32
    %c0_i32_0 = arith.constant 0 : i32
    %c0_i32_1 = arith.constant 0 : i32
    return %c0_i32, %c0_i32_0 : i32, i32
  }
  func.func @transform_3(%arg0: i32) -> (i32, i32) {
    %c0_i32 = arith.constant 0 : i32
    %c0_i32_0 = arith.constant 0 : i32
    %c0_i32_1 = arith.constant 0 : i32
    return %c0_i32, %c0_i32_0 : i32, i32
  }
  func.func @transform_4(%arg0: i32) -> (i32, i32) {
    %c0_i32 = arith.constant 0 : i32
    %c0_i32_0 = arith.constant 0 : i32
    %c0_i32_1 = arith.constant 0 : i32
    return %c0_i32, %c0_i32_0 : i32, i32
  }
  func.func @transform_5(%arg0: i32) -> (i32, i32) {
    %c0_i32 = arith.constant 0 : i32
    %c0_i32_0 = arith.constant 0 : i32
    %c0_i32_1 = arith.constant 0 : i32
    return %c0_i32, %c0_i32_0 : i32, i32
  }
  func.func @transform_6(%arg0: i32) -> (i32, i32) {
    %c0_i32 = arith.constant 0 : i32
    %c0_i32_0 = arith.constant 0 : i32
    %c0_i32_1 = arith.constant 0 : i32
    return %c0_i32, %c0_i32_0 : i32, i32
  }
  func.func @transform_7(%arg0: i32) -> (i32, i32) {
    %c0_i32 = arith.constant 0 : i32
    %c0_i32_0 = arith.constant 0 : i32
    %c0_i32_1 = arith.constant 0 : i32
    return %c0_i32, %c0_i32_0 : i32, i32
  }
  func.func @transform_8(%arg0: i32) -> (i32, i32) {
    %c0_i32 = arith.constant 0 : i32
    %c0_i32_0 = arith.constant 0 : i32
    %c0_i32_1 = arith.constant 0 : i32
    return %c0_i32, %c0_i32_0 : i32, i32
  }
  func.func @transform_9(%arg0: i32) -> (i32, i32) {
    %c0_i32 = arith.constant 0 : i32
    %c0_i32_0 = arith.constant 0 : i32
    return %arg0, %c0_i32 : i32, i32
  }
}

</mosaic_0001>

<llo_original>
// kernel: _lambda_.1
$region0: #{_lambda_.1}
  #allocation0 [shape = 'u32[]', space=smem, size = 0x4, offset = 0x4, fixed_abs, tag = 'smem constant byte address 0x4 - core index']
  #allocation1 [shape = 'u32[144,128]{1,0:T(1,128)}', space=vmem, size = 0x12000, scoped, tag = 'internal scratch']
  %s0 = inlined_call_operand.vmem [shape: bf16[8,1024], index: 0, kind: input, shape index: {}]
  %s1 = inlined_call_operand.vmem [shape: bf16[1024,896], index: 1, kind: input, shape index: {}]
  %s2 = inlined_call_operand.vmem [shape: f32[1,896], index: 2, kind: input, shape index: {}]
  %s3 = inlined_call_operand.vmem [shape: bf16[896,128], index: 3, kind: input, shape index: {}]
  %s4 = inlined_call_operand.vmem [shape: f32[1,128], index: 4, kind: input, shape index: {}]
  %s5 = inlined_call_operand.vmem [shape: bf16[128,128], index: 5, kind: input, shape index: {}]
  %s6 = inlined_call_operand.vmem [shape: f32[1,128], index: 6, kind: input, shape index: {}]
  %s7 = inlined_call_operand.vmem [shape: bf16[128,128], index: 7, kind: input, shape index: {}]
  %s8 = inlined_call_operand.vmem [shape: f32[1,128], index: 8, kind: input, shape index: {}]
  %s9 = inlined_call_operand.vmem [shape: f32[8,128], index: 9, kind: output, shape index: {}]
  %s10 = sld [smem:[#allocation0]]
  $region46: #{_lambda_.1} parent=0
    _
  %s12 = ssub.s32 1, %s10
  %s13 = scalar_select 0, %s12, %s10
  // Predicated region
  $region2: #{_lambda_.1} parent=0 // pred_check
    _
  $region3: #{_lambda_.1} parent=0 // pred_check_branch
    %15 = sbr.rel (0) target = $region5
  $region4: #{_lambda_.1} parent=0 // pred_region
    _
  $region5: #{_lambda_.1} parent=0 // pred_fallthru
    _
  // Predicated region
  $region6: #{_lambda_.1} parent=0 // pred_check
    _
  $region7: #{_lambda_.1} parent=0 // pred_check_branch
    %17 = sbr.rel (0) target = $region9
  $region8: #{_lambda_.1} parent=0 // pred_region
    _
  $region9: #{_lambda_.1} parent=0 // pred_fallthru
    _
  // Predicated region
  $region10: #{_lambda_.1} parent=0 // pred_check
    _
  $region11: #{_lambda_.1} parent=0 // pred_check_branch
    %19 = sbr.rel (0) target = $region13
  $region12: #{_lambda_.1} parent=0 // pred_region
    _
  $region13: #{_lambda_.1} parent=0 // pred_fallthru
    _
  // Predicated region
  $region14: #{_lambda_.1} parent=0 // pred_check
    _
  $region15: #{_lambda_.1} parent=0 // pred_check_branch
    %21 = sbr.rel (0) target = $region17
  $region16: #{_lambda_.1} parent=0 // pred_region
    _
  $region17: #{_lambda_.1} parent=0 // pred_fallthru
    _
  // Predicated region
  $region18: #{_lambda_.1} parent=0 // pred_check
    _
  $region19: #{_lambda_.1} parent=0 // pred_check_branch
    %23 = sbr.rel (0) target = $region21
  $region20: #{_lambda_.1} parent=0 // pred_region
    _
  $region21: #{_lambda_.1} parent=0 // pred_fallthru
    _
  // Predicated region
  $region22: #{_lambda_.1} parent=0 // pred_check
    _
  $region23: #{_lambda_.1} parent=0 // pred_check_branch
    %25 = sbr.rel (0) target = $region25
  $region24: #{_lambda_.1} parent=0 // pred_region
    _
  $region25: #{_lambda_.1} parent=0 // pred_fallthru
    _
  // Predicated region
  $region26: #{_lambda_.1} parent=0 // pred_check
    _
  $region27: #{_lambda_.1} parent=0 // pred_check_branch
    %27 = sbr.rel (0) target = $region29
  $region28: #{_lambda_.1} parent=0 // pred_region
    _
  $region29: #{_lambda_.1} parent=0 // pred_fallthru
    _
  // Predicated region
  $region30: #{_lambda_.1} parent=0 // pred_check
    _
  $region31: #{_lambda_.1} parent=0 // pred_check_branch
    %29 = sbr.rel (0) target = $region33
  $region32: #{_lambda_.1} parent=0 // pred_region
    _
  $region33: #{_lambda_.1} parent=0 // pred_fallthru
    _
  // Predicated region
  $region34: #{_lambda_.1} parent=0 // pred_check
    _
  $region35: #{_lambda_.1} parent=0 // pred_check_branch
    %31 = sbr.rel (0) target = $region37
  $region36: #{_lambda_.1} parent=0 // pred_region
    _
  $region37: #{_lambda_.1} parent=0 // pred_fallthru
    _
  %v33 = vld [vmem:[%s0] sm:$0xff]
  %v34 = vld [vmem:[%s0 + $0x8] sm:$0xff]
  %v35 = vld [vmem:[%s0 + $0x10] sm:$0xff]
  %v36 = vld [vmem:[%s0 + $0x18] sm:$0xff]
  %v37 = vld [vmem:[%s1] sm:$0xff]
  %v38 = vld [vmem:[%s1 + $0x8] sm:$0xff]
  %v39 = vld [vmem:[%s1 + $0x10] sm:$0xff]
  %v40 = vld [vmem:[%s1 + $0x18] sm:$0xf]
  %v41 = vld [vmem:[%s1 + $0x1c] sm:$0xff]
  %v42 = vld [vmem:[%s1 + $0x24] sm:$0xff]
  %v43 = vld [vmem:[%s1 + $0x2c] sm:$0xff]
  %v44 = vld [vmem:[%s1 + $0x34] sm:$0xf]
  %v45 = vld [vmem:[%s1 + $0x38] sm:$0xff]
  %v46 = vld [vmem:[%s1 + $0x40] sm:$0xff]
  %v47 = vld [vmem:[%s1 + $0x48] sm:$0xff]
  %v48 = vld [vmem:[%s1 + $0x50] sm:$0xf]
  %v49 = vld [vmem:[%s1 + $0x54] sm:$0xff]
  %v50 = vld [vmem:[%s1 + $0x5c] sm:$0xff]
  %v51 = vld [vmem:[%s1 + $0x64] sm:$0xff]
  %v52 = vld [vmem:[%s1 + $0x6c] sm:$0xf]
  %v53 = vld [vmem:[%s1 + $0x70] sm:$0xff]
  %v54 = vld [vmem:[%s1 + $0x78] sm:$0xff]
  %v55 = vld [vmem:[%s1 + $0x80] sm:$0xff]
  %v56 = vld [vmem:[%s1 + $0x88] sm:$0xf]
  %v57 = vld [vmem:[%s1 + $0x8c] sm:$0xff]
  %v58 = vld [vmem:[%s1 + $0x94] sm:$0xff]
  %v59 = vld [vmem:[%s1 + $0x9c] sm:$0xff]
  %v60 = vld [vmem:[%s1 + $0xa4] sm:$0xf]
  %v61 = vld [vmem:[%s1 + $0xa8] sm:$0xff]
  %v62 = vld [vmem:[%s1 + $0xb0] sm:$0xff]
  %v63 = vld [vmem:[%s1 + $0xb8] sm:$0xff]
  %v64 = vld [vmem:[%s1 + $0xc0] sm:$0xf]
  %v65 = vld [vmem:[%s1 + $0xc4] sm:$0xff]
  %v66 = vld [vmem:[%s1 + $0xcc] sm:$0xff]
  %v67 = vld [vmem:[%s1 + $0xd4] sm:$0xff]
  %v68 = vld [vmem:[%s1 + $0xdc] sm:$0xf]
  %v69 = vld [vmem:[%s1 + $0xe0] sm:$0xff]
  %v70 = vld [vmem:[%s1 + $0xe8] sm:$0xff]
  %v71 = vld [vmem:[%s1 + $0xf0] sm:$0xff]
  %v72 = vld [vmem:[%s1 + $0xf8] sm:$0xf]
  %v73 = vld [vmem:[%s1 + $0xfc] sm:$0xff]
  %v74 = vld [vmem:[%s1 + $0x104] sm:$0xff]
  %v75 = vld [vmem:[%s1 + $0x10c] sm:$0xff]
  %v76 = vld [vmem:[%s1 + $0x114] sm:$0xf]
  %v77 = vld [vmem:[%s1 + $0x118] sm:$0xff]
  %v78 = vld [vmem:[%s1 + $0x120] sm:$0xff]
  %v79 = vld [vmem:[%s1 + $0x128] sm:$0xff]
  %v80 = vld [vmem:[%s1 + $0x130] sm:$0xf]
  %v81 = vld [vmem:[%s1 + $0x134] sm:$0xff]
  %v82 = vld [vmem:[%s1 + $0x13c] sm:$0xff]
  %v83 = vld [vmem:[%s1 + $0x144] sm:$0xff]
  %v84 = vld [vmem:[%s1 + $0x14c] sm:$0xf]
  %v85 = vld [vmem:[%s1 + $0x150] sm:$0xff]
  %v86 = vld [vmem:[%s1 + $0x158] sm:$0xff]
  %v87 = vld [vmem:[%s1 + $0x160] sm:$0xff]
  %v88 = vld [vmem:[%s1 + $0x168] sm:$0xf]
  %v89 = vld [vmem:[%s1 + $0x16c] sm:$0xff]
  %v90 = vld [vmem:[%s1 + $0x174] sm:$0xff]
  %v91 = vld [vmem:[%s1 + $0x17c] sm:$0xff]
  %v92 = vld [vmem:[%s1 + $0x184] sm:$0xf]
  %v93 = vld [vmem:[%s1 + $0x188] sm:$0xff]
  %v94 = vld [vmem:[%s1 + $0x190] sm:$0xff]
  %v95 = vld [vmem:[%s1 + $0x198] sm:$0xff]
  %v96 = vld [vmem:[%s1 + $0x1a0] sm:$0xf]
  %v97 = vld [vmem:[%s1 + $0x1a4] sm:$0xff]
  %v98 = vld [vmem:[%s1 + $0x1ac] sm:$0xff]
  %v99 = vld [vmem:[%s1 + $0x1b4] sm:$0xff]
  %v100 = vld [vmem:[%s1 + $0x1bc] sm:$0xf]
  %v101 = vld [vmem:[%s1 + $0x1c0] sm:$0xff]
  %v102 = vld [vmem:[%s1 + $0x1c8] sm:$0xff]
  %v103 = vld [vmem:[%s1 + $0x1d0] sm:$0xff]
  %v104 = vld [vmem:[%s1 + $0x1d8] sm:$0xf]
  %v105 = vld [vmem:[%s1 + $0x1dc] sm:$0xff]
  %v106 = vld [vmem:[%s1 + $0x1e4] sm:$0xff]
  %v107 = vld [vmem:[%s1 + $0x1ec] sm:$0xff]
  %v108 = vld [vmem:[%s1 + $0x1f4] sm:$0xf]
  %v109 = vld [vmem:[%s1 + $0x1f8] sm:$0xff]
  %v110 = vld [vmem:[%s1 + $0x200] sm:$0xff]
  %v111 = vld [vmem:[%s1 + $0x208] sm:$0xff]
  %v112 = vld [vmem:[%s1 + $0x210] sm:$0xf]
  %v113 = vld [vmem:[%s1 + $0x214] sm:$0xff]
  %v114 = vld [vmem:[%s1 + $0x21c] sm:$0xff]
  %v115 = vld [vmem:[%s1 + $0x224] sm:$0xff]
  %v116 = vld [vmem:[%s1 + $0x22c] sm:$0xf]
  %v117 = vld [vmem:[%s1 + $0x230] sm:$0xff]
  %v118 = vld [vmem:[%s1 + $0x238] sm:$0xff]
  %v119 = vld [vmem:[%s1 + $0x240] sm:$0xff]
  %v120 = vld [vmem:[%s1 + $0x248] sm:$0xf]
  %v121 = vld [vmem:[%s1 + $0x24c] sm:$0xff]
  %v122 = vld [vmem:[%s1 + $0x254] sm:$0xff]
  %v123 = vld [vmem:[%s1 + $0x25c] sm:$0xff]
  %v124 = vld [vmem:[%s1 + $0x264] sm:$0xf]
  %v125 = vld [vmem:[%s1 + $0x268] sm:$0xff]
  %v126 = vld [vmem:[%s1 + $0x270] sm:$0xff]
  %v127 = vld [vmem:[%s1 + $0x278] sm:$0xff]
  %v128 = vld [vmem:[%s1 + $0x280] sm:$0xf]
  %v129 = vld [vmem:[%s1 + $0x284] sm:$0xff]
  %v130 = vld [vmem:[%s1 + $0x28c] sm:$0xff]
  %v131 = vld [vmem:[%s1 + $0x294] sm:$0xff]
  %v132 = vld [vmem:[%s1 + $0x29c] sm:$0xf]
  %v133 = vld [vmem:[%s1 + $0x2a0] sm:$0xff]
  %v134 = vld [vmem:[%s1 + $0x2a8] sm:$0xff]
  %v135 = vld [vmem:[%s1 + $0x2b0] sm:$0xff]
  %v136 = vld [vmem:[%s1 + $0x2b8] sm:$0xf]
  %v137 = vld [vmem:[%s1 + $0x2bc] sm:$0xff]
  %v138 = vld [vmem:[%s1 + $0x2c4] sm:$0xff]
  %v139 = vld [vmem:[%s1 + $0x2cc] sm:$0xff]
  %v140 = vld [vmem:[%s1 + $0x2d4] sm:$0xf]
  %v141 = vld [vmem:[%s1 + $0x2d8] sm:$0xff]
  %v142 = vld [vmem:[%s1 + $0x2e0] sm:$0xff]
  %v143 = vld [vmem:[%s1 + $0x2e8] sm:$0xff]
  %v144 = vld [vmem:[%s1 + $0x2f0] sm:$0xf]
  %v145 = vld [vmem:[%s1 + $0x2f4] sm:$0xff]
  %v146 = vld [vmem:[%s1 + $0x2fc] sm:$0xff]
  %v147 = vld [vmem:[%s1 + $0x304] sm:$0xff]
  %v148 = vld [vmem:[%s1 + $0x30c] sm:$0xf]
  %v149 = vld [vmem:[%s1 + $0x310] sm:$0xff]
  %v150 = vld [vmem:[%s1 + $0x318] sm:$0xff]
  %v151 = vld [vmem:[%s1 + $0x320] sm:$0xff]
  %v152 = vld [vmem:[%s1 + $0x328] sm:$0xf]
  %v153 = vld [vmem:[%s1 + $0x32c] sm:$0xff]
  %v154 = vld [vmem:[%s1 + $0x334] sm:$0xff]
  %v155 = vld [vmem:[%s1 + $0x33c] sm:$0xff]
  %v156 = vld [vmem:[%s1 + $0x344] sm:$0xf]
  %v157 = vld [vmem:[%s1 + $0x348] sm:$0xff]
  %v158 = vld [vmem:[%s1 + $0x350] sm:$0xff]
  %v159 = vld [vmem:[%s1 + $0x358] sm:$0xff]
  %v160 = vld [vmem:[%s1 + $0x360] sm:$0xf]
  %v161 = vld [vmem:[%s1 + $0x364] sm:$0xff]
  %v162 = vld [vmem:[%s1 + $0x36c] sm:$0xff]
  %v163 = vld [vmem:[%s1 + $0x374] sm:$0xff]
  %v164 = vld [vmem:[%s1 + $0x37c] sm:$0xf]
  %v165 = vld [vmem:[%s1 + $0x380] sm:$0xff]
  %v166 = vld [vmem:[%s1 + $0x388] sm:$0xff]
  %v167 = vld [vmem:[%s1 + $0x390] sm:$0xff]
  %v168 = vld [vmem:[%s1 + $0x398] sm:$0xf]
  %v169 = vld [vmem:[%s1 + $0x39c] sm:$0xff]
  %v170 = vld [vmem:[%s1 + $0x3a4] sm:$0xff]
  %v171 = vld [vmem:[%s1 + $0x3ac] sm:$0xff]
  %v172 = vld [vmem:[%s1 + $0x3b4] sm:$0xf]
  %v173 = vld [vmem:[%s1 + $0x3b8] sm:$0xff]
  %v174 = vld [vmem:[%s1 + $0x3c0] sm:$0xff]
  %v175 = vld [vmem:[%s1 + $0x3c8] sm:$0xff]
  %v176 = vld [vmem:[%s1 + $0x3d0] sm:$0xf]
  %v177 = vld [vmem:[%s1 + $0x3d4] sm:$0xff]
  %v178 = vld [vmem:[%s1 + $0x3dc] sm:$0xff]
  %v179 = vld [vmem:[%s1 + $0x3e4] sm:$0xff]
  %v180 = vld [vmem:[%s1 + $0x3ec] sm:$0xf]
  %v181 = vld [vmem:[%s1 + $0x3f0] sm:$0xff]
  %v182 = vld [vmem:[%s1 + $0x3f8] sm:$0xff]
  %v183 = vld [vmem:[%s1 + $0x400] sm:$0xff]
  %v184 = vld [vmem:[%s1 + $0x408] sm:$0xf]
  %v185 = vld [vmem:[%s1 + $0x40c] sm:$0xff]
  %v186 = vld [vmem:[%s1 + $0x414] sm:$0xff]
  %v187 = vld [vmem:[%s1 + $0x41c] sm:$0xff]
  %v188 = vld [vmem:[%s1 + $0x424] sm:$0xf]
  %v189 = vld [vmem:[%s1 + $0x428] sm:$0xff]
  %v190 = vld [vmem:[%s1 + $0x430] sm:$0xff]
  %v191 = vld [vmem:[%s1 + $0x438] sm:$0xff]
  %v192 = vld [vmem:[%s1 + $0x440] sm:$0xf]
  %v193 = vld [vmem:[%s1 + $0x444] sm:$0xff]
  %v194 = vld [vmem:[%s1 + $0x44c] sm:$0xff]
  %v195 = vld [vmem:[%s1 + $0x454] sm:$0xff]
  %v196 = vld [vmem:[%s1 + $0x45c] sm:$0xf]
  %v197 = vld [vmem:[%s1 + $0x460] sm:$0xff]
  %v198 = vld [vmem:[%s1 + $0x468] sm:$0xff]
  %v199 = vld [vmem:[%s1 + $0x470] sm:$0xff]
  %v200 = vld [vmem:[%s1 + $0x478] sm:$0xf]
  %v201 = vld [vmem:[%s1 + $0x47c] sm:$0xff]
  %v202 = vld [vmem:[%s1 + $0x484] sm:$0xff]
  %v203 = vld [vmem:[%s1 + $0x48c] sm:$0xff]
  %v204 = vld [vmem:[%s1 + $0x494] sm:$0xf]
  %v205 = vld [vmem:[%s1 + $0x498] sm:$0xff]
  %v206 = vld [vmem:[%s1 + $0x4a0] sm:$0xff]
  %v207 = vld [vmem:[%s1 + $0x4a8] sm:$0xff]
  %v208 = vld [vmem:[%s1 + $0x4b0] sm:$0xf]
  %v209 = vld [vmem:[%s1 + $0x4b4] sm:$0xff]
  %v210 = vld [vmem:[%s1 + $0x4bc] sm:$0xff]
  %v211 = vld [vmem:[%s1 + $0x4c4] sm:$0xff]
  %v212 = vld [vmem:[%s1 + $0x4cc] sm:$0xf]
  %v213 = vld [vmem:[%s1 + $0x4d0] sm:$0xff]
  %v214 = vld [vmem:[%s1 + $0x4d8] sm:$0xff]
  %v215 = vld [vmem:[%s1 + $0x4e0] sm:$0xff]
  %v216 = vld [vmem:[%s1 + $0x4e8] sm:$0xf]
  %v217 = vld [vmem:[%s1 + $0x4ec] sm:$0xff]
  %v218 = vld [vmem:[%s1 + $0x4f4] sm:$0xff]
  %v219 = vld [vmem:[%s1 + $0x4fc] sm:$0xff]
  %v220 = vld [vmem:[%s1 + $0x504] sm:$0xf]
  %v221 = vld [vmem:[%s1 + $0x508] sm:$0xff]
  %v222 = vld [vmem:[%s1 + $0x510] sm:$0xff]
  %v223 = vld [vmem:[%s1 + $0x518] sm:$0xff]
  %v224 = vld [vmem:[%s1 + $0x520] sm:$0xf]
  %v225 = vld [vmem:[%s1 + $0x524] sm:$0xff]
  %v226 = vld [vmem:[%s1 + $0x52c] sm:$0xff]
  %v227 = vld [vmem:[%s1 + $0x534] sm:$0xff]
  %v228 = vld [vmem:[%s1 + $0x53c] sm:$0xf]
  %v229 = vld [vmem:[%s1 + $0x540] sm:$0xff]
  %v230 = vld [vmem:[%s1 + $0x548] sm:$0xff]
  %v231 = vld [vmem:[%s1 + $0x550] sm:$0xff]
  %v232 = vld [vmem:[%s1 + $0x558] sm:$0xf]
  %v233 = vld [vmem:[%s1 + $0x55c] sm:$0xff]
  %v234 = vld [vmem:[%s1 + $0x564] sm:$0xff]
  %v235 = vld [vmem:[%s1 + $0x56c] sm:$0xff]
  %v236 = vld [vmem:[%s1 + $0x574] sm:$0xf]
  %v237 = vld [vmem:[%s1 + $0x578] sm:$0xff]
  %v238 = vld [vmem:[%s1 + $0x580] sm:$0xff]
  %v239 = vld [vmem:[%s1 + $0x588] sm:$0xff]
  %v240 = vld [vmem:[%s1 + $0x590] sm:$0xf]
  %v241 = vld [vmem:[%s1 + $0x594] sm:$0xff]
  %v242 = vld [vmem:[%s1 + $0x59c] sm:$0xff]
  %v243 = vld [vmem:[%s1 + $0x5a4] sm:$0xff]
  %v244 = vld [vmem:[%s1 + $0x5ac] sm:$0xf]
  %v245 = vld [vmem:[%s1 + $0x5b0] sm:$0xff]
  %v246 = vld [vmem:[%s1 + $0x5b8] sm:$0xff]
  %v247 = vld [vmem:[%s1 + $0x5c0] sm:$0xff]
  %v248 = vld [vmem:[%s1 + $0x5c8] sm:$0xf]
  %v249 = vld [vmem:[%s1 + $0x5cc] sm:$0xff]
  %v250 = vld [vmem:[%s1 + $0x5d4] sm:$0xff]
  %v251 = vld [vmem:[%s1 + $0x5dc] sm:$0xff]
  %v252 = vld [vmem:[%s1 + $0x5e4] sm:$0xf]
  %v253 = vld [vmem:[%s1 + $0x5e8] sm:$0xff]
  %v254 = vld [vmem:[%s1 + $0x5f0] sm:$0xff]
  %v255 = vld [vmem:[%s1 + $0x5f8] sm:$0xff]
  %v256 = vld [vmem:[%s1 + $0x600] sm:$0xf]
  %v257 = vld [vmem:[%s1 + $0x604] sm:$0xff]
  %v258 = vld [vmem:[%s1 + $0x60c] sm:$0xff]
  %v259 = vld [vmem:[%s1 + $0x614] sm:$0xff]
  %v260 = vld [vmem:[%s1 + $0x61c] sm:$0xf]
  %v261 = vld [vmem:[%s1 + $0x620] sm:$0xff]
  %v262 = vld [vmem:[%s1 + $0x628] sm:$0xff]
  %v263 = vld [vmem:[%s1 + $0x630] sm:$0xff]
  %v264 = vld [vmem:[%s1 + $0x638] sm:$0xf]
  %v265 = vld [vmem:[%s1 + $0x63c] sm:$0xff]
  %v266 = vld [vmem:[%s1 + $0x644] sm:$0xff]
  %v267 = vld [vmem:[%s1 + $0x64c] sm:$0xff]
  %v268 = vld [vmem:[%s1 + $0x654] sm:$0xf]
  %v269 = vld [vmem:[%s1 + $0x658] sm:$0xff]
  %v270 = vld [vmem:[%s1 + $0x660] sm:$0xff]
  %v271 = vld [vmem:[%s1 + $0x668] sm:$0xff]
  %v272 = vld [vmem:[%s1 + $0x670] sm:$0xf]
  %v273 = vld [vmem:[%s1 + $0x674] sm:$0xff]
  %v274 = vld [vmem:[%s1 + $0x67c] sm:$0xff]
  %v275 = vld [vmem:[%s1 + $0x684] sm:$0xff]
  %v276 = vld [vmem:[%s1 + $0x68c] sm:$0xf]
  %v277 = vld [vmem:[%s1 + $0x690] sm:$0xff]
  %v278 = vld [vmem:[%s1 + $0x698] sm:$0xff]
  %v279 = vld [vmem:[%s1 + $0x6a0] sm:$0xff]
  %v280 = vld [vmem:[%s1 + $0x6a8] sm:$0xf]
  %v281 = vld [vmem:[%s1 + $0x6ac] sm:$0xff]
  %v282 = vld [vmem:[%s1 + $0x6b4] sm:$0xff]
  %v283 = vld [vmem:[%s1 + $0x6bc] sm:$0xff]
  %v284 = vld [vmem:[%s1 + $0x6c4] sm:$0xf]
  %v285 = vld [vmem:[%s1 + $0x6c8] sm:$0xff]
  %v286 = vld [vmem:[%s1 + $0x6d0] sm:$0xff]
  %v287 = vld [vmem:[%s1 + $0x6d8] sm:$0xff]
  %v288 = vld [vmem:[%s1 + $0x6e0] sm:$0xf]
  %v289 = vld [vmem:[%s1 + $0x6e4] sm:$0xff]
  %v290 = vld [vmem:[%s1 + $0x6ec] sm:$0xff]
  %v291 = vld [vmem:[%s1 + $0x6f4] sm:$0xff]
  %v292 = vld [vmem:[%s1 + $0x6fc] sm:$0xf]
  %v293 = vld [vmem:[%s1 + $0x700] sm:$0xff]
  %v294 = vld [vmem:[%s1 + $0x708] sm:$0xff]
  %v295 = vld [vmem:[%s1 + $0x710] sm:$0xff]
  %v296 = vld [vmem:[%s1 + $0x718] sm:$0xf]
  %v297 = vld [vmem:[%s1 + $0x71c] sm:$0xff]
  %v298 = vld [vmem:[%s1 + $0x724] sm:$0xff]
  %v299 = vld [vmem:[%s1 + $0x72c] sm:$0xff]
  %v300 = vld [vmem:[%s1 + $0x734] sm:$0xf]
  %v301 = vld [vmem:[%s1 + $0x738] sm:$0xff]
  %v302 = vld [vmem:[%s1 + $0x740] sm:$0xff]
  %v303 = vld [vmem:[%s1 + $0x748] sm:$0xff]
  %v304 = vld [vmem:[%s1 + $0x750] sm:$0xf]
  %v305 = vld [vmem:[%s1 + $0x754] sm:$0xff]
  %v306 = vld [vmem:[%s1 + $0x75c] sm:$0xff]
  %v307 = vld [vmem:[%s1 + $0x764] sm:$0xff]
  %v308 = vld [vmem:[%s1 + $0x76c] sm:$0xf]
  %v309 = vld [vmem:[%s1 + $0x770] sm:$0xff]
  %v310 = vld [vmem:[%s1 + $0x778] sm:$0xff]
  %v311 = vld [vmem:[%s1 + $0x780] sm:$0xff]
  %v312 = vld [vmem:[%s1 + $0x788] sm:$0xf]
  %v313 = vld [vmem:[%s1 + $0x78c] sm:$0xff]
  %v314 = vld [vmem:[%s1 + $0x794] sm:$0xff]
  %v315 = vld [vmem:[%s1 + $0x79c] sm:$0xff]
  %v316 = vld [vmem:[%s1 + $0x7a4] sm:$0xf]
  %v317 = vld [vmem:[%s1 + $0x7a8] sm:$0xff]
  %v318 = vld [vmem:[%s1 + $0x7b0] sm:$0xff]
  %v319 = vld [vmem:[%s1 + $0x7b8] sm:$0xff]
  %v320 = vld [vmem:[%s1 + $0x7c0] sm:$0xf]
  %v321 = vld [vmem:[%s1 + $0x7c4] sm:$0xff]
  %v322 = vld [vmem:[%s1 + $0x7cc] sm:$0xff]
  %v323 = vld [vmem:[%s1 + $0x7d4] sm:$0xff]
  %v324 = vld [vmem:[%s1 + $0x7dc] sm:$0xf]
  %v325 = vld [vmem:[%s1 + $0x7e0] sm:$0xff]
  %v326 = vld [vmem:[%s1 + $0x7e8] sm:$0xff]
  %v327 = vld [vmem:[%s1 + $0x7f0] sm:$0xff]
  %v328 = vld [vmem:[%s1 + $0x7f8] sm:$0xf]
  %v329 = vld [vmem:[%s1 + $0x7fc] sm:$0xff]
  %v330 = vld [vmem:[%s1 + $0x804] sm:$0xff]
  %v331 = vld [vmem:[%s1 + $0x80c] sm:$0xff]
  %v332 = vld [vmem:[%s1 + $0x814] sm:$0xf]
  %v333 = vld [vmem:[%s1 + $0x818] sm:$0xff]
  %v334 = vld [vmem:[%s1 + $0x820] sm:$0xff]
  %v335 = vld [vmem:[%s1 + $0x828] sm:$0xff]
  %v336 = vld [vmem:[%s1 + $0x830] sm:$0xf]
  %v337 = vld [vmem:[%s1 + $0x834] sm:$0xff]
  %v338 = vld [vmem:[%s1 + $0x83c] sm:$0xff]
  %v339 = vld [vmem:[%s1 + $0x844] sm:$0xff]
  %v340 = vld [vmem:[%s1 + $0x84c] sm:$0xf]
  %v341 = vld [vmem:[%s1 + $0x850] sm:$0xff]
  %v342 = vld [vmem:[%s1 + $0x858] sm:$0xff]
  %v343 = vld [vmem:[%s1 + $0x860] sm:$0xff]
  %v344 = vld [vmem:[%s1 + $0x868] sm:$0xf]
  %v345 = vld [vmem:[%s1 + $0x86c] sm:$0xff]
  %v346 = vld [vmem:[%s1 + $0x874] sm:$0xff]
  %v347 = vld [vmem:[%s1 + $0x87c] sm:$0xff]
  %v348 = vld [vmem:[%s1 + $0x884] sm:$0xf]
  %v349 = vld [vmem:[%s1 + $0x888] sm:$0xff]
  %v350 = vld [vmem:[%s1 + $0x890] sm:$0xff]
  %v351 = vld [vmem:[%s1 + $0x898] sm:$0xff]
  %v352 = vld [vmem:[%s1 + $0x8a0] sm:$0xf]
  %v353 = vld [vmem:[%s1 + $0x8a4] sm:$0xff]
  %v354 = vld [vmem:[%s1 + $0x8ac] sm:$0xff]
  %v355 = vld [vmem:[%s1 + $0x8b4] sm:$0xff]
  %v356 = vld [vmem:[%s1 + $0x8bc] sm:$0xf]
  %v357 = vld [vmem:[%s1 + $0x8c0] sm:$0xff]
  %v358 = vld [vmem:[%s1 + $0x8c8] sm:$0xff]
  %v359 = vld [vmem:[%s1 + $0x8d0] sm:$0xff]
  %v360 = vld [vmem:[%s1 + $0x8d8] sm:$0xf]
  %v361 = vld [vmem:[%s1 + $0x8dc] sm:$0xff]
  %v362 = vld [vmem:[%s1 + $0x8e4] sm:$0xff]
  %v363 = vld [vmem:[%s1 + $0x8ec] sm:$0xff]
  %v364 = vld [vmem:[%s1 + $0x8f4] sm:$0xf]
  %v365 = vld [vmem:[%s1 + $0x8f8] sm:$0xff]
  %v366 = vld [vmem:[%s1 + $0x900] sm:$0xff]
  %v367 = vld [vmem:[%s1 + $0x908] sm:$0xff]
  %v368 = vld [vmem:[%s1 + $0x910] sm:$0xf]
  %v369 = vld [vmem:[%s1 + $0x914] sm:$0xff]
  %v370 = vld [vmem:[%s1 + $0x91c] sm:$0xff]
  %v371 = vld [vmem:[%s1 + $0x924] sm:$0xff]
  %v372 = vld [vmem:[%s1 + $0x92c] sm:$0xf]
  %v373 = vld [vmem:[%s1 + $0x930] sm:$0xff]
  %v374 = vld [vmem:[%s1 + $0x938] sm:$0xff]
  %v375 = vld [vmem:[%s1 + $0x940] sm:$0xff]
  %v376 = vld [vmem:[%s1 + $0x948] sm:$0xf]
  %v377 = vld [vmem:[%s1 + $0x94c] sm:$0xff]
  %v378 = vld [vmem:[%s1 + $0x954] sm:$0xff]
  %v379 = vld [vmem:[%s1 + $0x95c] sm:$0xff]
  %v380 = vld [vmem:[%s1 + $0x964] sm:$0xf]
  %v381 = vld [vmem:[%s1 + $0x968] sm:$0xff]
  %v382 = vld [vmem:[%s1 + $0x970] sm:$0xff]
  %v383 = vld [vmem:[%s1 + $0x978] sm:$0xff]
  %v384 = vld [vmem:[%s1 + $0x980] sm:$0xf]
  %v385 = vld [vmem:[%s1 + $0x984] sm:$0xff]
  %v386 = vld [vmem:[%s1 + $0x98c] sm:$0xff]
  %v387 = vld [vmem:[%s1 + $0x994] sm:$0xff]
  %v388 = vld [vmem:[%s1 + $0x99c] sm:$0xf]
  %v389 = vld [vmem:[%s1 + $0x9a0] sm:$0xff]
  %v390 = vld [vmem:[%s1 + $0x9a8] sm:$0xff]
  %v391 = vld [vmem:[%s1 + $0x9b0] sm:$0xff]
  %v392 = vld [vmem:[%s1 + $0x9b8] sm:$0xf]
  %v393 = vld [vmem:[%s1 + $0x9bc] sm:$0xff]
  %v394 = vld [vmem:[%s1 + $0x9c4] sm:$0xff]
  %v395 = vld [vmem:[%s1 + $0x9cc] sm:$0xff]
  %v396 = vld [vmem:[%s1 + $0x9d4] sm:$0xf]
  %v397 = vld [vmem:[%s1 + $0x9d8] sm:$0xff]
  %v398 = vld [vmem:[%s1 + $0x9e0] sm:$0xff]
  %v399 = vld [vmem:[%s1 + $0x9e8] sm:$0xff]
  %v400 = vld [vmem:[%s1 + $0x9f0] sm:$0xf]
  %v401 = vld [vmem:[%s1 + $0x9f4] sm:$0xff]
  %v402 = vld [vmem:[%s1 + $0x9fc] sm:$0xff]
  %v403 = vld [vmem:[%s1 + $0xa04] sm:$0xff]
  %v404 = vld [vmem:[%s1 + $0xa0c] sm:$0xf]
  %v405 = vld [vmem:[%s1 + $0xa10] sm:$0xff]
  %v406 = vld [vmem:[%s1 + $0xa18] sm:$0xff]
  %v407 = vld [vmem:[%s1 + $0xa20] sm:$0xff]
  %v408 = vld [vmem:[%s1 + $0xa28] sm:$0xf]
  %v409 = vld [vmem:[%s1 + $0xa2c] sm:$0xff]
  %v410 = vld [vmem:[%s1 + $0xa34] sm:$0xff]
  %v411 = vld [vmem:[%s1 + $0xa3c] sm:$0xff]
  %v412 = vld [vmem:[%s1 + $0xa44] sm:$0xf]
  %v413 = vld [vmem:[%s1 + $0xa48] sm:$0xff]
  %v414 = vld [vmem:[%s1 + $0xa50] sm:$0xff]
  %v415 = vld [vmem:[%s1 + $0xa58] sm:$0xff]
  %v416 = vld [vmem:[%s1 + $0xa60] sm:$0xf]
  %v417 = vld [vmem:[%s1 + $0xa64] sm:$0xff]
  %v418 = vld [vmem:[%s1 + $0xa6c] sm:$0xff]
  %v419 = vld [vmem:[%s1 + $0xa74] sm:$0xff]
  %v420 = vld [vmem:[%s1 + $0xa7c] sm:$0xf]
  %v421 = vld [vmem:[%s1 + $0xa80] sm:$0xff]
  %v422 = vld [vmem:[%s1 + $0xa88] sm:$0xff]
  %v423 = vld [vmem:[%s1 + $0xa90] sm:$0xff]
  %v424 = vld [vmem:[%s1 + $0xa98] sm:$0xf]
  %v425 = vld [vmem:[%s1 + $0xa9c] sm:$0xff]
  %v426 = vld [vmem:[%s1 + $0xaa4] sm:$0xff]
  %v427 = vld [vmem:[%s1 + $0xaac] sm:$0xff]
  %v428 = vld [vmem:[%s1 + $0xab4] sm:$0xf]
  %v429 = vld [vmem:[%s1 + $0xab8] sm:$0xff]
  %v430 = vld [vmem:[%s1 + $0xac0] sm:$0xff]
  %v431 = vld [vmem:[%s1 + $0xac8] sm:$0xff]
  %v432 = vld [vmem:[%s1 + $0xad0] sm:$0xf]
  %v433 = vld [vmem:[%s1 + $0xad4] sm:$0xff]
  %v434 = vld [vmem:[%s1 + $0xadc] sm:$0xff]
  %v435 = vld [vmem:[%s1 + $0xae4] sm:$0xff]
  %v436 = vld [vmem:[%s1 + $0xaec] sm:$0xf]
  %v437 = vld [vmem:[%s1 + $0xaf0] sm:$0xff]
  %v438 = vld [vmem:[%s1 + $0xaf8] sm:$0xff]
  %v439 = vld [vmem:[%s1 + $0xb00] sm:$0xff]
  %v440 = vld [vmem:[%s1 + $0xb08] sm:$0xf]
  %v441 = vld [vmem:[%s1 + $0xb0c] sm:$0xff]
  %v442 = vld [vmem:[%s1 + $0xb14] sm:$0xff]
  %v443 = vld [vmem:[%s1 + $0xb1c] sm:$0xff]
  %v444 = vld [vmem:[%s1 + $0xb24] sm:$0xf]
  %v445 = vld [vmem:[%s1 + $0xb28] sm:$0xff]
  %v446 = vld [vmem:[%s1 + $0xb30] sm:$0xff]
  %v447 = vld [vmem:[%s1 + $0xb38] sm:$0xff]
  %v448 = vld [vmem:[%s1 + $0xb40] sm:$0xf]
  %v449 = vld [vmem:[%s1 + $0xb44] sm:$0xff]
  %v450 = vld [vmem:[%s1 + $0xb4c] sm:$0xff]
  %v451 = vld [vmem:[%s1 + $0xb54] sm:$0xff]
  %v452 = vld [vmem:[%s1 + $0xb5c] sm:$0xf]
  %v453 = vld [vmem:[%s1 + $0xb60] sm:$0xff]
  %v454 = vld [vmem:[%s1 + $0xb68] sm:$0xff]
  %v455 = vld [vmem:[%s1 + $0xb70] sm:$0xff]
  %v456 = vld [vmem:[%s1 + $0xb78] sm:$0xf]
  %v457 = vld [vmem:[%s1 + $0xb7c] sm:$0xff]
  %v458 = vld [vmem:[%s1 + $0xb84] sm:$0xff]
  %v459 = vld [vmem:[%s1 + $0xb8c] sm:$0xff]
  %v460 = vld [vmem:[%s1 + $0xb94] sm:$0xf]
  %v461 = vld [vmem:[%s1 + $0xb98] sm:$0xff]
  %v462 = vld [vmem:[%s1 + $0xba0] sm:$0xff]
  %v463 = vld [vmem:[%s1 + $0xba8] sm:$0xff]
  %v464 = vld [vmem:[%s1 + $0xbb0] sm:$0xf]
  %v465 = vld [vmem:[%s1 + $0xbb4] sm:$0xff]
  %v466 = vld [vmem:[%s1 + $0xbbc] sm:$0xff]
  %v467 = vld [vmem:[%s1 + $0xbc4] sm:$0xff]
  %v468 = vld [vmem:[%s1 + $0xbcc] sm:$0xf]
  %v469 = vld [vmem:[%s1 + $0xbd0] sm:$0xff]
  %v470 = vld [vmem:[%s1 + $0xbd8] sm:$0xff]
  %v471 = vld [vmem:[%s1 + $0xbe0] sm:$0xff]
  %v472 = vld [vmem:[%s1 + $0xbe8] sm:$0xf]
  %v473 = vld [vmem:[%s1 + $0xbec] sm:$0xff]
  %v474 = vld [vmem:[%s1 + $0xbf4] sm:$0xff]
  %v475 = vld [vmem:[%s1 + $0xbfc] sm:$0xff]
  %v476 = vld [vmem:[%s1 + $0xc04] sm:$0xf]
  %v477 = vld [vmem:[%s1 + $0xc08] sm:$0xff]
  %v478 = vld [vmem:[%s1 + $0xc10] sm:$0xff]
  %v479 = vld [vmem:[%s1 + $0xc18] sm:$0xff]
  %v480 = vld [vmem:[%s1 + $0xc20] sm:$0xf]
  %v481 = vld [vmem:[%s1 + $0xc24] sm:$0xff]
  %v482 = vld [vmem:[%s1 + $0xc2c] sm:$0xff]
  %v483 = vld [vmem:[%s1 + $0xc34] sm:$0xff]
  %v484 = vld [vmem:[%s1 + $0xc3c] sm:$0xf]
  %v485 = vld [vmem:[%s1 + $0xc40] sm:$0xff]
  %v486 = vld [vmem:[%s1 + $0xc48] sm:$0xff]
  %v487 = vld [vmem:[%s1 + $0xc50] sm:$0xff]
  %v488 = vld [vmem:[%s1 + $0xc58] sm:$0xf]
  %v489 = vld [vmem:[%s1 + $0xc5c] sm:$0xff]
  %v490 = vld [vmem:[%s1 + $0xc64] sm:$0xff]
  %v491 = vld [vmem:[%s1 + $0xc6c] sm:$0xff]
  %v492 = vld [vmem:[%s1 + $0xc74] sm:$0xf]
  %v493 = vld [vmem:[%s1 + $0xc78] sm:$0xff]
  %v494 = vld [vmem:[%s1 + $0xc80] sm:$0xff]
  %v495 = vld [vmem:[%s1 + $0xc88] sm:$0xff]
  %v496 = vld [vmem:[%s1 + $0xc90] sm:$0xf]
  %v497 = vld [vmem:[%s1 + $0xc94] sm:$0xff]
  %v498 = vld [vmem:[%s1 + $0xc9c] sm:$0xff]
  %v499 = vld [vmem:[%s1 + $0xca4] sm:$0xff]
  %v500 = vld [vmem:[%s1 + $0xcac] sm:$0xf]
  %v501 = vld [vmem:[%s1 + $0xcb0] sm:$0xff]
  %v502 = vld [vmem:[%s1 + $0xcb8] sm:$0xff]
  %v503 = vld [vmem:[%s1 + $0xcc0] sm:$0xff]
  %v504 = vld [vmem:[%s1 + $0xcc8] sm:$0xf]
  %v505 = vld [vmem:[%s1 + $0xccc] sm:$0xff]
  %v506 = vld [vmem:[%s1 + $0xcd4] sm:$0xff]
  %v507 = vld [vmem:[%s1 + $0xcdc] sm:$0xff]
  %v508 = vld [vmem:[%s1 + $0xce4] sm:$0xf]
  %v509 = vld [vmem:[%s1 + $0xce8] sm:$0xff]
  %v510 = vld [vmem:[%s1 + $0xcf0] sm:$0xff]
  %v511 = vld [vmem:[%s1 + $0xcf8] sm:$0xff]
  %v512 = vld [vmem:[%s1 + $0xd00] sm:$0xf]
  %v513 = vld [vmem:[%s1 + $0xd04] sm:$0xff]
  %v514 = vld [vmem:[%s1 + $0xd0c] sm:$0xff]
  %v515 = vld [vmem:[%s1 + $0xd14] sm:$0xff]
  %v516 = vld [vmem:[%s1 + $0xd1c] sm:$0xf]
  %v517 = vld [vmem:[%s1 + $0xd20] sm:$0xff]
  %v518 = vld [vmem:[%s1 + $0xd28] sm:$0xff]
  %v519 = vld [vmem:[%s1 + $0xd30] sm:$0xff]
  %v520 = vld [vmem:[%s1 + $0xd38] sm:$0xf]
  %v521 = vld [vmem:[%s1 + $0xd3c] sm:$0xff]
  %v522 = vld [vmem:[%s1 + $0xd44] sm:$0xff]
  %v523 = vld [vmem:[%s1 + $0xd4c] sm:$0xff]
  %v524 = vld [vmem:[%s1 + $0xd54] sm:$0xf]
  %v525 = vld [vmem:[%s1 + $0xd58] sm:$0xff]
  %v526 = vld [vmem:[%s1 + $0xd60] sm:$0xff]
  %v527 = vld [vmem:[%s1 + $0xd68] sm:$0xff]
  %v528 = vld [vmem:[%s1 + $0xd70] sm:$0xf]
  %v529 = vld [vmem:[%s1 + $0xd74] sm:$0xff]
  %v530 = vld [vmem:[%s1 + $0xd7c] sm:$0xff]
  %v531 = vld [vmem:[%s1 + $0xd84] sm:$0xff]
  %v532 = vld [vmem:[%s1 + $0xd8c] sm:$0xf]
  %v533 = vld [vmem:[%s1 + $0xd90] sm:$0xff]
  %v534 = vld [vmem:[%s1 + $0xd98] sm:$0xff]
  %v535 = vld [vmem:[%s1 + $0xda0] sm:$0xff]
  %v536 = vld [vmem:[%s1 + $0xda8] sm:$0xf]
  %v537 = vld [vmem:[%s1 + $0xdac] sm:$0xff]
  %v538 = vld [vmem:[%s1 + $0xdb4] sm:$0xff]
  %v539 = vld [vmem:[%s1 + $0xdbc] sm:$0xff]
  %v540 = vld [vmem:[%s1 + $0xdc4] sm:$0xf]
  %v541 = vld [vmem:[%s1 + $0xdc8] sm:$0xff]
  %v542 = vld [vmem:[%s1 + $0xdd0] sm:$0xff]
  %v543 = vld [vmem:[%s1 + $0xdd8] sm:$0xff]
  %v544 = vld [vmem:[%s1 + $0xde0] sm:$0xf]
  %v545 = vld [vmem:[%s1 + $0xde4] sm:$0xff]
  %v546 = vld [vmem:[%s1 + $0xdec] sm:$0xff]
  %v547 = vld [vmem:[%s1 + $0xdf4] sm:$0xff]
  %v548 = vld [vmem:[%s1 + $0xdfc] sm:$0xf]
  %v549 = vld [vmem:[%s2] sm:$0xff]
  %v551 = vlaneseq
  %v552 = vshrl.u32 %v551, 7
  %v553 = vsub.s32 0, %v552
  %v554 = vrot.slane %v549, %v553
  %v555 = vlaneseq
  %v556 = vshrl.u32 %v555, 7
  %v557 = vsub.s32 1, %v556
  %v558 = vrot.slane %v549, %v557
  %v559 = vlaneseq
  %v560 = vshrl.u32 %v559, 7
  %v561 = vsub.s32 2, %v560
  %v562 = vrot.slane %v549, %v561
  %v563 = vlaneseq
  %v564 = vshrl.u32 %v563, 7
  %v565 = vsub.s32 3, %v564
  %v566 = vrot.slane %v549, %v565
  %v567 = vlaneseq
  %v568 = vshrl.u32 %v567, 7
  %v569 = vsub.s32 4, %v568
  %v570 = vrot.slane %v549, %v569
  %v571 = vlaneseq
  %v572 = vshrl.u32 %v571, 7
  %v573 = vsub.s32 5, %v572
  %v574 = vrot.slane %v549, %v573
  %v575 = vlaneseq
  %v576 = vshrl.u32 %v575, 7
  %v577 = vsub.s32 6, %v576
  %v578 = vrot.slane %v549, %v577
  %v590 = vunpack.c.l.b16 %v33
  %v591 = vunpack.c.h.b16 %v33
  %v592 = vunpack.c.l.b16 %v34
  %v593 = vunpack.c.h.b16 %v34
  %v594 = vunpack.c.l.b16 %v35
  %v595 = vunpack.c.h.b16 %v35
  %v596 = vunpack.c.l.b16 %v36
  %v597 = vunpack.c.h.b16 %v36
  %v598 = vpack.c.b16 %v590, %v590
  %v599 = vpack.c.b16 %v591, %v591
  %v600 = vpack.c.b16 %v592, %v592
  %v601 = vpack.c.b16 %v593, %v593
  %v602 = vpack.c.b16 %v594, %v594
  %v603 = vpack.c.b16 %v595, %v595
  %v604 = vpack.c.b16 %v596, %v596
  %v605 = vpack.c.b16 %v597, %v597
  %v1126 = vunpack.c.l.b16 %v37
  %v1127 = vunpack.c.h.b16 %v37
  %v1128 = vunpack.c.l.b16 %v38
  %v1129 = vunpack.c.h.b16 %v38
  %v1130 = vunpack.c.l.b16 %v39
  %v1131 = vunpack.c.h.b16 %v39
  %v1132 = vunpack.c.l.b16 %v40
  %v1133 = vunpack.c.l.b16 %v41
  %v1134 = vunpack.c.h.b16 %v41
  %v1135 = vunpack.c.l.b16 %v42
  %v1136 = vunpack.c.h.b16 %v42
  %v1137 = vunpack.c.l.b16 %v43
  %v1138 = vunpack.c.h.b16 %v43
  %v1139 = vunpack.c.l.b16 %v44
  %v1140 = vunpack.c.l.b16 %v45
  %v1141 = vunpack.c.h.b16 %v45
  %v1142 = vunpack.c.l.b16 %v46
  %v1143 = vunpack.c.h.b16 %v46
  %v1144 = vunpack.c.l.b16 %v47
  %v1145 = vunpack.c.h.b16 %v47
  %v1146 = vunpack.c.l.b16 %v48
  %v1147 = vunpack.c.l.b16 %v49
  %v1148 = vunpack.c.h.b16 %v49
  %v1149 = vunpack.c.l.b16 %v50
  %v1150 = vunpack.c.h.b16 %v50
  %v1151 = vunpack.c.l.b16 %v51
  %v1152 = vunpack.c.h.b16 %v51
  %v1153 = vunpack.c.l.b16 %v52
  %v1154 = vunpack.c.l.b16 %v53
  %v1155 = vunpack.c.h.b16 %v53
  %v1156 = vunpack.c.l.b16 %v54
  %v1157 = vunpack.c.h.b16 %v54
  %v1158 = vunpack.c.l.b16 %v55
  %v1159 = vunpack.c.h.b16 %v55
  %v1160 = vunpack.c.l.b16 %v56
  %v1161 = vunpack.c.l.b16 %v57
  %v1162 = vunpack.c.h.b16 %v57
  %v1163 = vunpack.c.l.b16 %v58
  %v1164 = vunpack.c.h.b16 %v58
  %v1165 = vunpack.c.l.b16 %v59
  %v1166 = vunpack.c.h.b16 %v59
  %v1167 = vunpack.c.l.b16 %v60
  %v1168 = vunpack.c.l.b16 %v61
  %v1169 = vunpack.c.h.b16 %v61
  %v1170 = vunpack.c.l.b16 %v62
  %v1171 = vunpack.c.h.b16 %v62
  %v1172 = vunpack.c.l.b16 %v63
  %v1173 = vunpack.c.h.b16 %v63
  %v1174 = vunpack.c.l.b16 %v64
  %v1175 = vunpack.c.l.b16 %v65
  %v1176 = vunpack.c.h.b16 %v65
  %v1177 = vunpack.c.l.b16 %v66
  %v1178 = vunpack.c.h.b16 %v66
  %v1179 = vunpack.c.l.b16 %v67
  %v1180 = vunpack.c.h.b16 %v67
  %v1181 = vunpack.c.l.b16 %v68
  %v1182 = vunpack.c.l.b16 %v69
  %v1183 = vunpack.c.h.b16 %v69
  %v1184 = vunpack.c.l.b16 %v70
  %v1185 = vunpack.c.h.b16 %v70
  %v1186 = vunpack.c.l.b16 %v71
  %v1187 = vunpack.c.h.b16 %v71
  %v1188 = vunpack.c.l.b16 %v72
  %v1189 = vunpack.c.l.b16 %v73
  %v1190 = vunpack.c.h.b16 %v73
  %v1191 = vunpack.c.l.b16 %v74
  %v1192 = vunpack.c.h.b16 %v74
  %v1193 = vunpack.c.l.b16 %v75
  %v1194 = vunpack.c.h.b16 %v75
  %v1195 = vunpack.c.l.b16 %v76
  %v1196 = vunpack.c.l.b16 %v77
  %v1197 = vunpack.c.h.b16 %v77
  %v1198 = vunpack.c.l.b16 %v78
  %v1199 = vunpack.c.h.b16 %v78
  %v1200 = vunpack.c.l.b16 %v79
  %v1201 = vunpack.c.h.b16 %v79
  %v1202 = vunpack.c.l.b16 %v80
  %v1203 = vunpack.c.l.b16 %v81
  %v1204 = vunpack.c.h.b16 %v81
  %v1205 = vunpack.c.l.b16 %v82
  %v1206 = vunpack.c.h.b16 %v82
  %v1207 = vunpack.c.l.b16 %v83
  %v1208 = vunpack.c.h.b16 %v83
  %v1209 = vunpack.c.l.b16 %v84
  %v1210 = vunpack.c.l.b16 %v85
  %v1211 = vunpack.c.h.b16 %v85
  %v1212 = vunpack.c.l.b16 %v86
  %v1213 = vunpack.c.h.b16 %v86
  %v1214 = vunpack.c.l.b16 %v87
  %v1215 = vunpack.c.h.b16 %v87
  %v1216 = vunpack.c.l.b16 %v88
  %v1217 = vunpack.c.l.b16 %v89
  %v1218 = vunpack.c.h.b16 %v89
  %v1219 = vunpack.c.l.b16 %v90
  %v1220 = vunpack.c.h.b16 %v90
  %v1221 = vunpack.c.l.b16 %v91
  %v1222 = vunpack.c.h.b16 %v91
  %v1223 = vunpack.c.l.b16 %v92
  %v1224 = vunpack.c.l.b16 %v93
  %v1225 = vunpack.c.h.b16 %v93
  %v1226 = vunpack.c.l.b16 %v94
  %v1227 = vunpack.c.h.b16 %v94
  %v1228 = vunpack.c.l.b16 %v95
  %v1229 = vunpack.c.h.b16 %v95
  %v1230 = vunpack.c.l.b16 %v96
  %v1231 = vunpack.c.l.b16 %v97
  %v1232 = vunpack.c.h.b16 %v97
  %v1233 = vunpack.c.l.b16 %v98
  %v1234 = vunpack.c.h.b16 %v98
  %v1235 = vunpack.c.l.b16 %v99
  %v1236 = vunpack.c.h.b16 %v99
  %v1237 = vunpack.c.l.b16 %v100
  %v1238 = vunpack.c.l.b16 %v101
  %v1239 = vunpack.c.h.b16 %v101
  %v1240 = vunpack.c.l.b16 %v102
  %v1241 = vunpack.c.h.b16 %v102
  %v1242 = vunpack.c.l.b16 %v103
  %v1243 = vunpack.c.h.b16 %v103
  %v1244 = vunpack.c.l.b16 %v104
  %v1245 = vunpack.c.l.b16 %v105
  %v1246 = vunpack.c.h.b16 %v105
  %v1247 = vunpack.c.l.b16 %v106
  %v1248 = vunpack.c.h.b16 %v106
  %v1249 = vunpack.c.l.b16 %v107
  %v1250 = vunpack.c.h.b16 %v107
  %v1251 = vunpack.c.l.b16 %v108
  %v1252 = vunpack.c.l.b16 %v109
  %v1253 = vunpack.c.h.b16 %v109
  %v1254 = vunpack.c.l.b16 %v110
  %v1255 = vunpack.c.h.b16 %v110
  %v1256 = vunpack.c.l.b16 %v111
  %v1257 = vunpack.c.h.b16 %v111
  %v1258 = vunpack.c.l.b16 %v112
  %v1259 = vunpack.c.l.b16 %v113
  %v1260 = vunpack.c.h.b16 %v113
  %v1261 = vunpack.c.l.b16 %v114
  %v1262 = vunpack.c.h.b16 %v114
  %v1263 = vunpack.c.l.b16 %v115
  %v1264 = vunpack.c.h.b16 %v115
  %v1265 = vunpack.c.l.b16 %v116
  %v1266 = vunpack.c.l.b16 %v117
  %v1267 = vunpack.c.h.b16 %v117
  %v1268 = vunpack.c.l.b16 %v118
  %v1269 = vunpack.c.h.b16 %v118
  %v1270 = vunpack.c.l.b16 %v119
  %v1271 = vunpack.c.h.b16 %v119
  %v1272 = vunpack.c.l.b16 %v120
  %v1273 = vunpack.c.l.b16 %v121
  %v1274 = vunpack.c.h.b16 %v121
  %v1275 = vunpack.c.l.b16 %v122
  %v1276 = vunpack.c.h.b16 %v122
  %v1277 = vunpack.c.l.b16 %v123
  %v1278 = vunpack.c.h.b16 %v123
  %v1279 = vunpack.c.l.b16 %v124
  %v1280 = vunpack.c.l.b16 %v125
  %v1281 = vunpack.c.h.b16 %v125
  %v1282 = vunpack.c.l.b16 %v126
  %v1283 = vunpack.c.h.b16 %v126
  %v1284 = vunpack.c.l.b16 %v127
  %v1285 = vunpack.c.h.b16 %v127
  %v1286 = vunpack.c.l.b16 %v128
  %v1287 = vunpack.c.l.b16 %v129
  %v1288 = vunpack.c.h.b16 %v129
  %v1289 = vunpack.c.l.b16 %v130
  %v1290 = vunpack.c.h.b16 %v130
  %v1291 = vunpack.c.l.b16 %v131
  %v1292 = vunpack.c.h.b16 %v131
  %v1293 = vunpack.c.l.b16 %v132
  %v1294 = vunpack.c.l.b16 %v133
  %v1295 = vunpack.c.h.b16 %v133
  %v1296 = vunpack.c.l.b16 %v134
  %v1297 = vunpack.c.h.b16 %v134
  %v1298 = vunpack.c.l.b16 %v135
  %v1299 = vunpack.c.h.b16 %v135
  %v1300 = vunpack.c.l.b16 %v136
  %v1301 = vunpack.c.l.b16 %v137
  %v1302 = vunpack.c.h.b16 %v137
  %v1303 = vunpack.c.l.b16 %v138
  %v1304 = vunpack.c.h.b16 %v138
  %v1305 = vunpack.c.l.b16 %v139
  %v1306 = vunpack.c.h.b16 %v139
  %v1307 = vunpack.c.l.b16 %v140
  %v1308 = vunpack.c.l.b16 %v141
  %v1309 = vunpack.c.h.b16 %v141
  %v1310 = vunpack.c.l.b16 %v142
  %v1311 = vunpack.c.h.b16 %v142
  %v1312 = vunpack.c.l.b16 %v143
  %v1313 = vunpack.c.h.b16 %v143
  %v1314 = vunpack.c.l.b16 %v144
  %v1315 = vunpack.c.l.b16 %v145
  %v1316 = vunpack.c.h.b16 %v145
  %v1317 = vunpack.c.l.b16 %v146
  %v1318 = vunpack.c.h.b16 %v146
  %v1319 = vunpack.c.l.b16 %v147
  %v1320 = vunpack.c.h.b16 %v147
  %v1321 = vunpack.c.l.b16 %v148
  %v1322 = vunpack.c.l.b16 %v149
  %v1323 = vunpack.c.h.b16 %v149
  %v1324 = vunpack.c.l.b16 %v150
  %v1325 = vunpack.c.h.b16 %v150
  %v1326 = vunpack.c.l.b16 %v151
  %v1327 = vunpack.c.h.b16 %v151
  %v1328 = vunpack.c.l.b16 %v152
  %v1329 = vunpack.c.l.b16 %v153
  %v1330 = vunpack.c.h.b16 %v153
  %v1331 = vunpack.c.l.b16 %v154
  %v1332 = vunpack.c.h.b16 %v154
  %v1333 = vunpack.c.l.b16 %v155
  %v1334 = vunpack.c.h.b16 %v155
  %v1335 = vunpack.c.l.b16 %v156
  %v1336 = vunpack.c.l.b16 %v157
  %v1337 = vunpack.c.h.b16 %v157
  %v1338 = vunpack.c.l.b16 %v158
  %v1339 = vunpack.c.h.b16 %v158
  %v1340 = vunpack.c.l.b16 %v159
  %v1341 = vunpack.c.h.b16 %v159
  %v1342 = vunpack.c.l.b16 %v160
  %v1343 = vunpack.c.l.b16 %v161
  %v1344 = vunpack.c.h.b16 %v161
  %v1345 = vunpack.c.l.b16 %v162
  %v1346 = vunpack.c.h.b16 %v162
  %v1347 = vunpack.c.l.b16 %v163
  %v1348 = vunpack.c.h.b16 %v163
  %v1349 = vunpack.c.l.b16 %v164
  %v1350 = vunpack.c.l.b16 %v165
  %v1351 = vunpack.c.h.b16 %v165
  %v1352 = vunpack.c.l.b16 %v166
  %v1353 = vunpack.c.h.b16 %v166
  %v1354 = vunpack.c.l.b16 %v167
  %v1355 = vunpack.c.h.b16 %v167
  %v1356 = vunpack.c.l.b16 %v168
  %v1357 = vunpack.c.l.b16 %v169
  %v1358 = vunpack.c.h.b16 %v169
  %v1359 = vunpack.c.l.b16 %v170
  %v1360 = vunpack.c.h.b16 %v170
  %v1361 = vunpack.c.l.b16 %v171
  %v1362 = vunpack.c.h.b16 %v171
  %v1363 = vunpack.c.l.b16 %v172
  %v1364 = vunpack.c.l.b16 %v173
  %v1365 = vunpack.c.h.b16 %v173
  %v1366 = vunpack.c.l.b16 %v174
  %v1367 = vunpack.c.h.b16 %v174
  %v1368 = vunpack.c.l.b16 %v175
  %v1369 = vunpack.c.h.b16 %v175
  %v1370 = vunpack.c.l.b16 %v176
  %v1371 = vunpack.c.l.b16 %v177
  %v1372 = vunpack.c.h.b16 %v177
  %v1373 = vunpack.c.l.b16 %v178
  %v1374 = vunpack.c.h.b16 %v178
  %v1375 = vunpack.c.l.b16 %v179
  %v1376 = vunpack.c.h.b16 %v179
  %v1377 = vunpack.c.l.b16 %v180
  %v1378 = vunpack.c.l.b16 %v181
  %v1379 = vunpack.c.h.b16 %v181
  %v1380 = vunpack.c.l.b16 %v182
  %v1381 = vunpack.c.h.b16 %v182
  %v1382 = vunpack.c.l.b16 %v183
  %v1383 = vunpack.c.h.b16 %v183
  %v1384 = vunpack.c.l.b16 %v184
  %v1385 = vunpack.c.l.b16 %v185
  %v1386 = vunpack.c.h.b16 %v185
  %v1387 = vunpack.c.l.b16 %v186
  %v1388 = vunpack.c.h.b16 %v186
  %v1389 = vunpack.c.l.b16 %v187
  %v1390 = vunpack.c.h.b16 %v187
  %v1391 = vunpack.c.l.b16 %v188
  %v1392 = vunpack.c.l.b16 %v189
  %v1393 = vunpack.c.h.b16 %v189
  %v1394 = vunpack.c.l.b16 %v190
  %v1395 = vunpack.c.h.b16 %v190
  %v1396 = vunpack.c.l.b16 %v191
  %v1397 = vunpack.c.h.b16 %v191
  %v1398 = vunpack.c.l.b16 %v192
  %v1399 = vunpack.c.l.b16 %v193
  %v1400 = vunpack.c.h.b16 %v193
  %v1401 = vunpack.c.l.b16 %v194
  %v1402 = vunpack.c.h.b16 %v194
  %v1403 = vunpack.c.l.b16 %v195
  %v1404 = vunpack.c.h.b16 %v195
  %v1405 = vunpack.c.l.b16 %v196
  %v1406 = vunpack.c.l.b16 %v197
  %v1407 = vunpack.c.h.b16 %v197
  %v1408 = vunpack.c.l.b16 %v198
  %v1409 = vunpack.c.h.b16 %v198
  %v1410 = vunpack.c.l.b16 %v199
  %v1411 = vunpack.c.h.b16 %v199
  %v1412 = vunpack.c.l.b16 %v200
  %v1413 = vunpack.c.l.b16 %v201
  %v1414 = vunpack.c.h.b16 %v201
  %v1415 = vunpack.c.l.b16 %v202
  %v1416 = vunpack.c.h.b16 %v202
  %v1417 = vunpack.c.l.b16 %v203
  %v1418 = vunpack.c.h.b16 %v203
  %v1419 = vunpack.c.l.b16 %v204
  %v1420 = vunpack.c.l.b16 %v205
  %v1421 = vunpack.c.h.b16 %v205
  %v1422 = vunpack.c.l.b16 %v206
  %v1423 = vunpack.c.h.b16 %v206
  %v1424 = vunpack.c.l.b16 %v207
  %v1425 = vunpack.c.h.b16 %v207
  %v1426 = vunpack.c.l.b16 %v208
  %v1427 = vunpack.c.l.b16 %v209
  %v1428 = vunpack.c.h.b16 %v209
  %v1429 = vunpack.c.l.b16 %v210
  %v1430 = vunpack.c.h.b16 %v210
  %v1431 = vunpack.c.l.b16 %v211
  %v1432 = vunpack.c.h.b16 %v211
  %v1433 = vunpack.c.l.b16 %v212
  %v1434 = vunpack.c.l.b16 %v213
  %v1435 = vunpack.c.h.b16 %v213
  %v1436 = vunpack.c.l.b16 %v214
  %v1437 = vunpack.c.h.b16 %v214
  %v1438 = vunpack.c.l.b16 %v215
  %v1439 = vunpack.c.h.b16 %v215
  %v1440 = vunpack.c.l.b16 %v216
  %v1441 = vunpack.c.l.b16 %v217
  %v1442 = vunpack.c.h.b16 %v217
  %v1443 = vunpack.c.l.b16 %v218
  %v1444 = vunpack.c.h.b16 %v218
  %v1445 = vunpack.c.l.b16 %v219
  %v1446 = vunpack.c.h.b16 %v219
  %v1447 = vunpack.c.l.b16 %v220
  %v1448 = vunpack.c.l.b16 %v221
  %v1449 = vunpack.c.h.b16 %v221
  %v1450 = vunpack.c.l.b16 %v222
  %v1451 = vunpack.c.h.b16 %v222
  %v1452 = vunpack.c.l.b16 %v223
  %v1453 = vunpack.c.h.b16 %v223
  %v1454 = vunpack.c.l.b16 %v224
  %v1455 = vunpack.c.l.b16 %v225
  %v1456 = vunpack.c.h.b16 %v225
  %v1457 = vunpack.c.l.b16 %v226
  %v1458 = vunpack.c.h.b16 %v226
  %v1459 = vunpack.c.l.b16 %v227
  %v1460 = vunpack.c.h.b16 %v227
  %v1461 = vunpack.c.l.b16 %v228
  %v1462 = vunpack.c.l.b16 %v229
  %v1463 = vunpack.c.h.b16 %v229
  %v1464 = vunpack.c.l.b16 %v230
  %v1465 = vunpack.c.h.b16 %v230
  %v1466 = vunpack.c.l.b16 %v231
  %v1467 = vunpack.c.h.b16 %v231
  %v1468 = vunpack.c.l.b16 %v232
  %v1469 = vunpack.c.l.b16 %v233
  %v1470 = vunpack.c.h.b16 %v233
  %v1471 = vunpack.c.l.b16 %v234
  %v1472 = vunpack.c.h.b16 %v234
  %v1473 = vunpack.c.l.b16 %v235
  %v1474 = vunpack.c.h.b16 %v235
  %v1475 = vunpack.c.l.b16 %v236
  %v1476 = vunpack.c.l.b16 %v237
  %v1477 = vunpack.c.h.b16 %v237
  %v1478 = vunpack.c.l.b16 %v238
  %v1479 = vunpack.c.h.b16 %v238
  %v1480 = vunpack.c.l.b16 %v239
  %v1481 = vunpack.c.h.b16 %v239
  %v1482 = vunpack.c.l.b16 %v240
  %v1483 = vunpack.c.l.b16 %v241
  %v1484 = vunpack.c.h.b16 %v241
  %v1485 = vunpack.c.l.b16 %v242
  %v1486 = vunpack.c.h.b16 %v242
  %v1487 = vunpack.c.l.b16 %v243
  %v1488 = vunpack.c.h.b16 %v243
  %v1489 = vunpack.c.l.b16 %v244
  %v1490 = vunpack.c.l.b16 %v245
  %v1491 = vunpack.c.h.b16 %v245
  %v1492 = vunpack.c.l.b16 %v246
  %v1493 = vunpack.c.h.b16 %v246
  %v1494 = vunpack.c.l.b16 %v247
  %v1495 = vunpack.c.h.b16 %v247
  %v1496 = vunpack.c.l.b16 %v248
  %v1497 = vunpack.c.l.b16 %v249
  %v1498 = vunpack.c.h.b16 %v249
  %v1499 = vunpack.c.l.b16 %v250
  %v1500 = vunpack.c.h.b16 %v250
  %v1501 = vunpack.c.l.b16 %v251
  %v1502 = vunpack.c.h.b16 %v251
  %v1503 = vunpack.c.l.b16 %v252
  %v1504 = vunpack.c.l.b16 %v253
  %v1505 = vunpack.c.h.b16 %v253
  %v1506 = vunpack.c.l.b16 %v254
  %v1507 = vunpack.c.h.b16 %v254
  %v1508 = vunpack.c.l.b16 %v255
  %v1509 = vunpack.c.h.b16 %v255
  %v1510 = vunpack.c.l.b16 %v256
  %v1511 = vunpack.c.l.b16 %v257
  %v1512 = vunpack.c.h.b16 %v257
  %v1513 = vunpack.c.l.b16 %v258
  %v1514 = vunpack.c.h.b16 %v258
  %v1515 = vunpack.c.l.b16 %v259
  %v1516 = vunpack.c.h.b16 %v259
  %v1517 = vunpack.c.l.b16 %v260
  %v1518 = vunpack.c.l.b16 %v261
  %v1519 = vunpack.c.h.b16 %v261
  %v1520 = vunpack.c.l.b16 %v262
  %v1521 = vunpack.c.h.b16 %v262
  %v1522 = vunpack.c.l.b16 %v263
  %v1523 = vunpack.c.h.b16 %v263
  %v1524 = vunpack.c.l.b16 %v264
  %v1525 = vunpack.c.l.b16 %v265
  %v1526 = vunpack.c.h.b16 %v265
  %v1527 = vunpack.c.l.b16 %v266
  %v1528 = vunpack.c.h.b16 %v266
  %v1529 = vunpack.c.l.b16 %v267
  %v1530 = vunpack.c.h.b16 %v267
  %v1531 = vunpack.c.l.b16 %v268
  %v1532 = vunpack.c.l.b16 %v269
  %v1533 = vunpack.c.h.b16 %v269
  %v1534 = vunpack.c.l.b16 %v270
  %v1535 = vunpack.c.h.b16 %v270
  %v1536 = vunpack.c.l.b16 %v271
  %v1537 = vunpack.c.h.b16 %v271
  %v1538 = vunpack.c.l.b16 %v272
  %v1539 = vunpack.c.l.b16 %v273
  %v1540 = vunpack.c.h.b16 %v273
  %v1541 = vunpack.c.l.b16 %v274
  %v1542 = vunpack.c.h.b16 %v274
  %v1543 = vunpack.c.l.b16 %v275
  %v1544 = vunpack.c.h.b16 %v275
  %v1545 = vunpack.c.l.b16 %v276
  %v1546 = vunpack.c.l.b16 %v277
  %v1547 = vunpack.c.h.b16 %v277
  %v1548 = vunpack.c.l.b16 %v278
  %v1549 = vunpack.c.h.b16 %v278
  %v1550 = vunpack.c.l.b16 %v279
  %v1551 = vunpack.c.h.b16 %v279
  %v1552 = vunpack.c.l.b16 %v280
  %v1553 = vunpack.c.l.b16 %v281
  %v1554 = vunpack.c.h.b16 %v281
  %v1555 = vunpack.c.l.b16 %v282
  %v1556 = vunpack.c.h.b16 %v282
  %v1557 = vunpack.c.l.b16 %v283
  %v1558 = vunpack.c.h.b16 %v283
  %v1559 = vunpack.c.l.b16 %v284
  %v1560 = vunpack.c.l.b16 %v285
  %v1561 = vunpack.c.h.b16 %v285
  %v1562 = vunpack.c.l.b16 %v286
  %v1563 = vunpack.c.h.b16 %v286
  %v1564 = vunpack.c.l.b16 %v287
  %v1565 = vunpack.c.h.b16 %v287
  %v1566 = vunpack.c.l.b16 %v288
  %v1567 = vunpack.c.l.b16 %v289
  %v1568 = vunpack.c.h.b16 %v289
  %v1569 = vunpack.c.l.b16 %v290
  %v1570 = vunpack.c.h.b16 %v290
  %v1571 = vunpack.c.l.b16 %v291
  %v1572 = vunpack.c.h.b16 %v291
  %v1573 = vunpack.c.l.b16 %v292
  %v1574 = vunpack.c.l.b16 %v293
  %v1575 = vunpack.c.h.b16 %v293
  %v1576 = vunpack.c.l.b16 %v294
  %v1577 = vunpack.c.h.b16 %v294
  %v1578 = vunpack.c.l.b16 %v295
  %v1579 = vunpack.c.h.b16 %v295
  %v1580 = vunpack.c.l.b16 %v296
  %v1581 = vunpack.c.l.b16 %v297
  %v1582 = vunpack.c.h.b16 %v297
  %v1583 = vunpack.c.l.b16 %v298
  %v1584 = vunpack.c.h.b16 %v298
  %v1585 = vunpack.c.l.b16 %v299
  %v1586 = vunpack.c.h.b16 %v299
  %v1587 = vunpack.c.l.b16 %v300
  %v1588 = vunpack.c.l.b16 %v301
  %v1589 = vunpack.c.h.b16 %v301
  %v1590 = vunpack.c.l.b16 %v302
  %v1591 = vunpack.c.h.b16 %v302
  %v1592 = vunpack.c.l.b16 %v303
  %v1593 = vunpack.c.h.b16 %v303
  %v1594 = vunpack.c.l.b16 %v304
  %v1595 = vunpack.c.l.b16 %v305
  %v1596 = vunpack.c.h.b16 %v305
  %v1597 = vunpack.c.l.b16 %v306
  %v1598 = vunpack.c.h.b16 %v306
  %v1599 = vunpack.c.l.b16 %v307
  %v1600 = vunpack.c.h.b16 %v307
  %v1601 = vunpack.c.l.b16 %v308
  %v1602 = vunpack.c.l.b16 %v309
  %v1603 = vunpack.c.h.b16 %v309
  %v1604 = vunpack.c.l.b16 %v310
  %v1605 = vunpack.c.h.b16 %v310
  %v1606 = vunpack.c.l.b16 %v311
  %v1607 = vunpack.c.h.b16 %v311
  %v1608 = vunpack.c.l.b16 %v312
  %v1609 = vunpack.c.l.b16 %v313
  %v1610 = vunpack.c.h.b16 %v313
  %v1611 = vunpack.c.l.b16 %v314
  %v1612 = vunpack.c.h.b16 %v314
  %v1613 = vunpack.c.l.b16 %v315
  %v1614 = vunpack.c.h.b16 %v315
  %v1615 = vunpack.c.l.b16 %v316
  %v1616 = vunpack.c.l.b16 %v317
  %v1617 = vunpack.c.h.b16 %v317
  %v1618 = vunpack.c.l.b16 %v318
  %v1619 = vunpack.c.h.b16 %v318
  %v1620 = vunpack.c.l.b16 %v319
  %v1621 = vunpack.c.h.b16 %v319
  %v1622 = vunpack.c.l.b16 %v320
  %v1623 = vunpack.c.l.b16 %v321
  %v1624 = vunpack.c.h.b16 %v321
  %v1625 = vunpack.c.l.b16 %v322
  %v1626 = vunpack.c.h.b16 %v322
  %v1627 = vunpack.c.l.b16 %v323
  %v1628 = vunpack.c.h.b16 %v323
  %v1629 = vunpack.c.l.b16 %v324
  %v1630 = vunpack.c.l.b16 %v325
  %v1631 = vunpack.c.h.b16 %v325
  %v1632 = vunpack.c.l.b16 %v326
  %v1633 = vunpack.c.h.b16 %v326
  %v1634 = vunpack.c.l.b16 %v327
  %v1635 = vunpack.c.h.b16 %v327
  %v1636 = vunpack.c.l.b16 %v328
  %v1637 = vunpack.c.l.b16 %v329
  %v1638 = vunpack.c.h.b16 %v329
  %v1639 = vunpack.c.l.b16 %v330
  %v1640 = vunpack.c.h.b16 %v330
  %v1641 = vunpack.c.l.b16 %v331
  %v1642 = vunpack.c.h.b16 %v331
  %v1643 = vunpack.c.l.b16 %v332
  %v1644 = vunpack.c.l.b16 %v333
  %v1645 = vunpack.c.h.b16 %v333
  %v1646 = vunpack.c.l.b16 %v334
  %v1647 = vunpack.c.h.b16 %v334
  %v1648 = vunpack.c.l.b16 %v335
  %v1649 = vunpack.c.h.b16 %v335
  %v1650 = vunpack.c.l.b16 %v336
  %v1651 = vunpack.c.l.b16 %v337
  %v1652 = vunpack.c.h.b16 %v337
  %v1653 = vunpack.c.l.b16 %v338
  %v1654 = vunpack.c.h.b16 %v338
  %v1655 = vunpack.c.l.b16 %v339
  %v1656 = vunpack.c.h.b16 %v339
  %v1657 = vunpack.c.l.b16 %v340
  %v1658 = vunpack.c.l.b16 %v341
  %v1659 = vunpack.c.h.b16 %v341
  %v1660 = vunpack.c.l.b16 %v342
  %v1661 = vunpack.c.h.b16 %v342
  %v1662 = vunpack.c.l.b16 %v343
  %v1663 = vunpack.c.h.b16 %v343
  %v1664 = vunpack.c.l.b16 %v344
  %v1665 = vunpack.c.l.b16 %v345
  %v1666 = vunpack.c.h.b16 %v345
  %v1667 = vunpack.c.l.b16 %v346
  %v1668 = vunpack.c.h.b16 %v346
  %v1669 = vunpack.c.l.b16 %v347
  %v1670 = vunpack.c.h.b16 %v347
  %v1671 = vunpack.c.l.b16 %v348
  %v1672 = vunpack.c.l.b16 %v349
  %v1673 = vunpack.c.h.b16 %v349
  %v1674 = vunpack.c.l.b16 %v350
  %v1675 = vunpack.c.h.b16 %v350
  %v1676 = vunpack.c.l.b16 %v351
  %v1677 = vunpack.c.h.b16 %v351
  %v1678 = vunpack.c.l.b16 %v352
  %v1679 = vunpack.c.l.b16 %v353
  %v1680 = vunpack.c.h.b16 %v353
  %v1681 = vunpack.c.l.b16 %v354
  %v1682 = vunpack.c.h.b16 %v354
  %v1683 = vunpack.c.l.b16 %v355
  %v1684 = vunpack.c.h.b16 %v355
  %v1685 = vunpack.c.l.b16 %v356
  %v1686 = vunpack.c.l.b16 %v357
  %v1687 = vunpack.c.h.b16 %v357
  %v1688 = vunpack.c.l.b16 %v358
  %v1689 = vunpack.c.h.b16 %v358
  %v1690 = vunpack.c.l.b16 %v359
  %v1691 = vunpack.c.h.b16 %v359
  %v1692 = vunpack.c.l.b16 %v360
  %v1693 = vunpack.c.l.b16 %v361
  %v1694 = vunpack.c.h.b16 %v361
  %v1695 = vunpack.c.l.b16 %v362
  %v1696 = vunpack.c.h.b16 %v362
  %v1697 = vunpack.c.l.b16 %v363
  %v1698 = vunpack.c.h.b16 %v363
  %v1699 = vunpack.c.l.b16 %v364
  %v1700 = vunpack.c.l.b16 %v365
  %v1701 = vunpack.c.h.b16 %v365
  %v1702 = vunpack.c.l.b16 %v366
  %v1703 = vunpack.c.h.b16 %v366
  %v1704 = vunpack.c.l.b16 %v367
  %v1705 = vunpack.c.h.b16 %v367
  %v1706 = vunpack.c.l.b16 %v368
  %v1707 = vunpack.c.l.b16 %v369
  %v1708 = vunpack.c.h.b16 %v369
  %v1709 = vunpack.c.l.b16 %v370
  %v1710 = vunpack.c.h.b16 %v370
  %v1711 = vunpack.c.l.b16 %v371
  %v1712 = vunpack.c.h.b16 %v371
  %v1713 = vunpack.c.l.b16 %v372
  %v1714 = vunpack.c.l.b16 %v373
  %v1715 = vunpack.c.h.b16 %v373
  %v1716 = vunpack.c.l.b16 %v374
  %v1717 = vunpack.c.h.b16 %v374
  %v1718 = vunpack.c.l.b16 %v375
  %v1719 = vunpack.c.h.b16 %v375
  %v1720 = vunpack.c.l.b16 %v376
  %v1721 = vunpack.c.l.b16 %v377
  %v1722 = vunpack.c.h.b16 %v377
  %v1723 = vunpack.c.l.b16 %v378
  %v1724 = vunpack.c.h.b16 %v378
  %v1725 = vunpack.c.l.b16 %v379
  %v1726 = vunpack.c.h.b16 %v379
  %v1727 = vunpack.c.l.b16 %v380
  %v1728 = vunpack.c.l.b16 %v381
  %v1729 = vunpack.c.h.b16 %v381
  %v1730 = vunpack.c.l.b16 %v382
  %v1731 = vunpack.c.h.b16 %v382
  %v1732 = vunpack.c.l.b16 %v383
  %v1733 = vunpack.c.h.b16 %v383
  %v1734 = vunpack.c.l.b16 %v384
  %v1735 = vunpack.c.l.b16 %v385
  %v1736 = vunpack.c.h.b16 %v385
  %v1737 = vunpack.c.l.b16 %v386
  %v1738 = vunpack.c.h.b16 %v386
  %v1739 = vunpack.c.l.b16 %v387
  %v1740 = vunpack.c.h.b16 %v387
  %v1741 = vunpack.c.l.b16 %v388
  %v1742 = vunpack.c.l.b16 %v389
  %v1743 = vunpack.c.h.b16 %v389
  %v1744 = vunpack.c.l.b16 %v390
  %v1745 = vunpack.c.h.b16 %v390
  %v1746 = vunpack.c.l.b16 %v391
  %v1747 = vunpack.c.h.b16 %v391
  %v1748 = vunpack.c.l.b16 %v392
  %v1749 = vunpack.c.l.b16 %v393
  %v1750 = vunpack.c.h.b16 %v393
  %v1751 = vunpack.c.l.b16 %v394
  %v1752 = vunpack.c.h.b16 %v394
  %v1753 = vunpack.c.l.b16 %v395
  %v1754 = vunpack.c.h.b16 %v395
  %v1755 = vunpack.c.l.b16 %v396
  %v1756 = vunpack.c.l.b16 %v397
  %v1757 = vunpack.c.h.b16 %v397
  %v1758 = vunpack.c.l.b16 %v398
  %v1759 = vunpack.c.h.b16 %v398
  %v1760 = vunpack.c.l.b16 %v399
  %v1761 = vunpack.c.h.b16 %v399
  %v1762 = vunpack.c.l.b16 %v400
  %v1763 = vunpack.c.l.b16 %v401
  %v1764 = vunpack.c.h.b16 %v401
  %v1765 = vunpack.c.l.b16 %v402
  %v1766 = vunpack.c.h.b16 %v402
  %v1767 = vunpack.c.l.b16 %v403
  %v1768 = vunpack.c.h.b16 %v403
  %v1769 = vunpack.c.l.b16 %v404
  %v1770 = vunpack.c.l.b16 %v405
  %v1771 = vunpack.c.h.b16 %v405
  %v1772 = vunpack.c.l.b16 %v406
  %v1773 = vunpack.c.h.b16 %v406
  %v1774 = vunpack.c.l.b16 %v407
  %v1775 = vunpack.c.h.b16 %v407
  %v1776 = vunpack.c.l.b16 %v408
  %v1777 = vunpack.c.l.b16 %v409
  %v1778 = vunpack.c.h.b16 %v409
  %v1779 = vunpack.c.l.b16 %v410
  %v1780 = vunpack.c.h.b16 %v410
  %v1781 = vunpack.c.l.b16 %v411
  %v1782 = vunpack.c.h.b16 %v411
  %v1783 = vunpack.c.l.b16 %v412
  %v1784 = vunpack.c.l.b16 %v413
  %v1785 = vunpack.c.h.b16 %v413
  %v1786 = vunpack.c.l.b16 %v414
  %v1787 = vunpack.c.h.b16 %v414
  %v1788 = vunpack.c.l.b16 %v415
  %v1789 = vunpack.c.h.b16 %v415
  %v1790 = vunpack.c.l.b16 %v416
  %v1791 = vunpack.c.l.b16 %v417
  %v1792 = vunpack.c.h.b16 %v417
  %v1793 = vunpack.c.l.b16 %v418
  %v1794 = vunpack.c.h.b16 %v418
  %v1795 = vunpack.c.l.b16 %v419
  %v1796 = vunpack.c.h.b16 %v419
  %v1797 = vunpack.c.l.b16 %v420
  %v1798 = vunpack.c.l.b16 %v421
  %v1799 = vunpack.c.h.b16 %v421
  %v1800 = vunpack.c.l.b16 %v422
  %v1801 = vunpack.c.h.b16 %v422
  %v1802 = vunpack.c.l.b16 %v423
  %v1803 = vunpack.c.h.b16 %v423
  %v1804 = vunpack.c.l.b16 %v424
  %v1805 = vunpack.c.l.b16 %v425
  %v1806 = vunpack.c.h.b16 %v425
  %v1807 = vunpack.c.l.b16 %v426
  %v1808 = vunpack.c.h.b16 %v426
  %v1809 = vunpack.c.l.b16 %v427
  %v1810 = vunpack.c.h.b16 %v427
  %v1811 = vunpack.c.l.b16 %v428
  %v1812 = vunpack.c.l.b16 %v429
  %v1813 = vunpack.c.h.b16 %v429
  %v1814 = vunpack.c.l.b16 %v430
  %v1815 = vunpack.c.h.b16 %v430
  %v1816 = vunpack.c.l.b16 %v431
  %v1817 = vunpack.c.h.b16 %v431
  %v1818 = vunpack.c.l.b16 %v432
  %v1819 = vunpack.c.l.b16 %v433
  %v1820 = vunpack.c.h.b16 %v433
  %v1821 = vunpack.c.l.b16 %v434
  %v1822 = vunpack.c.h.b16 %v434
  %v1823 = vunpack.c.l.b16 %v435
  %v1824 = vunpack.c.h.b16 %v435
  %v1825 = vunpack.c.l.b16 %v436
  %v1826 = vunpack.c.l.b16 %v437
  %v1827 = vunpack.c.h.b16 %v437
  %v1828 = vunpack.c.l.b16 %v438
  %v1829 = vunpack.c.h.b16 %v438
  %v1830 = vunpack.c.l.b16 %v439
  %v1831 = vunpack.c.h.b16 %v439
  %v1832 = vunpack.c.l.b16 %v440
  %v1833 = vunpack.c.l.b16 %v441
  %v1834 = vunpack.c.h.b16 %v441
  %v1835 = vunpack.c.l.b16 %v442
  %v1836 = vunpack.c.h.b16 %v442
  %v1837 = vunpack.c.l.b16 %v443
  %v1838 = vunpack.c.h.b16 %v443
  %v1839 = vunpack.c.l.b16 %v444
  %v1840 = vunpack.c.l.b16 %v445
  %v1841 = vunpack.c.h.b16 %v445
  %v1842 = vunpack.c.l.b16 %v446
  %v1843 = vunpack.c.h.b16 %v446
  %v1844 = vunpack.c.l.b16 %v447
  %v1845 = vunpack.c.h.b16 %v447
  %v1846 = vunpack.c.l.b16 %v448
  %v1847 = vunpack.c.l.b16 %v449
  %v1848 = vunpack.c.h.b16 %v449
  %v1849 = vunpack.c.l.b16 %v450
  %v1850 = vunpack.c.h.b16 %v450
  %v1851 = vunpack.c.l.b16 %v451
  %v1852 = vunpack.c.h.b16 %v451
  %v1853 = vunpack.c.l.b16 %v452
  %v1854 = vunpack.c.l.b16 %v453
  %v1855 = vunpack.c.h.b16 %v453
  %v1856 = vunpack.c.l.b16 %v454
  %v1857 = vunpack.c.h.b16 %v454
  %v1858 = vunpack.c.l.b16 %v455
  %v1859 = vunpack.c.h.b16 %v455
  %v1860 = vunpack.c.l.b16 %v456
  %v1861 = vunpack.c.l.b16 %v457
  %v1862 = vunpack.c.h.b16 %v457
  %v1863 = vunpack.c.l.b16 %v458
  %v1864 = vunpack.c.h.b16 %v458
  %v1865 = vunpack.c.l.b16 %v459
  %v1866 = vunpack.c.h.b16 %v459
  %v1867 = vunpack.c.l.b16 %v460
  %v1868 = vunpack.c.l.b16 %v461
  %v1869 = vunpack.c.h.b16 %v461
  %v1870 = vunpack.c.l.b16 %v462
  %v1871 = vunpack.c.h.b16 %v462
  %v1872 = vunpack.c.l.b16 %v463
  %v1873 = vunpack.c.h.b16 %v463
  %v1874 = vunpack.c.l.b16 %v464
  %v1875 = vunpack.c.l.b16 %v465
  %v1876 = vunpack.c.h.b16 %v465
  %v1877 = vunpack.c.l.b16 %v466
  %v1878 = vunpack.c.h.b16 %v466
  %v1879 = vunpack.c.l.b16 %v467
  %v1880 = vunpack.c.h.b16 %v467
  %v1881 = vunpack.c.l.b16 %v468
  %v1882 = vunpack.c.l.b16 %v469
  %v1883 = vunpack.c.h.b16 %v469
  %v1884 = vunpack.c.l.b16 %v470
  %v1885 = vunpack.c.h.b16 %v470
  %v1886 = vunpack.c.l.b16 %v471
  %v1887 = vunpack.c.h.b16 %v471
  %v1888 = vunpack.c.l.b16 %v472
  %v1889 = vunpack.c.l.b16 %v473
  %v1890 = vunpack.c.h.b16 %v473
  %v1891 = vunpack.c.l.b16 %v474
  %v1892 = vunpack.c.h.b16 %v474
  %v1893 = vunpack.c.l.b16 %v475
  %v1894 = vunpack.c.h.b16 %v475
  %v1895 = vunpack.c.l.b16 %v476
  %v1896 = vunpack.c.l.b16 %v477
  %v1897 = vunpack.c.h.b16 %v477
  %v1898 = vunpack.c.l.b16 %v478
  %v1899 = vunpack.c.h.b16 %v478
  %v1900 = vunpack.c.l.b16 %v479
  %v1901 = vunpack.c.h.b16 %v479
  %v1902 = vunpack.c.l.b16 %v480
  %v1903 = vunpack.c.l.b16 %v481
  %v1904 = vunpack.c.h.b16 %v481
  %v1905 = vunpack.c.l.b16 %v482
  %v1906 = vunpack.c.h.b16 %v482
  %v1907 = vunpack.c.l.b16 %v483
  %v1908 = vunpack.c.h.b16 %v483
  %v1909 = vunpack.c.l.b16 %v484
  %v1910 = vunpack.c.l.b16 %v485
  %v1911 = vunpack.c.h.b16 %v485
  %v1912 = vunpack.c.l.b16 %v486
  %v1913 = vunpack.c.h.b16 %v486
  %v1914 = vunpack.c.l.b16 %v487
  %v1915 = vunpack.c.h.b16 %v487
  %v1916 = vunpack.c.l.b16 %v488
  %v1917 = vunpack.c.l.b16 %v489
  %v1918 = vunpack.c.h.b16 %v489
  %v1919 = vunpack.c.l.b16 %v490
  %v1920 = vunpack.c.h.b16 %v490
  %v1921 = vunpack.c.l.b16 %v491
  %v1922 = vunpack.c.h.b16 %v491
  %v1923 = vunpack.c.l.b16 %v492
  %v1924 = vunpack.c.l.b16 %v493
  %v1925 = vunpack.c.h.b16 %v493
  %v1926 = vunpack.c.l.b16 %v494
  %v1927 = vunpack.c.h.b16 %v494
  %v1928 = vunpack.c.l.b16 %v495
  %v1929 = vunpack.c.h.b16 %v495
  %v1930 = vunpack.c.l.b16 %v496
  %v1931 = vunpack.c.l.b16 %v497
  %v1932 = vunpack.c.h.b16 %v497
  %v1933 = vunpack.c.l.b16 %v498
  %v1934 = vunpack.c.h.b16 %v498
  %v1935 = vunpack.c.l.b16 %v499
  %v1936 = vunpack.c.h.b16 %v499
  %v1937 = vunpack.c.l.b16 %v500
  %v1938 = vunpack.c.l.b16 %v501
  %v1939 = vunpack.c.h.b16 %v501
  %v1940 = vunpack.c.l.b16 %v502
  %v1941 = vunpack.c.h.b16 %v502
  %v1942 = vunpack.c.l.b16 %v503
  %v1943 = vunpack.c.h.b16 %v503
  %v1944 = vunpack.c.l.b16 %v504
  %v1945 = vunpack.c.l.b16 %v505
  %v1946 = vunpack.c.h.b16 %v505
  %v1947 = vunpack.c.l.b16 %v506
  %v1948 = vunpack.c.h.b16 %v506
  %v1949 = vunpack.c.l.b16 %v507
  %v1950 = vunpack.c.h.b16 %v507
  %v1951 = vunpack.c.l.b16 %v508
  %v1952 = vunpack.c.l.b16 %v509
  %v1953 = vunpack.c.h.b16 %v509
  %v1954 = vunpack.c.l.b16 %v510
  %v1955 = vunpack.c.h.b16 %v510
  %v1956 = vunpack.c.l.b16 %v511
  %v1957 = vunpack.c.h.b16 %v511
  %v1958 = vunpack.c.l.b16 %v512
  %v1959 = vunpack.c.l.b16 %v513
  %v1960 = vunpack.c.h.b16 %v513
  %v1961 = vunpack.c.l.b16 %v514
  %v1962 = vunpack.c.h.b16 %v514
  %v1963 = vunpack.c.l.b16 %v515
  %v1964 = vunpack.c.h.b16 %v515
  %v1965 = vunpack.c.l.b16 %v516
  %v1966 = vunpack.c.l.b16 %v517
  %v1967 = vunpack.c.h.b16 %v517
  %v1968 = vunpack.c.l.b16 %v518
  %v1969 = vunpack.c.h.b16 %v518
  %v1970 = vunpack.c.l.b16 %v519
  %v1971 = vunpack.c.h.b16 %v519
  %v1972 = vunpack.c.l.b16 %v520
  %v1973 = vunpack.c.l.b16 %v521
  %v1974 = vunpack.c.h.b16 %v521
  %v1975 = vunpack.c.l.b16 %v522
  %v1976 = vunpack.c.h.b16 %v522
  %v1977 = vunpack.c.l.b16 %v523
  %v1978 = vunpack.c.h.b16 %v523
  %v1979 = vunpack.c.l.b16 %v524
  %v1980 = vunpack.c.l.b16 %v525
  %v1981 = vunpack.c.h.b16 %v525
  %v1982 = vunpack.c.l.b16 %v526
  %v1983 = vunpack.c.h.b16 %v526
  %v1984 = vunpack.c.l.b16 %v527
  %v1985 = vunpack.c.h.b16 %v527
  %v1986 = vunpack.c.l.b16 %v528
  %v1987 = vunpack.c.l.b16 %v529
  %v1988 = vunpack.c.h.b16 %v529
  %v1989 = vunpack.c.l.b16 %v530
  %v1990 = vunpack.c.h.b16 %v530
  %v1991 = vunpack.c.l.b16 %v531
  %v1992 = vunpack.c.h.b16 %v531
  %v1993 = vunpack.c.l.b16 %v532
  %v1994 = vunpack.c.l.b16 %v533
  %v1995 = vunpack.c.h.b16 %v533
  %v1996 = vunpack.c.l.b16 %v534
  %v1997 = vunpack.c.h.b16 %v534
  %v1998 = vunpack.c.l.b16 %v535
  %v1999 = vunpack.c.h.b16 %v535
  %v2000 = vunpack.c.l.b16 %v536
  %v2001 = vunpack.c.l.b16 %v537
  %v2002 = vunpack.c.h.b16 %v537
  %v2003 = vunpack.c.l.b16 %v538
  %v2004 = vunpack.c.h.b16 %v538
  %v2005 = vunpack.c.l.b16 %v539
  %v2006 = vunpack.c.h.b16 %v539
  %v2007 = vunpack.c.l.b16 %v540
  %v2008 = vunpack.c.l.b16 %v541
  %v2009 = vunpack.c.h.b16 %v541
  %v2010 = vunpack.c.l.b16 %v542
  %v2011 = vunpack.c.h.b16 %v542
  %v2012 = vunpack.c.l.b16 %v543
  %v2013 = vunpack.c.h.b16 %v543
  %v2014 = vunpack.c.l.b16 %v544
  %v2015 = vunpack.c.l.b16 %v545
  %v2016 = vunpack.c.h.b16 %v545
  %v2017 = vunpack.c.l.b16 %v546
  %v2018 = vunpack.c.h.b16 %v546
  %v2019 = vunpack.c.l.b16 %v547
  %v2020 = vunpack.c.h.b16 %v547
  %v2021 = vunpack.c.l.b16 %v548
  %v2022 = vpack.c.b16 %v1133, %v1126
  %v2023 = vpack.c.b16 %v1134, %v1127
  %v2024 = vpack.c.b16 %v1135, %v1128
  %v2025 = vpack.c.b16 %v1136, %v1129
  %v2026 = vpack.c.b16 %v1137, %v1130
  %v2027 = vpack.c.b16 %v1138, %v1131
  %v2028 = vpack.c.b16 %v1139, %v1132
  %v2029 = vpack.c.b16 %v1147, %v1140
  %v2030 = vpack.c.b16 %v1148, %v1141
  %v2031 = vpack.c.b16 %v1149, %v1142
  %v2032 = vpack.c.b16 %v1150, %v1143
  %v2033 = vpack.c.b16 %v1151, %v1144
  %v2034 = vpack.c.b16 %v1152, %v1145
  %v2035 = vpack.c.b16 %v1153, %v1146
  %v2036 = vpack.c.b16 %v1161, %v1154
  %v2037 = vpack.c.b16 %v1162, %v1155
  %v2038 = vpack.c.b16 %v1163, %v1156
  %v2039 = vpack.c.b16 %v1164, %v1157
  %v2040 = vpack.c.b16 %v1165, %v1158
  %v2041 = vpack.c.b16 %v1166, %v1159
  %v2042 = vpack.c.b16 %v1167, %v1160
  %v2043 = vpack.c.b16 %v1175, %v1168
  %v2044 = vpack.c.b16 %v1176, %v1169
  %v2045 = vpack.c.b16 %v1177, %v1170
  %v2046 = vpack.c.b16 %v1178, %v1171
  %v2047 = vpack.c.b16 %v1179, %v1172
  %v2048 = vpack.c.b16 %v1180, %v1173
  %v2049 = vpack.c.b16 %v1181, %v1174
  %v2050 = vpack.c.b16 %v1189, %v1182
  %v2051 = vpack.c.b16 %v1190, %v1183
  %v2052 = vpack.c.b16 %v1191, %v1184
  %v2053 = vpack.c.b16 %v1192, %v1185
  %v2054 = vpack.c.b16 %v1193, %v1186
  %v2055 = vpack.c.b16 %v1194, %v1187
  %v2056 = vpack.c.b16 %v1195, %v1188
  %v2057 = vpack.c.b16 %v1203, %v1196
  %v2058 = vpack.c.b16 %v1204, %v1197
  %v2059 = vpack.c.b16 %v1205, %v1198
  %v2060 = vpack.c.b16 %v1206, %v1199
  %v2061 = vpack.c.b16 %v1207, %v1200
  %v2062 = vpack.c.b16 %v1208, %v1201
  %v2063 = vpack.c.b16 %v1209, %v1202
  %v2064 = vpack.c.b16 %v1217, %v1210
  %v2065 = vpack.c.b16 %v1218, %v1211
  %v2066 = vpack.c.b16 %v1219, %v1212
  %v2067 = vpack.c.b16 %v1220, %v1213
  %v2068 = vpack.c.b16 %v1221, %v1214
  %v2069 = vpack.c.b16 %v1222, %v1215
  %v2070 = vpack.c.b16 %v1223, %v1216
  %v2071 = vpack.c.b16 %v1231, %v1224
  %v2072 = vpack.c.b16 %v1232, %v1225
  %v2073 = vpack.c.b16 %v1233, %v1226
  %v2074 = vpack.c.b16 %v1234, %v1227
  %v2075 = vpack.c.b16 %v1235, %v1228
  %v2076 = vpack.c.b16 %v1236, %v1229
  %v2077 = vpack.c.b16 %v1237, %v1230
  %v2078 = vpack.c.b16 %v1245, %v1238
  %v2079 = vpack.c.b16 %v1246, %v1239
  %v2080 = vpack.c.b16 %v1247, %v1240
  %v2081 = vpack.c.b16 %v1248, %v1241
  %v2082 = vpack.c.b16 %v1249, %v1242
  %v2083 = vpack.c.b16 %v1250, %v1243
  %v2084 = vpack.c.b16 %v1251, %v1244
  %v2085 = vpack.c.b16 %v1259, %v1252
  %v2086 = vpack.c.b16 %v1260, %v1253
  %v2087 = vpack.c.b16 %v1261, %v1254
  %v2088 = vpack.c.b16 %v1262, %v1255
  %v2089 = vpack.c.b16 %v1263, %v1256
  %v2090 = vpack.c.b16 %v1264, %v1257
  %v2091 = vpack.c.b16 %v1265, %v1258
  %v2092 = vpack.c.b16 %v1273, %v1266
  %v2093 = vpack.c.b16 %v1274, %v1267
  %v2094 = vpack.c.b16 %v1275, %v1268
  %v2095 = vpack.c.b16 %v1276, %v1269
  %v2096 = vpack.c.b16 %v1277, %v1270
  %v2097 = vpack.c.b16 %v1278, %v1271
  %v2098 = vpack.c.b16 %v1279, %v1272
  %v2099 = vpack.c.b16 %v1287, %v1280
  %v2100 = vpack.c.b16 %v1288, %v1281
  %v2101 = vpack.c.b16 %v1289, %v1282
  %v2102 = vpack.c.b16 %v1290, %v1283
  %v2103 = vpack.c.b16 %v1291, %v1284
  %v2104 = vpack.c.b16 %v1292, %v1285
  %v2105 = vpack.c.b16 %v1293, %v1286
  %v2106 = vpack.c.b16 %v1301, %v1294
  %v2107 = vpack.c.b16 %v1302, %v1295
  %v2108 = vpack.c.b16 %v1303, %v1296
  %v2109 = vpack.c.b16 %v1304, %v1297
  %v2110 = vpack.c.b16 %v1305, %v1298
  %v2111 = vpack.c.b16 %v1306, %v1299
  %v2112 = vpack.c.b16 %v1307, %v1300
  %v2113 = vpack.c.b16 %v1315, %v1308
  %v2114 = vpack.c.b16 %v1316, %v1309
  %v2115 = vpack.c.b16 %v1317, %v1310
  %v2116 = vpack.c.b16 %v1318, %v1311
  %v2117 = vpack.c.b16 %v1319, %v1312
  %v2118 = vpack.c.b16 %v1320, %v1313
  %v2119 = vpack.c.b16 %v1321, %v1314
  %v2120 = vpack.c.b16 %v1329, %v1322
  %v2121 = vpack.c.b16 %v1330, %v1323
  %v2122 = vpack.c.b16 %v1331, %v1324
  %v2123 = vpack.c.b16 %v1332, %v1325
  %v2124 = vpack.c.b16 %v1333, %v1326
  %v2125 = vpack.c.b16 %v1334, %v1327
  %v2126 = vpack.c.b16 %v1335, %v1328
  %v2127 = vpack.c.b16 %v1343, %v1336
  %v2128 = vpack.c.b16 %v1344, %v1337
  %v2129 = vpack.c.b16 %v1345, %v1338
  %v2130 = vpack.c.b16 %v1346, %v1339
  %v2131 = vpack.c.b16 %v1347, %v1340
  %v2132 = vpack.c.b16 %v1348, %v1341
  %v2133 = vpack.c.b16 %v1349, %v1342
  %v2134 = vpack.c.b16 %v1357, %v1350
  %v2135 = vpack.c.b16 %v1358, %v1351
  %v2136 = vpack.c.b16 %v1359, %v1352
  %v2137 = vpack.c.b16 %v1360, %v1353
  %v2138 = vpack.c.b16 %v1361, %v1354
  %v2139 = vpack.c.b16 %v1362, %v1355
  %v2140 = vpack.c.b16 %v1363, %v1356
  %v2141 = vpack.c.b16 %v1371, %v1364
  %v2142 = vpack.c.b16 %v1372, %v1365
  %v2143 = vpack.c.b16 %v1373, %v1366
  %v2144 = vpack.c.b16 %v1374, %v1367
  %v2145 = vpack.c.b16 %v1375, %v1368
  %v2146 = vpack.c.b16 %v1376, %v1369
  %v2147 = vpack.c.b16 %v1377, %v1370
  %v2148 = vpack.c.b16 %v1385, %v1378
  %v2149 = vpack.c.b16 %v1386, %v1379
  %v2150 = vpack.c.b16 %v1387, %v1380
  %v2151 = vpack.c.b16 %v1388, %v1381
  %v2152 = vpack.c.b16 %v1389, %v1382
  %v2153 = vpack.c.b16 %v1390, %v1383
  %v2154 = vpack.c.b16 %v1391, %v1384
  %v2155 = vpack.c.b16 %v1399, %v1392
  %v2156 = vpack.c.b16 %v1400, %v1393
  %v2157 = vpack.c.b16 %v1401, %v1394
  %v2158 = vpack.c.b16 %v1402, %v1395
  %v2159 = vpack.c.b16 %v1403, %v1396
  %v2160 = vpack.c.b16 %v1404, %v1397
  %v2161 = vpack.c.b16 %v1405, %v1398
  %v2162 = vpack.c.b16 %v1413, %v1406
  %v2163 = vpack.c.b16 %v1414, %v1407
  %v2164 = vpack.c.b16 %v1415, %v1408
  %v2165 = vpack.c.b16 %v1416, %v1409
  %v2166 = vpack.c.b16 %v1417, %v1410
  %v2167 = vpack.c.b16 %v1418, %v1411
  %v2168 = vpack.c.b16 %v1419, %v1412
  %v2169 = vpack.c.b16 %v1427, %v1420
  %v2170 = vpack.c.b16 %v1428, %v1421
  %v2171 = vpack.c.b16 %v1429, %v1422
  %v2172 = vpack.c.b16 %v1430, %v1423
  %v2173 = vpack.c.b16 %v1431, %v1424
  %v2174 = vpack.c.b16 %v1432, %v1425
  %v2175 = vpack.c.b16 %v1433, %v1426
  %v2176 = vpack.c.b16 %v1441, %v1434
  %v2177 = vpack.c.b16 %v1442, %v1435
  %v2178 = vpack.c.b16 %v1443, %v1436
  %v2179 = vpack.c.b16 %v1444, %v1437
  %v2180 = vpack.c.b16 %v1445, %v1438
  %v2181 = vpack.c.b16 %v1446, %v1439
  %v2182 = vpack.c.b16 %v1447, %v1440
  %v2183 = vpack.c.b16 %v1455, %v1448
  %v2184 = vpack.c.b16 %v1456, %v1449
  %v2185 = vpack.c.b16 %v1457, %v1450
  %v2186 = vpack.c.b16 %v1458, %v1451
  %v2187 = vpack.c.b16 %v1459, %v1452
  %v2188 = vpack.c.b16 %v1460, %v1453
  %v2189 = vpack.c.b16 %v1461, %v1454
  %v2190 = vpack.c.b16 %v1469, %v1462
  %v2191 = vpack.c.b16 %v1470, %v1463
  %v2192 = vpack.c.b16 %v1471, %v1464
  %v2193 = vpack.c.b16 %v1472, %v1465
  %v2194 = vpack.c.b16 %v1473, %v1466
  %v2195 = vpack.c.b16 %v1474, %v1467
  %v2196 = vpack.c.b16 %v1475, %v1468
  %v2197 = vpack.c.b16 %v1483, %v1476
  %v2198 = vpack.c.b16 %v1484, %v1477
  %v2199 = vpack.c.b16 %v1485, %v1478
  %v2200 = vpack.c.b16 %v1486, %v1479
  %v2201 = vpack.c.b16 %v1487, %v1480
  %v2202 = vpack.c.b16 %v1488, %v1481
  %v2203 = vpack.c.b16 %v1489, %v1482
  %v2204 = vpack.c.b16 %v1497, %v1490
  %v2205 = vpack.c.b16 %v1498, %v1491
  %v2206 = vpack.c.b16 %v1499, %v1492
  %v2207 = vpack.c.b16 %v1500, %v1493
  %v2208 = vpack.c.b16 %v1501, %v1494
  %v2209 = vpack.c.b16 %v1502, %v1495
  %v2210 = vpack.c.b16 %v1503, %v1496
  %v2211 = vpack.c.b16 %v1511, %v1504
  %v2212 = vpack.c.b16 %v1512, %v1505
  %v2213 = vpack.c.b16 %v1513, %v1506
  %v2214 = vpack.c.b16 %v1514, %v1507
  %v2215 = vpack.c.b16 %v1515, %v1508
  %v2216 = vpack.c.b16 %v1516, %v1509
  %v2217 = vpack.c.b16 %v1517, %v1510
  %v2218 = vpack.c.b16 %v1525, %v1518
  %v2219 = vpack.c.b16 %v1526, %v1519
  %v2220 = vpack.c.b16 %v1527, %v1520
  %v2221 = vpack.c.b16 %v1528, %v1521
  %v2222 = vpack.c.b16 %v1529, %v1522
  %v2223 = vpack.c.b16 %v1530, %v1523
  %v2224 = vpack.c.b16 %v1531, %v1524
  %v2225 = vpack.c.b16 %v1539, %v1532
  %v2226 = vpack.c.b16 %v1540, %v1533
  %v2227 = vpack.c.b16 %v1541, %v1534
  %v2228 = vpack.c.b16 %v1542, %v1535
  %v2229 = vpack.c.b16 %v1543, %v1536
  %v2230 = vpack.c.b16 %v1544, %v1537
  %v2231 = vpack.c.b16 %v1545, %v1538
  %v2232 = vpack.c.b16 %v1553, %v1546
  %v2233 = vpack.c.b16 %v1554, %v1547
  %v2234 = vpack.c.b16 %v1555, %v1548
  %v2235 = vpack.c.b16 %v1556, %v1549
  %v2236 = vpack.c.b16 %v1557, %v1550
  %v2237 = vpack.c.b16 %v1558, %v1551
  %v2238 = vpack.c.b16 %v1559, %v1552
  %v2239 = vpack.c.b16 %v1567, %v1560
  %v2240 = vpack.c.b16 %v1568, %v1561
  %v2241 = vpack.c.b16 %v1569, %v1562
  %v2242 = vpack.c.b16 %v1570, %v1563
  %v2243 = vpack.c.b16 %v1571, %v1564
  %v2244 = vpack.c.b16 %v1572, %v1565
  %v2245 = vpack.c.b16 %v1573, %v1566
  %v2246 = vpack.c.b16 %v1581, %v1574
  %v2247 = vpack.c.b16 %v1582, %v1575
  %v2248 = vpack.c.b16 %v1583, %v1576
  %v2249 = vpack.c.b16 %v1584, %v1577
  %v2250 = vpack.c.b16 %v1585, %v1578
  %v2251 = vpack.c.b16 %v1586, %v1579
  %v2252 = vpack.c.b16 %v1587, %v1580
  %v2253 = vpack.c.b16 %v1595, %v1588
  %v2254 = vpack.c.b16 %v1596, %v1589
  %v2255 = vpack.c.b16 %v1597, %v1590
  %v2256 = vpack.c.b16 %v1598, %v1591
  %v2257 = vpack.c.b16 %v1599, %v1592
  %v2258 = vpack.c.b16 %v1600, %v1593
  %v2259 = vpack.c.b16 %v1601, %v1594
  %v2260 = vpack.c.b16 %v1609, %v1602
  %v2261 = vpack.c.b16 %v1610, %v1603
  %v2262 = vpack.c.b16 %v1611, %v1604
  %v2263 = vpack.c.b16 %v1612, %v1605
  %v2264 = vpack.c.b16 %v1613, %v1606
  %v2265 = vpack.c.b16 %v1614, %v1607
  %v2266 = vpack.c.b16 %v1615, %v1608
  %v2267 = vpack.c.b16 %v1623, %v1616
  %v2268 = vpack.c.b16 %v1624, %v1617
  %v2269 = vpack.c.b16 %v1625, %v1618
  %v2270 = vpack.c.b16 %v1626, %v1619
  %v2271 = vpack.c.b16 %v1627, %v1620
  %v2272 = vpack.c.b16 %v1628, %v1621
  %v2273 = vpack.c.b16 %v1629, %v1622
  %v2274 = vpack.c.b16 %v1637, %v1630
  %v2275 = vpack.c.b16 %v1638, %v1631
  %v2276 = vpack.c.b16 %v1639, %v1632
  %v2277 = vpack.c.b16 %v1640, %v1633
  %v2278 = vpack.c.b16 %v1641, %v1634
  %v2279 = vpack.c.b16 %v1642, %v1635
  %v2280 = vpack.c.b16 %v1643, %v1636
  %v2281 = vpack.c.b16 %v1651, %v1644
  %v2282 = vpack.c.b16 %v1652, %v1645
  %v2283 = vpack.c.b16 %v1653, %v1646
  %v2284 = vpack.c.b16 %v1654, %v1647
  %v2285 = vpack.c.b16 %v1655, %v1648
  %v2286 = vpack.c.b16 %v1656, %v1649
  %v2287 = vpack.c.b16 %v1657, %v1650
  %v2288 = vpack.c.b16 %v1665, %v1658
  %v2289 = vpack.c.b16 %v1666, %v1659
  %v2290 = vpack.c.b16 %v1667, %v1660
  %v2291 = vpack.c.b16 %v1668, %v1661
  %v2292 = vpack.c.b16 %v1669, %v1662
  %v2293 = vpack.c.b16 %v1670, %v1663
  %v2294 = vpack.c.b16 %v1671, %v1664
  %v2295 = vpack.c.b16 %v1679, %v1672
  %v2296 = vpack.c.b16 %v1680, %v1673
  %v2297 = vpack.c.b16 %v1681, %v1674
  %v2298 = vpack.c.b16 %v1682, %v1675
  %v2299 = vpack.c.b16 %v1683, %v1676
  %v2300 = vpack.c.b16 %v1684, %v1677
  %v2301 = vpack.c.b16 %v1685, %v1678
  %v2302 = vpack.c.b16 %v1693, %v1686
  %v2303 = vpack.c.b16 %v1694, %v1687
  %v2304 = vpack.c.b16 %v1695, %v1688
  %v2305 = vpack.c.b16 %v1696, %v1689
  %v2306 = vpack.c.b16 %v1697, %v1690
  %v2307 = vpack.c.b16 %v1698, %v1691
  %v2308 = vpack.c.b16 %v1699, %v1692
  %v2309 = vpack.c.b16 %v1707, %v1700
  %v2310 = vpack.c.b16 %v1708, %v1701
  %v2311 = vpack.c.b16 %v1709, %v1702
  %v2312 = vpack.c.b16 %v1710, %v1703
  %v2313 = vpack.c.b16 %v1711, %v1704
  %v2314 = vpack.c.b16 %v1712, %v1705
  %v2315 = vpack.c.b16 %v1713, %v1706
  %v2316 = vpack.c.b16 %v1721, %v1714
  %v2317 = vpack.c.b16 %v1722, %v1715
  %v2318 = vpack.c.b16 %v1723, %v1716
  %v2319 = vpack.c.b16 %v1724, %v1717
  %v2320 = vpack.c.b16 %v1725, %v1718
  %v2321 = vpack.c.b16 %v1726, %v1719
  %v2322 = vpack.c.b16 %v1727, %v1720
  %v2323 = vpack.c.b16 %v1735, %v1728
  %v2324 = vpack.c.b16 %v1736, %v1729
  %v2325 = vpack.c.b16 %v1737, %v1730
  %v2326 = vpack.c.b16 %v1738, %v1731
  %v2327 = vpack.c.b16 %v1739, %v1732
  %v2328 = vpack.c.b16 %v1740, %v1733
  %v2329 = vpack.c.b16 %v1741, %v1734
  %v2330 = vpack.c.b16 %v1749, %v1742
  %v2331 = vpack.c.b16 %v1750, %v1743
  %v2332 = vpack.c.b16 %v1751, %v1744
  %v2333 = vpack.c.b16 %v1752, %v1745
  %v2334 = vpack.c.b16 %v1753, %v1746
  %v2335 = vpack.c.b16 %v1754, %v1747
  %v2336 = vpack.c.b16 %v1755, %v1748
  %v2337 = vpack.c.b16 %v1763, %v1756
  %v2338 = vpack.c.b16 %v1764, %v1757
  %v2339 = vpack.c.b16 %v1765, %v1758
  %v2340 = vpack.c.b16 %v1766, %v1759
  %v2341 = vpack.c.b16 %v1767, %v1760
  %v2342 = vpack.c.b16 %v1768, %v1761
  %v2343 = vpack.c.b16 %v1769, %v1762
  %v2344 = vpack.c.b16 %v1777, %v1770
  %v2345 = vpack.c.b16 %v1778, %v1771
  %v2346 = vpack.c.b16 %v1779, %v1772
  %v2347 = vpack.c.b16 %v1780, %v1773
  %v2348 = vpack.c.b16 %v1781, %v1774
  %v2349 = vpack.c.b16 %v1782, %v1775
  %v2350 = vpack.c.b16 %v1783, %v1776
  %v2351 = vpack.c.b16 %v1791, %v1784
  %v2352 = vpack.c.b16 %v1792, %v1785
  %v2353 = vpack.c.b16 %v1793, %v1786
  %v2354 = vpack.c.b16 %v1794, %v1787
  %v2355 = vpack.c.b16 %v1795, %v1788
  %v2356 = vpack.c.b16 %v1796, %v1789
  %v2357 = vpack.c.b16 %v1797, %v1790
  %v2358 = vpack.c.b16 %v1805, %v1798
  %v2359 = vpack.c.b16 %v1806, %v1799
  %v2360 = vpack.c.b16 %v1807, %v1800
  %v2361 = vpack.c.b16 %v1808, %v1801
  %v2362 = vpack.c.b16 %v1809, %v1802
  %v2363 = vpack.c.b16 %v1810, %v1803
  %v2364 = vpack.c.b16 %v1811, %v1804
  %v2365 = vpack.c.b16 %v1819, %v1812
  %v2366 = vpack.c.b16 %v1820, %v1813
  %v2367 = vpack.c.b16 %v1821, %v1814
  %v2368 = vpack.c.b16 %v1822, %v1815
  %v2369 = vpack.c.b16 %v1823, %v1816
  %v2370 = vpack.c.b16 %v1824, %v1817
  %v2371 = vpack.c.b16 %v1825, %v1818
  %v2372 = vpack.c.b16 %v1833, %v1826
  %v2373 = vpack.c.b16 %v1834, %v1827
  %v2374 = vpack.c.b16 %v1835, %v1828
  %v2375 = vpack.c.b16 %v1836, %v1829
  %v2376 = vpack.c.b16 %v1837, %v1830
  %v2377 = vpack.c.b16 %v1838, %v1831
  %v2378 = vpack.c.b16 %v1839, %v1832
  %v2379 = vpack.c.b16 %v1847, %v1840
  %v2380 = vpack.c.b16 %v1848, %v1841
  %v2381 = vpack.c.b16 %v1849, %v1842
  %v2382 = vpack.c.b16 %v1850, %v1843
  %v2383 = vpack.c.b16 %v1851, %v1844
  %v2384 = vpack.c.b16 %v1852, %v1845
  %v2385 = vpack.c.b16 %v1853, %v1846
  %v2386 = vpack.c.b16 %v1861, %v1854
  %v2387 = vpack.c.b16 %v1862, %v1855
  %v2388 = vpack.c.b16 %v1863, %v1856
  %v2389 = vpack.c.b16 %v1864, %v1857
  %v2390 = vpack.c.b16 %v1865, %v1858
  %v2391 = vpack.c.b16 %v1866, %v1859
  %v2392 = vpack.c.b16 %v1867, %v1860
  %v2393 = vpack.c.b16 %v1875, %v1868
  %v2394 = vpack.c.b16 %v1876, %v1869
  %v2395 = vpack.c.b16 %v1877, %v1870
  %v2396 = vpack.c.b16 %v1878, %v1871
  %v2397 = vpack.c.b16 %v1879, %v1872
  %v2398 = vpack.c.b16 %v1880, %v1873
  %v2399 = vpack.c.b16 %v1881, %v1874
  %v2400 = vpack.c.b16 %v1889, %v1882
  %v2401 = vpack.c.b16 %v1890, %v1883
  %v2402 = vpack.c.b16 %v1891, %v1884
  %v2403 = vpack.c.b16 %v1892, %v1885
  %v2404 = vpack.c.b16 %v1893, %v1886
  %v2405 = vpack.c.b16 %v1894, %v1887
  %v2406 = vpack.c.b16 %v1895, %v1888
  %v2407 = vpack.c.b16 %v1903, %v1896
  %v2408 = vpack.c.b16 %v1904, %v1897
  %v2409 = vpack.c.b16 %v1905, %v1898
  %v2410 = vpack.c.b16 %v1906, %v1899
  %v2411 = vpack.c.b16 %v1907, %v1900
  %v2412 = vpack.c.b16 %v1908, %v1901
  %v2413 = vpack.c.b16 %v1909, %v1902
  %v2414 = vpack.c.b16 %v1917, %v1910
  %v2415 = vpack.c.b16 %v1918, %v1911
  %v2416 = vpack.c.b16 %v1919, %v1912
  %v2417 = vpack.c.b16 %v1920, %v1913
  %v2418 = vpack.c.b16 %v1921, %v1914
  %v2419 = vpack.c.b16 %v1922, %v1915
  %v2420 = vpack.c.b16 %v1923, %v1916
  %v2421 = vpack.c.b16 %v1931, %v1924
  %v2422 = vpack.c.b16 %v1932, %v1925
  %v2423 = vpack.c.b16 %v1933, %v1926
  %v2424 = vpack.c.b16 %v1934, %v1927
  %v2425 = vpack.c.b16 %v1935, %v1928
  %v2426 = vpack.c.b16 %v1936, %v1929
  %v2427 = vpack.c.b16 %v1937, %v1930
  %v2428 = vpack.c.b16 %v1945, %v1938
  %v2429 = vpack.c.b16 %v1946, %v1939
  %v2430 = vpack.c.b16 %v1947, %v1940
  %v2431 = vpack.c.b16 %v1948, %v1941
  %v2432 = vpack.c.b16 %v1949, %v1942
  %v2433 = vpack.c.b16 %v1950, %v1943
  %v2434 = vpack.c.b16 %v1951, %v1944
  %v2435 = vpack.c.b16 %v1959, %v1952
  %v2436 = vpack.c.b16 %v1960, %v1953
  %v2437 = vpack.c.b16 %v1961, %v1954
  %v2438 = vpack.c.b16 %v1962, %v1955
  %v2439 = vpack.c.b16 %v1963, %v1956
  %v2440 = vpack.c.b16 %v1964, %v1957
  %v2441 = vpack.c.b16 %v1965, %v1958
  %v2442 = vpack.c.b16 %v1973, %v1966
  %v2443 = vpack.c.b16 %v1974, %v1967
  %v2444 = vpack.c.b16 %v1975, %v1968
  %v2445 = vpack.c.b16 %v1976, %v1969
  %v2446 = vpack.c.b16 %v1977, %v1970
  %v2447 = vpack.c.b16 %v1978, %v1971
  %v2448 = vpack.c.b16 %v1979, %v1972
  %v2449 = vpack.c.b16 %v1987, %v1980
  %v2450 = vpack.c.b16 %v1988, %v1981
  %v2451 = vpack.c.b16 %v1989, %v1982
  %v2452 = vpack.c.b16 %v1990, %v1983
  %v2453 = vpack.c.b16 %v1991, %v1984
  %v2454 = vpack.c.b16 %v1992, %v1985
  %v2455 = vpack.c.b16 %v1993, %v1986
  %v2456 = vpack.c.b16 %v2001, %v1994
  %v2457 = vpack.c.b16 %v2002, %v1995
  %v2458 = vpack.c.b16 %v2003, %v1996
  %v2459 = vpack.c.b16 %v2004, %v1997
  %v2460 = vpack.c.b16 %v2005, %v1998
  %v2461 = vpack.c.b16 %v2006, %v1999
  %v2462 = vpack.c.b16 %v2007, %v2000
  %v2463 = vpack.c.b16 %v2015, %v2008
  %v2464 = vpack.c.b16 %v2016, %v2009
  %v2465 = vpack.c.b16 %v2017, %v2010
  %v2466 = vpack.c.b16 %v2018, %v2011
  %v2467 = vpack.c.b16 %v2019, %v2012
  %v2468 = vpack.c.b16 %v2020, %v2013
  %v2469 = vpack.c.b16 %v2021, %v2014
  %2918 = vmatprep.subr.bf16.mxu0 %v2023
  %2919 = vmatpush1.bf16.msra.mxu0 %v2022
  %2920 = vmatprep.subr.bf16.mxu0 %v2030
  %2921 = vmatpush1.bf16.msra.mxu0 %v2029
  %2922 = vmatprep.subr.bf16.mxu0 %v2037
  %2923 = vmatpush1.bf16.msra.mxu0 %v2036
  %2924 = vmatprep.subr.bf16.mxu0 %v2044
  %2925 = vmatpush1.bf16.msra.mxu0 %v2043
  %2926 = vmatprep.subr.bf16.mxu0 %v2051
  %2927 = vmatpush1.bf16.msra.mxu0 %v2050
  %2928 = vmatprep.subr.bf16.mxu0 %v2058
  %2929 = vmatpush1.bf16.msra.mxu0 %v2057
  %2930 = vmatprep.subr.bf16.mxu0 %v2065
  %2931 = vmatpush1.bf16.msra.mxu0 %v2064
  %2932 = vmatprep.subr.bf16.mxu0 %v2072
  %2933 = vmatpush1.bf16.msra.mxu0 %v2071
  %2934 = vmatprep.subr.bf16.mxu0 %v2079
  %2935 = vmatpush1.bf16.msra.mxu0 %v2078
  %2936 = vmatprep.subr.bf16.mxu0 %v2086
  %2937 = vmatpush1.bf16.msra.mxu0 %v2085
  %2938 = vmatprep.subr.bf16.mxu0 %v2093
  %2939 = vmatpush1.bf16.msra.mxu0 %v2092
  %2940 = vmatprep.subr.bf16.mxu0 %v2100
  %2941 = vmatpush1.bf16.msra.mxu0 %v2099
  %2942 = vmatprep.subr.bf16.mxu0 %v2107
  %2943 = vmatpush1.bf16.msra.mxu0 %v2106
  %2944 = vmatprep.subr.bf16.mxu0 %v2114
  %2945 = vmatpush1.bf16.msra.mxu0 %v2113
  %2946 = vmatprep.subr.bf16.mxu0 %v2121
  %2947 = vmatpush1.bf16.msra.mxu0 %v2120
  %2948 = vmatprep.subr.bf16.mxu0 %v2128
  %2949 = vmatpush1.bf16.msra.mxu0 %v2127
  %2950 = vmatprep.mubr.bf16.mxu0 %v599
  %2951 = vmatmul.mubr.bf16.gmra.mrb[0].mxu0 %v598
  %v2952 = vpop.f32.mrb[0].mxu0
  %v2953 = vadd.f32 %v554, %v2952
  %v2954 = vpop.f32.mrb[0].mxu0
  %v2955 = vadd.f32 %v558, %v2954
  %v2956 = vpop.f32.mrb[0].mxu0
  %v2957 = vpop.f32.mrb[0].mxu0
  %2958 = vdwg.mxu0
  %2959 = vmatprep.subr.bf16.mxu0 %v2135
  %2960 = vmatpush1.bf16.msra.mxu0 %v2134
  %2961 = vmatprep.subr.bf16.mxu0 %v2142
  %2962 = vmatpush1.bf16.msra.mxu0 %v2141
  %2963 = vmatprep.subr.bf16.mxu0 %v2149
  %2964 = vmatpush1.bf16.msra.mxu0 %v2148
  %2965 = vmatprep.subr.bf16.mxu0 %v2156
  %2966 = vmatpush1.bf16.msra.mxu0 %v2155
  %2967 = vmatprep.subr.bf16.mxu0 %v2163
  %2968 = vmatpush1.bf16.msra.mxu0 %v2162
  %2969 = vmatprep.subr.bf16.mxu0 %v2170
  %2970 = vmatpush1.bf16.msra.mxu0 %v2169
  %2971 = vmatprep.subr.bf16.mxu0 %v2177
  %2972 = vmatpush1.bf16.msra.mxu0 %v2176
  %2973 = vmatprep.subr.bf16.mxu0 %v2184
  %2974 = vmatpush1.bf16.msra.mxu0 %v2183
  %2975 = vmatprep.subr.bf16.mxu0 %v2191
  %2976 = vmatpush1.bf16.msra.mxu0 %v2190
  %2977 = vmatprep.subr.bf16.mxu0 %v2198
  %2978 = vmatpush1.bf16.msra.mxu0 %v2197
  %2979 = vmatprep.subr.bf16.mxu0 %v2205
  %2980 = vmatpush1.bf16.msra.mxu0 %v2204
  %2981 = vmatprep.subr.bf16.mxu0 %v2212
  %2982 = vmatpush1.bf16.msra.mxu0 %v2211
  %2983 = vmatprep.subr.bf16.mxu0 %v2219
  %2984 = vmatpush1.bf16.msra.mxu0 %v2218
  %2985 = vmatprep.subr.bf16.mxu0 %v2226
  %2986 = vmatpush1.bf16.msra.mxu0 %v2225
  %2987 = vmatprep.subr.bf16.mxu0 %v2233
  %2988 = vmatpush1.bf16.msra.mxu0 %v2232
  %2989 = vmatprep.subr.bf16.mxu0 %v2240
  %2990 = vmatpush1.bf16.msra.mxu0 %v2239
  %2991 = vmatprep.mubr.bf16.mxu0 %v601
  %2992 = vmatmul.mubr.bf16.gmra.mrb[0].mxu0 %v600
  %v2993 = vpop.f32.mrb[0].mxu0
  %v2994 = vadd.f32 %v2953, %v2993
  %v2995 = vpop.f32.mrb[0].mxu0
  %v2996 = vadd.f32 %v2955, %v2995
  %v2997 = vpop.f32.mrb[0].mxu0
  %v2998 = vpop.f32.mrb[0].mxu0
  %2999 = vdwg.mxu0
  %3000 = vmatprep.subr.bf16.mxu0 %v2247
  %3001 = vmatpush1.bf16.msra.mxu0 %v2246
  %3002 = vmatprep.subr.bf16.mxu0 %v2254
  %3003 = vmatpush1.bf16.msra.mxu0 %v2253
  %3004 = vmatprep.subr.bf16.mxu0 %v2261
  %3005 = vmatpush1.bf16.msra.mxu0 %v2260
  %3006 = vmatprep.subr.bf16.mxu0 %v2268
  %3007 = vmatpush1.bf16.msra.mxu0 %v2267
  %3008 = vmatprep.subr.bf16.mxu0 %v2275
  %3009 = vmatpush1.bf16.msra.mxu0 %v2274
  %3010 = vmatprep.subr.bf16.mxu0 %v2282
  %3011 = vmatpush1.bf16.msra.mxu0 %v2281
  %3012 = vmatprep.subr.bf16.mxu0 %v2289
  %3013 = vmatpush1.bf16.msra.mxu0 %v2288
  %3014 = vmatprep.subr.bf16.mxu0 %v2296
  %3015 = vmatpush1.bf16.msra.mxu0 %v2295
  %3016 = vmatprep.subr.bf16.mxu0 %v2303
  %3017 = vmatpush1.bf16.msra.mxu0 %v2302
  %3018 = vmatprep.subr.bf16.mxu0 %v2310
  %3019 = vmatpush1.bf16.msra.mxu0 %v2309
  %3020 = vmatprep.subr.bf16.mxu0 %v2317
  %3021 = vmatpush1.bf16.msra.mxu0 %v2316
  %3022 = vmatprep.subr.bf16.mxu0 %v2324
  %3023 = vmatpush1.bf16.msra.mxu0 %v2323
  %3024 = vmatprep.subr.bf16.mxu0 %v2331
  %3025 = vmatpush1.bf16.msra.mxu0 %v2330
  %3026 = vmatprep.subr.bf16.mxu0 %v2338
  %3027 = vmatpush1.bf16.msra.mxu0 %v2337
  %3028 = vmatprep.subr.bf16.mxu0 %v2345
  %3029 = vmatpush1.bf16.msra.mxu0 %v2344
  %3030 = vmatprep.subr.bf16.mxu0 %v2352
  %3031 = vmatpush1.bf16.msra.mxu0 %v2351
  %3032 = vmatprep.mubr.bf16.mxu0 %v603
  %3033 = vmatmul.mubr.bf16.gmra.mrb[0].mxu0 %v602
  %v3034 = vpop.f32.mrb[0].mxu0
  %v3035 = vadd.f32 %v2994, %v3034
  %v3036 = vpop.f32.mrb[0].mxu0
  %v3037 = vadd.f32 %v2996, %v3036
  %v3038 = vpop.f32.mrb[0].mxu0
  %v3039 = vpop.f32.mrb[0].mxu0
  %3040 = vdwg.mxu0
  %3041 = vmatprep.subr.bf16.mxu0 %v2359
  %3042 = vmatpush1.bf16.msra.mxu0 %v2358
  %3043 = vmatprep.subr.bf16.mxu0 %v2366
  %3044 = vmatpush1.bf16.msra.mxu0 %v2365
  %3045 = vmatprep.subr.bf16.mxu0 %v2373
  %3046 = vmatpush1.bf16.msra.mxu0 %v2372
  %3047 = vmatprep.subr.bf16.mxu0 %v2380
  %3048 = vmatpush1.bf16.msra.mxu0 %v2379
  %3049 = vmatprep.subr.bf16.mxu0 %v2387
  %3050 = vmatpush1.bf16.msra.mxu0 %v2386
  %3051 = vmatprep.subr.bf16.mxu0 %v2394
  %3052 = vmatpush1.bf16.msra.mxu0 %v2393
  %3053 = vmatprep.subr.bf16.mxu0 %v2401
  %3054 = vmatpush1.bf16.msra.mxu0 %v2400
  %3055 = vmatprep.subr.bf16.mxu0 %v2408
  %3056 = vmatpush1.bf16.msra.mxu0 %v2407
  %3057 = vmatprep.subr.bf16.mxu0 %v2415
  %3058 = vmatpush1.bf16.msra.mxu0 %v2414
  %3059 = vmatprep.subr.bf16.mxu0 %v2422
  %3060 = vmatpush1.bf16.msra.mxu0 %v2421
  %3061 = vmatprep.subr.bf16.mxu0 %v2429
  %3062 = vmatpush1.bf16.msra.mxu0 %v2428
  %3063 = vmatprep.subr.bf16.mxu0 %v2436
  %3064 = vmatpush1.bf16.msra.mxu0 %v2435
  %3065 = vmatprep.subr.bf16.mxu0 %v2443
  %3066 = vmatpush1.bf16.msra.mxu0 %v2442
  %3067 = vmatprep.subr.bf16.mxu0 %v2450
  %3068 = vmatpush1.bf16.msra.mxu0 %v2449
  %3069 = vmatprep.subr.bf16.mxu0 %v2457
  %3070 = vmatpush1.bf16.msra.mxu0 %v2456
  %3071 = vmatprep.subr.bf16.mxu0 %v2464
  %3072 = vmatpush1.bf16.msra.mxu0 %v2463
  %3073 = vmatprep.mubr.bf16.mxu0 %v605
  %3074 = vmatmul.mubr.bf16.gmra.mrb[0].mxu0 %v604
  %v3075 = vpop.f32.mrb[0].mxu0
  %v3076 = vadd.f32 %v3035, %v3075
  %v3077 = vpop.f32.mrb[0].mxu0
  %v3078 = vadd.f32 %v3037, %v3077
  %v3079 = vpop.f32.mrb[0].mxu0
  %v3080 = vpop.f32.mrb[0].mxu0
  %3081 = vdwg.mxu0
  %3082 = vmatprep.subr.bf16.mxu0 %v2025
  %3083 = vmatpush1.bf16.msra.mxu0 %v2024
  %3084 = vmatprep.subr.bf16.mxu0 %v2032
  %3085 = vmatpush1.bf16.msra.mxu0 %v2031
  %3086 = vmatprep.subr.bf16.mxu0 %v2039
  %3087 = vmatpush1.bf16.msra.mxu0 %v2038
  %3088 = vmatprep.subr.bf16.mxu0 %v2046
  %3089 = vmatpush1.bf16.msra.mxu0 %v2045
  %3090 = vmatprep.subr.bf16.mxu0 %v2053
  %3091 = vmatpush1.bf16.msra.mxu0 %v2052
  %3092 = vmatprep.subr.bf16.mxu0 %v2060
  %3093 = vmatpush1.bf16.msra.mxu0 %v2059
  %3094 = vmatprep.subr.bf16.mxu0 %v2067
  %3095 = vmatpush1.bf16.msra.mxu0 %v2066
  %3096 = vmatprep.subr.bf16.mxu0 %v2074
  %3097 = vmatpush1.bf16.msra.mxu0 %v2073
  %3098 = vmatprep.subr.bf16.mxu0 %v2081
  %3099 = vmatpush1.bf16.msra.mxu0 %v2080
  %3100 = vmatprep.subr.bf16.mxu0 %v2088
  %3101 = vmatpush1.bf16.msra.mxu0 %v2087
  %3102 = vmatprep.subr.bf16.mxu0 %v2095
  %3103 = vmatpush1.bf16.msra.mxu0 %v2094
  %3104 = vmatprep.subr.bf16.mxu0 %v2102
  %3105 = vmatpush1.bf16.msra.mxu0 %v2101
  %3106 = vmatprep.subr.bf16.mxu0 %v2109
  %3107 = vmatpush1.bf16.msra.mxu0 %v2108
  %3108 = vmatprep.subr.bf16.mxu0 %v2116
  %3109 = vmatpush1.bf16.msra.mxu0 %v2115
  %3110 = vmatprep.subr.bf16.mxu0 %v2123
  %3111 = vmatpush1.bf16.msra.mxu0 %v2122
  %3112 = vmatprep.subr.bf16.mxu0 %v2130
  %3113 = vmatpush1.bf16.msra.mxu0 %v2129
  %3114 = vmatprep.mubr.bf16.mxu0 %v599
  %3115 = vmatmul.mubr.bf16.gmra.mrb[0].mxu0 %v598
  %v3116 = vpop.f32.mrb[0].mxu0
  %v3117 = vadd.f32 %v562, %v3116
  %v3118 = vpop.f32.mrb[0].mxu0
  %v3119 = vadd.f32 %v566, %v3118
  %v3120 = vpop.f32.mrb[0].mxu0
  %v3121 = vpop.f32.mrb[0].mxu0
  %3122 = vdwg.mxu0
  %3123 = vmatprep.subr.bf16.mxu0 %v2137
  %3124 = vmatpush1.bf16.msra.mxu0 %v2136
  %3125 = vmatprep.subr.bf16.mxu0 %v2144
  %3126 = vmatpush1.bf16.msra.mxu0 %v2143
  %3127 = vmatprep.subr.bf16.mxu0 %v2151
  %3128 = vmatpush1.bf16.msra.mxu0 %v2150
  %3129 = vmatprep.subr.bf16.mxu0 %v2158
  %3130 = vmatpush1.bf16.msra.mxu0 %v2157
  %3131 = vmatprep.subr.bf16.mxu0 %v2165
  %3132 = vmatpush1.bf16.msra.mxu0 %v2164
  %3133 = vmatprep.subr.bf16.mxu0 %v2172
  %3134 = vmatpush1.bf16.msra.mxu0 %v2171
  %3135 = vmatprep.subr.bf16.mxu0 %v2179
  %3136 = vmatpush1.bf16.msra.mxu0 %v2178
  %3137 = vmatprep.subr.bf16.mxu0 %v2186
  %3138 = vmatpush1.bf16.msra.mxu0 %v2185
  %3139 = vmatprep.subr.bf16.mxu0 %v2193
  %3140 = vmatpush1.bf16.msra.mxu0 %v2192
  %3141 = vmatprep.subr.bf16.mxu0 %v2200
  %3142 = vmatpush1.bf16.msra.mxu0 %v2199
  %3143 = vmatprep.subr.bf16.mxu0 %v2207
  %3144 = vmatpush1.bf16.msra.mxu0 %v2206
  %3145 = vmatprep.subr.bf16.mxu0 %v2214
  %3146 = vmatpush1.bf16.msra.mxu0 %v2213
  %3147 = vmatprep.subr.bf16.mxu0 %v2221
  %3148 = vmatpush1.bf16.msra.mxu0 %v2220
  %3149 = vmatprep.subr.bf16.mxu0 %v2228
  %3150 = vmatpush1.bf16.msra.mxu0 %v2227
  %3151 = vmatprep.subr.bf16.mxu0 %v2235
  %3152 = vmatpush1.bf16.msra.mxu0 %v2234
  %3153 = vmatprep.subr.bf16.mxu0 %v2242
  %3154 = vmatpush1.bf16.msra.mxu0 %v2241
  %3155 = vmatprep.mubr.bf16.mxu0 %v601
  %3156 = vmatmul.mubr.bf16.gmra.mrb[0].mxu0 %v600
  %v3157 = vpop.f32.mrb[0].mxu0
  %v3158 = vadd.f32 %v3117, %v3157
  %v3159 = vpop.f32.mrb[0].mxu0
  %v3160 = vadd.f32 %v3119, %v3159
  %v3161 = vpop.f32.mrb[0].mxu0
  %v3162 = vpop.f32.mrb[0].mxu0
  %3163 = vdwg.mxu0
  %3164 = vmatprep.subr.bf16.mxu0 %v2249
  %3165 = vmatpush1.bf16.msra.mxu0 %v2248
  %3166 = vmatprep.subr.bf16.mxu0 %v2256
  %3167 = vmatpush1.bf16.msra.mxu0 %v2255
  %3168 = vmatprep.subr.bf16.mxu0 %v2263
  %3169 = vmatpush1.bf16.msra.mxu0 %v2262
  %3170 = vmatprep.subr.bf16.mxu0 %v2270
  %3171 = vmatpush1.bf16.msra.mxu0 %v2269
  %3172 = vmatprep.subr.bf16.mxu0 %v2277
  %3173 = vmatpush1.bf16.msra.mxu0 %v2276
  %3174 = vmatprep.subr.bf16.mxu0 %v2284
  %3175 = vmatpush1.bf16.msra.mxu0 %v2283
  %3176 = vmatprep.subr.bf16.mxu0 %v2291
  %3177 = vmatpush1.bf16.msra.mxu0 %v2290
  %3178 = vmatprep.subr.bf16.mxu0 %v2298
  %3179 = vmatpush1.bf16.msra.mxu0 %v2297
  %3180 = vmatprep.subr.bf16.mxu0 %v2305
  %3181 = vmatpush1.bf16.msra.mxu0 %v2304
  %3182 = vmatprep.subr.bf16.mxu0 %v2312
  %3183 = vmatpush1.bf16.msra.mxu0 %v2311
  %3184 = vmatprep.subr.bf16.mxu0 %v2319
  %3185 = vmatpush1.bf16.msra.mxu0 %v2318
  %3186 = vmatprep.subr.bf16.mxu0 %v2326
  %3187 = vmatpush1.bf16.msra.mxu0 %v2325
  %3188 = vmatprep.subr.bf16.mxu0 %v2333
  %3189 = vmatpush1.bf16.msra.mxu0 %v2332
  %3190 = vmatprep.subr.bf16.mxu0 %v2340
  %3191 = vmatpush1.bf16.msra.mxu0 %v2339
  %3192 = vmatprep.subr.bf16.mxu0 %v2347
  %3193 = vmatpush1.bf16.msra.mxu0 %v2346
  %3194 = vmatprep.subr.bf16.mxu0 %v2354
  %3195 = vmatpush1.bf16.msra.mxu0 %v2353
  %3196 = vmatprep.mubr.bf16.mxu0 %v603
  %3197 = vmatmul.mubr.bf16.gmra.mrb[0].mxu0 %v602
  %v3198 = vpop.f32.mrb[0].mxu0
  %v3199 = vadd.f32 %v3158, %v3198
  %v3200 = vpop.f32.mrb[0].mxu0
  %v3201 = vadd.f32 %v3160, %v3200
  %v3202 = vpop.f32.mrb[0].mxu0
  %v3203 = vpop.f32.mrb[0].mxu0
  %3204 = vdwg.mxu0
  %3205 = vmatprep.subr.bf16.mxu0 %v2361
  %3206 = vmatpush1.bf16.msra.mxu0 %v2360
  %3207 = vmatprep.subr.bf16.mxu0 %v2368
  %3208 = vmatpush1.bf16.msra.mxu0 %v2367
  %3209 = vmatprep.subr.bf16.mxu0 %v2375
  %3210 = vmatpush1.bf16.msra.mxu0 %v2374
  %3211 = vmatprep.subr.bf16.mxu0 %v2382
  %3212 = vmatpush1.bf16.msra.mxu0 %v2381
  %3213 = vmatprep.subr.bf16.mxu0 %v2389
  %3214 = vmatpush1.bf16.msra.mxu0 %v2388
  %3215 = vmatprep.subr.bf16.mxu0 %v2396
  %3216 = vmatpush1.bf16.msra.mxu0 %v2395
  %3217 = vmatprep.subr.bf16.mxu0 %v2403
  %3218 = vmatpush1.bf16.msra.mxu0 %v2402
  %3219 = vmatprep.subr.bf16.mxu0 %v2410
  %3220 = vmatpush1.bf16.msra.mxu0 %v2409
  %3221 = vmatprep.subr.bf16.mxu0 %v2417
  %3222 = vmatpush1.bf16.msra.mxu0 %v2416
  %3223 = vmatprep.subr.bf16.mxu0 %v2424
  %3224 = vmatpush1.bf16.msra.mxu0 %v2423
  %3225 = vmatprep.subr.bf16.mxu0 %v2431
  %3226 = vmatpush1.bf16.msra.mxu0 %v2430
  %3227 = vmatprep.subr.bf16.mxu0 %v2438
  %3228 = vmatpush1.bf16.msra.mxu0 %v2437
  %3229 = vmatprep.subr.bf16.mxu0 %v2445
  %3230 = vmatpush1.bf16.msra.mxu0 %v2444
  %3231 = vmatprep.subr.bf16.mxu0 %v2452
  %3232 = vmatpush1.bf16.msra.mxu0 %v2451
  %3233 = vmatprep.subr.bf16.mxu0 %v2459
  %3234 = vmatpush1.bf16.msra.mxu0 %v2458
  %3235 = vmatprep.subr.bf16.mxu0 %v2466
  %3236 = vmatpush1.bf16.msra.mxu0 %v2465
  %3237 = vmatprep.mubr.bf16.mxu0 %v605
  %3238 = vmatmul.mubr.bf16.gmra.mrb[0].mxu0 %v604
  %v3239 = vpop.f32.mrb[0].mxu0
  %v3240 = vadd.f32 %v3199, %v3239
  %v3241 = vpop.f32.mrb[0].mxu0
  %v3242 = vadd.f32 %v3201, %v3241
  %v3243 = vpop.f32.mrb[0].mxu0
  %v3244 = vpop.f32.mrb[0].mxu0
  %3245 = vdwg.mxu0
  %3246 = vmatprep.subr.bf16.mxu0 %v2027
  %3247 = vmatpush1.bf16.msra.mxu0 %v2026
  %3248 = vmatprep.subr.bf16.mxu0 %v2034
  %3249 = vmatpush1.bf16.msra.mxu0 %v2033
  %3250 = vmatprep.subr.bf16.mxu0 %v2041
  %3251 = vmatpush1.bf16.msra.mxu0 %v2040
  %3252 = vmatprep.subr.bf16.mxu0 %v2048
  %3253 = vmatpush1.bf16.msra.mxu0 %v2047
  %3254 = vmatprep.subr.bf16.mxu0 %v2055
  %3255 = vmatpush1.bf16.msra.mxu0 %v2054
  %3256 = vmatprep.subr.bf16.mxu0 %v2062
  %3257 = vmatpush1.bf16.msra.mxu0 %v2061
  %3258 = vmatprep.subr.bf16.mxu0 %v2069
  %3259 = vmatpush1.bf16.msra.mxu0 %v2068
  %3260 = vmatprep.subr.bf16.mxu0 %v2076
  %3261 = vmatpush1.bf16.msra.mxu0 %v2075
  %3262 = vmatprep.subr.bf16.mxu0 %v2083
  %3263 = vmatpush1.bf16.msra.mxu0 %v2082
  %3264 = vmatprep.subr.bf16.mxu0 %v2090
  %3265 = vmatpush1.bf16.msra.mxu0 %v2089
  %3266 = vmatprep.subr.bf16.mxu0 %v2097
  %3267 = vmatpush1.bf16.msra.mxu0 %v2096
  %3268 = vmatprep.subr.bf16.mxu0 %v2104
  %3269 = vmatpush1.bf16.msra.mxu0 %v2103
  %3270 = vmatprep.subr.bf16.mxu0 %v2111
  %3271 = vmatpush1.bf16.msra.mxu0 %v2110
  %3272 = vmatprep.subr.bf16.mxu0 %v2118
  %3273 = vmatpush1.bf16.msra.mxu0 %v2117
  %3274 = vmatprep.subr.bf16.mxu0 %v2125
  %3275 = vmatpush1.bf16.msra.mxu0 %v2124
  %3276 = vmatprep.subr.bf16.mxu0 %v2132
  %3277 = vmatpush1.bf16.msra.mxu0 %v2131
  %3278 = vmatprep.mubr.bf16.mxu0 %v599
  %3279 = vmatmul.mubr.bf16.gmra.mrb[0].mxu0 %v598
  %v3280 = vpop.f32.mrb[0].mxu0
  %v3281 = vadd.f32 %v570, %v3280
  %v3282 = vpop.f32.mrb[0].mxu0
  %v3283 = vadd.f32 %v574, %v3282
  %v3284 = vpop.f32.mrb[0].mxu0
  %v3285 = vpop.f32.mrb[0].mxu0
  %3286 = vdwg.mxu0
  %3287 = vmatprep.subr.bf16.mxu0 %v2139
  %3288 = vmatpush1.bf16.msra.mxu0 %v2138
  %3289 = vmatprep.subr.bf16.mxu0 %v2146
  %3290 = vmatpush1.bf16.msra.mxu0 %v2145
  %3291 = vmatprep.subr.bf16.mxu0 %v2153
  %3292 = vmatpush1.bf16.msra.mxu0 %v2152
  %3293 = vmatprep.subr.bf16.mxu0 %v2160
  %3294 = vmatpush1.bf16.msra.mxu0 %v2159
  %3295 = vmatprep.subr.bf16.mxu0 %v2167
  %3296 = vmatpush1.bf16.msra.mxu0 %v2166
  %3297 = vmatprep.subr.bf16.mxu0 %v2174
  %3298 = vmatpush1.bf16.msra.mxu0 %v2173
  %3299 = vmatprep.subr.bf16.mxu0 %v2181
  %3300 = vmatpush1.bf16.msra.mxu0 %v2180
  %3301 = vmatprep.subr.bf16.mxu0 %v2188
  %3302 = vmatpush1.bf16.msra.mxu0 %v2187
  %3303 = vmatprep.subr.bf16.mxu0 %v2195
  %3304 = vmatpush1.bf16.msra.mxu0 %v2194
  %3305 = vmatprep.subr.bf16.mxu0 %v2202
  %3306 = vmatpush1.bf16.msra.mxu0 %v2201
  %3307 = vmatprep.subr.bf16.mxu0 %v2209
  %3308 = vmatpush1.bf16.msra.mxu0 %v2208
  %3309 = vmatprep.subr.bf16.mxu0 %v2216
  %3310 = vmatpush1.bf16.msra.mxu0 %v2215
  %3311 = vmatprep.subr.bf16.mxu0 %v2223
  %3312 = vmatpush1.bf16.msra.mxu0 %v2222
  %3313 = vmatprep.subr.bf16.mxu0 %v2230
  %3314 = vmatpush1.bf16.msra.mxu0 %v2229
  %3315 = vmatprep.subr.bf16.mxu0 %v2237
  %3316 = vmatpush1.bf16.msra.mxu0 %v2236
  %3317 = vmatprep.subr.bf16.mxu0 %v2244
  %3318 = vmatpush1.bf16.msra.mxu0 %v2243
  %3319 = vmatprep.mubr.bf16.mxu0 %v601
  %3320 = vmatmul.mubr.bf16.gmra.mrb[0].mxu0 %v600
  %v3321 = vpop.f32.mrb[0].mxu0
  %v3322 = vadd.f32 %v3281, %v3321
  %v3323 = vpop.f32.mrb[0].mxu0
  %v3324 = vadd.f32 %v3283, %v3323
  %v3325 = vpop.f32.mrb[0].mxu0
  %v3326 = vpop.f32.mrb[0].mxu0
  %3327 = vdwg.mxu0
  %3328 = vmatprep.subr.bf16.mxu0 %v2251
  %3329 = vmatpush1.bf16.msra.mxu0 %v2250
  %3330 = vmatprep.subr.bf16.mxu0 %v2258
  %3331 = vmatpush1.bf16.msra.mxu0 %v2257
  %3332 = vmatprep.subr.bf16.mxu0 %v2265
  %3333 = vmatpush1.bf16.msra.mxu0 %v2264
  %3334 = vmatprep.subr.bf16.mxu0 %v2272
  %3335 = vmatpush1.bf16.msra.mxu0 %v2271
  %3336 = vmatprep.subr.bf16.mxu0 %v2279
  %3337 = vmatpush1.bf16.msra.mxu0 %v2278
  %3338 = vmatprep.subr.bf16.mxu0 %v2286
  %3339 = vmatpush1.bf16.msra.mxu0 %v2285
  %3340 = vmatprep.subr.bf16.mxu0 %v2293
  %3341 = vmatpush1.bf16.msra.mxu0 %v2292
  %3342 = vmatprep.subr.bf16.mxu0 %v2300
  %3343 = vmatpush1.bf16.msra.mxu0 %v2299
  %3344 = vmatprep.subr.bf16.mxu0 %v2307
  %3345 = vmatpush1.bf16.msra.mxu0 %v2306
  %3346 = vmatprep.subr.bf16.mxu0 %v2314
  %3347 = vmatpush1.bf16.msra.mxu0 %v2313
  %3348 = vmatprep.subr.bf16.mxu0 %v2321
  %3349 = vmatpush1.bf16.msra.mxu0 %v2320
  %3350 = vmatprep.subr.bf16.mxu0 %v2328
  %3351 = vmatpush1.bf16.msra.mxu0 %v2327
  %3352 = vmatprep.subr.bf16.mxu0 %v2335
  %3353 = vmatpush1.bf16.msra.mxu0 %v2334
  %3354 = vmatprep.subr.bf16.mxu0 %v2342
  %3355 = vmatpush1.bf16.msra.mxu0 %v2341
  %3356 = vmatprep.subr.bf16.mxu0 %v2349
  %3357 = vmatpush1.bf16.msra.mxu0 %v2348
  %3358 = vmatprep.subr.bf16.mxu0 %v2356
  %3359 = vmatpush1.bf16.msra.mxu0 %v2355
  %3360 = vmatprep.mubr.bf16.mxu0 %v603
  %3361 = vmatmul.mubr.bf16.gmra.mrb[0].mxu0 %v602
  %v3362 = vpop.f32.mrb[0].mxu0
  %v3363 = vadd.f32 %v3322, %v3362
  %v3364 = vpop.f32.mrb[0].mxu0
  %v3365 = vadd.f32 %v3324, %v3364
  %v3366 = vpop.f32.mrb[0].mxu0
  %v3367 = vpop.f32.mrb[0].mxu0
  %3368 = vdwg.mxu0
  %3369 = vmatprep.subr.bf16.mxu0 %v2363
  %3370 = vmatpush1.bf16.msra.mxu0 %v2362
  %3371 = vmatprep.subr.bf16.mxu0 %v2370
  %3372 = vmatpush1.bf16.msra.mxu0 %v2369
  %3373 = vmatprep.subr.bf16.mxu0 %v2377
  %3374 = vmatpush1.bf16.msra.mxu0 %v2376
  %3375 = vmatprep.subr.bf16.mxu0 %v2384
  %3376 = vmatpush1.bf16.msra.mxu0 %v2383
  %3377 = vmatprep.subr.bf16.mxu0 %v2391
  %3378 = vmatpush1.bf16.msra.mxu0 %v2390
  %3379 = vmatprep.subr.bf16.mxu0 %v2398
  %3380 = vmatpush1.bf16.msra.mxu0 %v2397
  %3381 = vmatprep.subr.bf16.mxu0 %v2405
  %3382 = vmatpush1.bf16.msra.mxu0 %v2404
  %3383 = vmatprep.subr.bf16.mxu0 %v2412
  %3384 = vmatpush1.bf16.msra.mxu0 %v2411
  %3385 = vmatprep.subr.bf16.mxu0 %v2419
  %3386 = vmatpush1.bf16.msra.mxu0 %v2418
  %3387 = vmatprep.subr.bf16.mxu0 %v2426
  %3388 = vmatpush1.bf16.msra.mxu0 %v2425
  %3389 = vmatprep.subr.bf16.mxu0 %v2433
  %3390 = vmatpush1.bf16.msra.mxu0 %v2432
  %3391 = vmatprep.subr.bf16.mxu0 %v2440
  %3392 = vmatpush1.bf16.msra.mxu0 %v2439
  %3393 = vmatprep.subr.bf16.mxu0 %v2447
  %3394 = vmatpush1.bf16.msra.mxu0 %v2446
  %3395 = vmatprep.subr.bf16.mxu0 %v2454
  %3396 = vmatpush1.bf16.msra.mxu0 %v2453
  %3397 = vmatprep.subr.bf16.mxu0 %v2461
  %3398 = vmatpush1.bf16.msra.mxu0 %v2460
  %3399 = vmatprep.subr.bf16.mxu0 %v2468
  %3400 = vmatpush1.bf16.msra.mxu0 %v2467
  %3401 = vmatprep.mubr.bf16.mxu0 %v605
  %3402 = vmatmul.mubr.bf16.gmra.mrb[0].mxu0 %v604
  %v3403 = vpop.f32.mrb[0].mxu0
  %v3404 = vadd.f32 %v3363, %v3403
  %v3405 = vpop.f32.mrb[0].mxu0
  %v3406 = vadd.f32 %v3365, %v3405
  %v3407 = vpop.f32.mrb[0].mxu0
  %v3408 = vpop.f32.mrb[0].mxu0
  %3409 = vdwg.mxu0
  %3410 = vmatprep.subr.bf16.mxu0 0
  %3411 = vmatpush1.bf16.msra.mxu0 %v2028
  %3412 = vmatprep.subr.bf16.mxu0 0
  %3413 = vmatpush1.bf16.msra.mxu0 %v2035
  %3414 = vmatprep.subr.bf16.mxu0 0
  %3415 = vmatpush1.bf16.msra.mxu0 %v2042
  %3416 = vmatprep.subr.bf16.mxu0 0
  %3417 = vmatpush1.bf16.msra.mxu0 %v2049
  %3418 = vmatprep.subr.bf16.mxu0 0
  %3419 = vmatpush1.bf16.msra.mxu0 %v2056
  %3420 = vmatprep.subr.bf16.mxu0 0
  %3421 = vmatpush1.bf16.msra.mxu0 %v2063
  %3422 = vmatprep.subr.bf16.mxu0 0
  %3423 = vmatpush1.bf16.msra.mxu0 %v2070
  %3424 = vmatprep.subr.bf16.mxu0 0
  %3425 = vmatpush1.bf16.msra.mxu0 %v2077
  %3426 = vmatprep.subr.bf16.mxu0 0
  %3427 = vmatpush1.bf16.msra.mxu0 %v2084
  %3428 = vmatprep.subr.bf16.mxu0 0
  %3429 = vmatpush1.bf16.msra.mxu0 %v2091
  %3430 = vmatprep.subr.bf16.mxu0 0
  %3431 = vmatpush1.bf16.msra.mxu0 %v2098
  %3432 = vmatprep.subr.bf16.mxu0 0
  %3433 = vmatpush1.bf16.msra.mxu0 %v2105
  %3434 = vmatprep.subr.bf16.mxu0 0
  %3435 = vmatpush1.bf16.msra.mxu0 %v2112
  %3436 = vmatprep.subr.bf16.mxu0 0
  %3437 = vmatpush1.bf16.msra.mxu0 %v2119
  %3438 = vmatprep.subr.bf16.mxu0 0
  %3439 = vmatpush1.bf16.msra.mxu0 %v2126
  %3440 = vmatprep.subr.bf16.mxu0 0
  %3441 = vmatpush1.bf16.msra.mxu0 %v2133
  %3442 = vmatprep.mubr.bf16.mxu0 %v599
  %3443 = vmatmul.mubr.bf16.gmra.mrb[0].mxu0 %v598
  %v3444 = vpop.f32.mrb[0].mxu0
  %v3445 = vadd.f32 %v578, %v3444
  %v3446 = vpop.f32.mrb[0].mxu0
  %v3447 = vpop.f32.mrb[0].mxu0
  %v3448 = vpop.f32.mrb[0].mxu0
  %3449 = vdwg.mxu0
  %3450 = vmatprep.subr.bf16.mxu0 0
  %3451 = vmatpush1.bf16.msra.mxu0 %v2140
  %3452 = vmatprep.subr.bf16.mxu0 0
  %3453 = vmatpush1.bf16.msra.mxu0 %v2147
  %3454 = vmatprep.subr.bf16.mxu0 0
  %3455 = vmatpush1.bf16.msra.mxu0 %v2154
  %3456 = vmatprep.subr.bf16.mxu0 0
  %3457 = vmatpush1.bf16.msra.mxu0 %v2161
  %3458 = vmatprep.subr.bf16.mxu0 0
  %3459 = vmatpush1.bf16.msra.mxu0 %v2168
  %3460 = vmatprep.subr.bf16.mxu0 0
  %3461 = vmatpush1.bf16.msra.mxu0 %v2175
  %3462 = vmatprep.subr.bf16.mxu0 0
  %3463 = vmatpush1.bf16.msra.mxu0 %v2182
  %3464 = vmatprep.subr.bf16.mxu0 0
  %3465 = vmatpush1.bf16.msra.mxu0 %v2189
  %3466 = vmatprep.subr.bf16.mxu0 0
  %3467 = vmatpush1.bf16.msra.mxu0 %v2196
  %3468 = vmatprep.subr.bf16.mxu0 0
  %3469 = vmatpush1.bf16.msra.mxu0 %v2203
  %3470 = vmatprep.subr.bf16.mxu0 0
  %3471 = vmatpush1.bf16.msra.mxu0 %v2210
  %3472 = vmatprep.subr.bf16.mxu0 0
  %3473 = vmatpush1.bf16.msra.mxu0 %v2217
  %3474 = vmatprep.subr.bf16.mxu0 0
  %3475 = vmatpush1.bf16.msra.mxu0 %v2224
  %3476 = vmatprep.subr.bf16.mxu0 0
  %3477 = vmatpush1.bf16.msra.mxu0 %v2231
  %3478 = vmatprep.subr.bf16.mxu0 0
  %3479 = vmatpush1.bf16.msra.mxu0 %v2238
  %3480 = vmatprep.subr.bf16.mxu0 0
  %3481 = vmatpush1.bf16.msra.mxu0 %v2245
  %3482 = vmatprep.mubr.bf16.mxu0 %v601
  %3483 = vmatmul.mubr.bf16.gmra.mrb[0].mxu0 %v600
  %v3484 = vpop.f32.mrb[0].mxu0
  %v3485 = vadd.f32 %v3445, %v3484
  %v3486 = vpop.f32.mrb[0].mxu0
  %v3487 = vpop.f32.mrb[0].mxu0
  %v3488 = vpop.f32.mrb[0].mxu0
  %3489 = vdwg.mxu0
  %3490 = vmatprep.subr.bf16.mxu0 0
  %3491 = vmatpush1.bf16.msra.mxu0 %v2252
  %3492 = vmatprep.subr.bf16.mxu0 0
  %3493 = vmatpush1.bf16.msra.mxu0 %v2259
  %3494 = vmatprep.subr.bf16.mxu0 0
  %3495 = vmatpush1.bf16.msra.mxu0 %v2266
  %3496 = vmatprep.subr.bf16.mxu0 0
  %3497 = vmatpush1.bf16.msra.mxu0 %v2273
  %3498 = vmatprep.subr.bf16.mxu0 0
  %3499 = vmatpush1.bf16.msra.mxu0 %v2280
  %3500 = vmatprep.subr.bf16.mxu0 0
  %3501 = vmatpush1.bf16.msra.mxu0 %v2287
  %3502 = vmatprep.subr.bf16.mxu0 0
  %3503 = vmatpush1.bf16.msra.mxu0 %v2294
  %3504 = vmatprep.subr.bf16.mxu0 0
  %3505 = vmatpush1.bf16.msra.mxu0 %v2301
  %3506 = vmatprep.subr.bf16.mxu0 0
  %3507 = vmatpush1.bf16.msra.mxu0 %v2308
  %3508 = vmatprep.subr.bf16.mxu0 0
  %3509 = vmatpush1.bf16.msra.mxu0 %v2315
  %3510 = vmatprep.subr.bf16.mxu0 0
  %3511 = vmatpush1.bf16.msra.mxu0 %v2322
  %3512 = vmatprep.subr.bf16.mxu0 0
  %3513 = vmatpush1.bf16.msra.mxu0 %v2329
  %3514 = vmatprep.subr.bf16.mxu0 0
  %3515 = vmatpush1.bf16.msra.mxu0 %v2336
  %3516 = vmatprep.subr.bf16.mxu0 0
  %3517 = vmatpush1.bf16.msra.mxu0 %v2343
  %3518 = vmatprep.subr.bf16.mxu0 0
  %3519 = vmatpush1.bf16.msra.mxu0 %v2350
  %3520 = vmatprep.subr.bf16.mxu0 0
  %3521 = vmatpush1.bf16.msra.mxu0 %v2357
  %3522 = vmatprep.mubr.bf16.mxu0 %v603
  %3523 = vmatmul.mubr.bf16.gmra.mrb[0].mxu0 %v602
  %v3524 = vpop.f32.mrb[0].mxu0
  %v3525 = vadd.f32 %v3485, %v3524
  %v3526 = vpop.f32.mrb[0].mxu0
  %v3527 = vpop.f32.mrb[0].mxu0
  %v3528 = vpop.f32.mrb[0].mxu0
  %3529 = vdwg.mxu0
  %3530 = vmatprep.subr.bf16.mxu0 0
  %3531 = vmatpush1.bf16.msra.mxu0 %v2364
  %3532 = vmatprep.subr.bf16.mxu0 0
  %3533 = vmatpush1.bf16.msra.mxu0 %v2371
  %3534 = vmatprep.subr.bf16.mxu0 0
  %3535 = vmatpush1.bf16.msra.mxu0 %v2378
  %3536 = vmatprep.subr.bf16.mxu0 0
  %3537 = vmatpush1.bf16.msra.mxu0 %v2385
  %3538 = vmatprep.subr.bf16.mxu0 0
  %3539 = vmatpush1.bf16.msra.mxu0 %v2392
  %3540 = vmatprep.subr.bf16.mxu0 0
  %3541 = vmatpush1.bf16.msra.mxu0 %v2399
  %3542 = vmatprep.subr.bf16.mxu0 0
  %3543 = vmatpush1.bf16.msra.mxu0 %v2406
  %3544 = vmatprep.subr.bf16.mxu0 0
  %3545 = vmatpush1.bf16.msra.mxu0 %v2413
  %3546 = vmatprep.subr.bf16.mxu0 0
  %3547 = vmatpush1.bf16.msra.mxu0 %v2420
  %3548 = vmatprep.subr.bf16.mxu0 0
  %3549 = vmatpush1.bf16.msra.mxu0 %v2427
  %3550 = vmatprep.subr.bf16.mxu0 0
  %3551 = vmatpush1.bf16.msra.mxu0 %v2434
  %3552 = vmatprep.subr.bf16.mxu0 0
  %3553 = vmatpush1.bf16.msra.mxu0 %v2441
  %3554 = vmatprep.subr.bf16.mxu0 0
  %3555 = vmatpush1.bf16.msra.mxu0 %v2448
  %3556 = vmatprep.subr.bf16.mxu0 0
  %3557 = vmatpush1.bf16.msra.mxu0 %v2455
  %3558 = vmatprep.subr.bf16.mxu0 0
  %3559 = vmatpush1.bf16.msra.mxu0 %v2462
  %3560 = vmatprep.subr.bf16.mxu0 0
  %3561 = vmatpush1.bf16.msra.mxu0 %v2469
  %3562 = vmatprep.mubr.bf16.mxu0 %v605
  %3563 = vmatmul.mubr.bf16.gmra.mrb[0].mxu0 %v604
  %v3564 = vpop.f32.mrb[0].mxu0
  %v3565 = vadd.f32 %v3525, %v3564
  %v3566 = vpop.f32.mrb[0].mxu0
  %v3567 = vpop.f32.mrb[0].mxu0
  %v3568 = vpop.f32.mrb[0].mxu0
  %3569 = vdwg.mxu0
  %v3570 = vmax.f32 %v3076, 0.0
  %v3571 = vmax.f32 %v3078, 0.0
  %v3572 = vmax.f32 %v3240, 0.0
  %v3573 = vmax.f32 %v3242, 0.0
  %v3574 = vmax.f32 %v3404, 0.0
  %v3575 = vmax.f32 %v3406, 0.0
  %v3576 = vmax.f32 %v3565, 0.0
  %v3577 = vpack.c.bf16 %v3570, %v3570
  %v3578 = vpack.c.bf16 %v3571, %v3571
  %v3579 = vpack.c.bf16 %v3572, %v3572
  %v3580 = vpack.c.bf16 %v3573, %v3573
  %v3581 = vpack.c.bf16 %v3574, %v3574
  %v3582 = vpack.c.bf16 %v3575, %v3575
  %v3583 = vpack.c.bf16 %v3576, %v3576
  %v3584 = vld [vmem:[%s3] sm:$0xf]
  %v3585 = vld [vmem:[%s3 + $0x4] sm:$0xf]
  %v3586 = vld [vmem:[%s3 + $0x8] sm:$0xf]
  %v3587 = vld [vmem:[%s3 + $0xc] sm:$0xf]
  %v3588 = vld [vmem:[%s3 + $0x10] sm:$0xf]
  %v3589 = vld [vmem:[%s3 + $0x14] sm:$0xf]
  %v3590 = vld [vmem:[%s3 + $0x18] sm:$0xf]
  %v3591 = vld [vmem:[%s3 + $0x1c] sm:$0xf]
  %v3592 = vld [vmem:[%s3 + $0x20] sm:$0xf]
  %v3593 = vld [vmem:[%s3 + $0x24] sm:$0xf]
  %v3594 = vld [vmem:[%s3 + $0x28] sm:$0xf]
  %v3595 = vld [vmem:[%s3 + $0x2c] sm:$0xf]
  %v3596 = vld [vmem:[%s3 + $0x30] sm:$0xf]
  %v3597 = vld [vmem:[%s3 + $0x34] sm:$0xf]
  %v3598 = vld [vmem:[%s3 + $0x38] sm:$0xf]
  %v3599 = vld [vmem:[%s3 + $0x3c] sm:$0xf]
  %v3600 = vld [vmem:[%s3 + $0x40] sm:$0xf]
  %v3601 = vld [vmem:[%s3 + $0x44] sm:$0xf]
  %v3602 = vld [vmem:[%s3 + $0x48] sm:$0xf]
  %v3603 = vld [vmem:[%s3 + $0x4c] sm:$0xf]
  %v3604 = vld [vmem:[%s3 + $0x50] sm:$0xf]
  %v3605 = vld [vmem:[%s3 + $0x54] sm:$0xf]
  %v3606 = vld [vmem:[%s3 + $0x58] sm:$0xf]
  %v3607 = vld [vmem:[%s3 + $0x5c] sm:$0xf]
  %v3608 = vld [vmem:[%s3 + $0x60] sm:$0xf]
  %v3609 = vld [vmem:[%s3 + $0x64] sm:$0xf]
  %v3610 = vld [vmem:[%s3 + $0x68] sm:$0xf]
  %v3611 = vld [vmem:[%s3 + $0x6c] sm:$0xf]
  %v3612 = vld [vmem:[%s3 + $0x70] sm:$0xf]
  %v3613 = vld [vmem:[%s3 + $0x74] sm:$0xf]
  %v3614 = vld [vmem:[%s3 + $0x78] sm:$0xf]
  %v3615 = vld [vmem:[%s3 + $0x7c] sm:$0xf]
  %v3616 = vld [vmem:[%s3 + $0x80] sm:$0xf]
  %v3617 = vld [vmem:[%s3 + $0x84] sm:$0xf]
  %v3618 = vld [vmem:[%s3 + $0x88] sm:$0xf]
  %v3619 = vld [vmem:[%s3 + $0x8c] sm:$0xf]
  %v3620 = vld [vmem:[%s3 + $0x90] sm:$0xf]
  %v3621 = vld [vmem:[%s3 + $0x94] sm:$0xf]
  %v3622 = vld [vmem:[%s3 + $0x98] sm:$0xf]
  %v3623 = vld [vmem:[%s3 + $0x9c] sm:$0xf]
  %v3624 = vld [vmem:[%s3 + $0xa0] sm:$0xf]
  %v3625 = vld [vmem:[%s3 + $0xa4] sm:$0xf]
  %v3626 = vld [vmem:[%s3 + $0xa8] sm:$0xf]
  %v3627 = vld [vmem:[%s3 + $0xac] sm:$0xf]
  %v3628 = vld [vmem:[%s3 + $0xb0] sm:$0xf]
  %v3629 = vld [vmem:[%s3 + $0xb4] sm:$0xf]
  %v3630 = vld [vmem:[%s3 + $0xb8] sm:$0xf]
  %v3631 = vld [vmem:[%s3 + $0xbc] sm:$0xf]
  %v3632 = vld [vmem:[%s3 + $0xc0] sm:$0xf]
  %v3633 = vld [vmem:[%s3 + $0xc4] sm:$0xf]
  %v3634 = vld [vmem:[%s3 + $0xc8] sm:$0xf]
  %v3635 = vld [vmem:[%s3 + $0xcc] sm:$0xf]
  %v3636 = vld [vmem:[%s3 + $0xd0] sm:$0xf]
  %v3637 = vld [vmem:[%s3 + $0xd4] sm:$0xf]
  %v3638 = vld [vmem:[%s3 + $0xd8] sm:$0xf]
  %v3639 = vld [vmem:[%s3 + $0xdc] sm:$0xf]
  %v3640 = vld [vmem:[%s3 + $0xe0] sm:$0xf]
  %v3641 = vld [vmem:[%s3 + $0xe4] sm:$0xf]
  %v3642 = vld [vmem:[%s3 + $0xe8] sm:$0xf]
  %v3643 = vld [vmem:[%s3 + $0xec] sm:$0xf]
  %v3644 = vld [vmem:[%s3 + $0xf0] sm:$0xf]
  %v3645 = vld [vmem:[%s3 + $0xf4] sm:$0xf]
  %v3646 = vld [vmem:[%s3 + $0xf8] sm:$0xf]
  %v3647 = vld [vmem:[%s3 + $0xfc] sm:$0xf]
  %v3648 = vld [vmem:[%s3 + $0x100] sm:$0xf]
  %v3649 = vld [vmem:[%s3 + $0x104] sm:$0xf]
  %v3650 = vld [vmem:[%s3 + $0x108] sm:$0xf]
  %v3651 = vld [vmem:[%s3 + $0x10c] sm:$0xf]
  %v3652 = vld [vmem:[%s3 + $0x110] sm:$0xf]
  %v3653 = vld [vmem:[%s3 + $0x114] sm:$0xf]
  %v3654 = vld [vmem:[%s3 + $0x118] sm:$0xf]
  %v3655 = vld [vmem:[%s3 + $0x11c] sm:$0xf]
  %v3656 = vld [vmem:[%s3 + $0x120] sm:$0xf]
  %v3657 = vld [vmem:[%s3 + $0x124] sm:$0xf]
  %v3658 = vld [vmem:[%s3 + $0x128] sm:$0xf]
  %v3659 = vld [vmem:[%s3 + $0x12c] sm:$0xf]
  %v3660 = vld [vmem:[%s3 + $0x130] sm:$0xf]
  %v3661 = vld [vmem:[%s3 + $0x134] sm:$0xf]
  %v3662 = vld [vmem:[%s3 + $0x138] sm:$0xf]
  %v3663 = vld [vmem:[%s3 + $0x13c] sm:$0xf]
  %v3664 = vld [vmem:[%s3 + $0x140] sm:$0xf]
  %v3665 = vld [vmem:[%s3 + $0x144] sm:$0xf]
  %v3666 = vld [vmem:[%s3 + $0x148] sm:$0xf]
  %v3667 = vld [vmem:[%s3 + $0x14c] sm:$0xf]
  %v3668 = vld [vmem:[%s3 + $0x150] sm:$0xf]
  %v3669 = vld [vmem:[%s3 + $0x154] sm:$0xf]
  %v3670 = vld [vmem:[%s3 + $0x158] sm:$0xf]
  %v3671 = vld [vmem:[%s3 + $0x15c] sm:$0xf]
  %v3672 = vld [vmem:[%s3 + $0x160] sm:$0xf]
  %v3673 = vld [vmem:[%s3 + $0x164] sm:$0xf]
  %v3674 = vld [vmem:[%s3 + $0x168] sm:$0xf]
  %v3675 = vld [vmem:[%s3 + $0x16c] sm:$0xf]
  %v3676 = vld [vmem:[%s3 + $0x170] sm:$0xf]
  %v3677 = vld [vmem:[%s3 + $0x174] sm:$0xf]
  %v3678 = vld [vmem:[%s3 + $0x178] sm:$0xf]
  %v3679 = vld [vmem:[%s3 + $0x17c] sm:$0xf]
  %v3680 = vld [vmem:[%s3 + $0x180] sm:$0xf]
  %v3681 = vld [vmem:[%s3 + $0x184] sm:$0xf]
  %v3682 = vld [vmem:[%s3 + $0x188] sm:$0xf]
  %v3683 = vld [vmem:[%s3 + $0x18c] sm:$0xf]
  %v3684 = vld [vmem:[%s3 + $0x190] sm:$0xf]
  %v3685 = vld [vmem:[%s3 + $0x194] sm:$0xf]
  %v3686 = vld [vmem:[%s3 + $0x198] sm:$0xf]
  %v3687 = vld [vmem:[%s3 + $0x19c] sm:$0xf]
  %v3688 = vld [vmem:[%s3 + $0x1a0] sm:$0xf]
  %v3689 = vld [vmem:[%s3 + $0x1a4] sm:$0xf]
  %v3690 = vld [vmem:[%s3 + $0x1a8] sm:$0xf]
  %v3691 = vld [vmem:[%s3 + $0x1ac] sm:$0xf]
  %v3692 = vld [vmem:[%s3 + $0x1b0] sm:$0xf]
  %v3693 = vld [vmem:[%s3 + $0x1b4] sm:$0xf]
  %v3694 = vld [vmem:[%s3 + $0x1b8] sm:$0xf]
  %v3695 = vld [vmem:[%s3 + $0x1bc] sm:$0xf]
  %v3696 = vld [vmem:[%s4] sm:$0x1]
  %v3698 = vlaneseq
  %v3699 = vshrl.u32 %v3698, 7
  %v3700 = vsub.s32 0, %v3699
  %v3701 = vrot.slane %v3696, %v3700
  %v3815 = vunpack.c.l.b16 %v3584
  %v3816 = vunpack.c.l.b16 %v3585
  %v3817 = vunpack.c.l.b16 %v3586
  %v3818 = vunpack.c.l.b16 %v3587
  %v3819 = vunpack.c.l.b16 %v3588
  %v3820 = vunpack.c.l.b16 %v3589
  %v3821 = vunpack.c.l.b16 %v3590
  %v3822 = vunpack.c.l.b16 %v3591
  %v3823 = vunpack.c.l.b16 %v3592
  %v3824 = vunpack.c.l.b16 %v3593
  %v3825 = vunpack.c.l.b16 %v3594
  %v3826 = vunpack.c.l.b16 %v3595
  %v3827 = vunpack.c.l.b16 %v3596
  %v3828 = vunpack.c.l.b16 %v3597
  %v3829 = vunpack.c.l.b16 %v3598
  %v3830 = vunpack.c.l.b16 %v3599
  %v3831 = vunpack.c.l.b16 %v3600
  %v3832 = vunpack.c.l.b16 %v3601
  %v3833 = vunpack.c.l.b16 %v3602
  %v3834 = vunpack.c.l.b16 %v3603
  %v3835 = vunpack.c.l.b16 %v3604
  %v3836 = vunpack.c.l.b16 %v3605
  %v3837 = vunpack.c.l.b16 %v3606
  %v3838 = vunpack.c.l.b16 %v3607
  %v3839 = vunpack.c.l.b16 %v3608
  %v3840 = vunpack.c.l.b16 %v3609
  %v3841 = vunpack.c.l.b16 %v3610
  %v3842 = vunpack.c.l.b16 %v3611
  %v3843 = vunpack.c.l.b16 %v3612
  %v3844 = vunpack.c.l.b16 %v3613
  %v3845 = vunpack.c.l.b16 %v3614
  %v3846 = vunpack.c.l.b16 %v3615
  %v3847 = vunpack.c.l.b16 %v3616
  %v3848 = vunpack.c.l.b16 %v3617
  %v3849 = vunpack.c.l.b16 %v3618
  %v3850 = vunpack.c.l.b16 %v3619
  %v3851 = vunpack.c.l.b16 %v3620
  %v3852 = vunpack.c.l.b16 %v3621
  %v3853 = vunpack.c.l.b16 %v3622
  %v3854 = vunpack.c.l.b16 %v3623
  %v3855 = vunpack.c.l.b16 %v3624
  %v3856 = vunpack.c.l.b16 %v3625
  %v3857 = vunpack.c.l.b16 %v3626
  %v3858 = vunpack.c.l.b16 %v3627
  %v3859 = vunpack.c.l.b16 %v3628
  %v3860 = vunpack.c.l.b16 %v3629
  %v3861 = vunpack.c.l.b16 %v3630
  %v3862 = vunpack.c.l.b16 %v3631
  %v3863 = vunpack.c.l.b16 %v3632
  %v3864 = vunpack.c.l.b16 %v3633
  %v3865 = vunpack.c.l.b16 %v3634
  %v3866 = vunpack.c.l.b16 %v3635
  %v3867 = vunpack.c.l.b16 %v3636
  %v3868 = vunpack.c.l.b16 %v3637
  %v3869 = vunpack.c.l.b16 %v3638
  %v3870 = vunpack.c.l.b16 %v3639
  %v3871 = vunpack.c.l.b16 %v3640
  %v3872 = vunpack.c.l.b16 %v3641
  %v3873 = vunpack.c.l.b16 %v3642
  %v3874 = vunpack.c.l.b16 %v3643
  %v3875 = vunpack.c.l.b16 %v3644
  %v3876 = vunpack.c.l.b16 %v3645
  %v3877 = vunpack.c.l.b16 %v3646
  %v3878 = vunpack.c.l.b16 %v3647
  %v3879 = vunpack.c.l.b16 %v3648
  %v3880 = vunpack.c.l.b16 %v3649
  %v3881 = vunpack.c.l.b16 %v3650
  %v3882 = vunpack.c.l.b16 %v3651
  %v3883 = vunpack.c.l.b16 %v3652
  %v3884 = vunpack.c.l.b16 %v3653
  %v3885 = vunpack.c.l.b16 %v3654
  %v3886 = vunpack.c.l.b16 %v3655
  %v3887 = vunpack.c.l.b16 %v3656
  %v3888 = vunpack.c.l.b16 %v3657
  %v3889 = vunpack.c.l.b16 %v3658
  %v3890 = vunpack.c.l.b16 %v3659
  %v3891 = vunpack.c.l.b16 %v3660
  %v3892 = vunpack.c.l.b16 %v3661
  %v3893 = vunpack.c.l.b16 %v3662
  %v3894 = vunpack.c.l.b16 %v3663
  %v3895 = vunpack.c.l.b16 %v3664
  %v3896 = vunpack.c.l.b16 %v3665
  %v3897 = vunpack.c.l.b16 %v3666
  %v3898 = vunpack.c.l.b16 %v3667
  %v3899 = vunpack.c.l.b16 %v3668
  %v3900 = vunpack.c.l.b16 %v3669
  %v3901 = vunpack.c.l.b16 %v3670
  %v3902 = vunpack.c.l.b16 %v3671
  %v3903 = vunpack.c.l.b16 %v3672
  %v3904 = vunpack.c.l.b16 %v3673
  %v3905 = vunpack.c.l.b16 %v3674
  %v3906 = vunpack.c.l.b16 %v3675
  %v3907 = vunpack.c.l.b16 %v3676
  %v3908 = vunpack.c.l.b16 %v3677
  %v3909 = vunpack.c.l.b16 %v3678
  %v3910 = vunpack.c.l.b16 %v3679
  %v3911 = vunpack.c.l.b16 %v3680
  %v3912 = vunpack.c.l.b16 %v3681
  %v3913 = vunpack.c.l.b16 %v3682
  %v3914 = vunpack.c.l.b16 %v3683
  %v3915 = vunpack.c.l.b16 %v3684
  %v3916 = vunpack.c.l.b16 %v3685
  %v3917 = vunpack.c.l.b16 %v3686
  %v3918 = vunpack.c.l.b16 %v3687
  %v3919 = vunpack.c.l.b16 %v3688
  %v3920 = vunpack.c.l.b16 %v3689
  %v3921 = vunpack.c.l.b16 %v3690
  %v3922 = vunpack.c.l.b16 %v3691
  %v3923 = vunpack.c.l.b16 %v3692
  %v3924 = vunpack.c.l.b16 %v3693
  %v3925 = vunpack.c.l.b16 %v3694
  %v3926 = vunpack.c.l.b16 %v3695
  %v3927 = vpack.c.b16 %v3816, %v3815
  %v3928 = vpack.c.b16 %v3818, %v3817
  %v3929 = vpack.c.b16 %v3820, %v3819
  %v3930 = vpack.c.b16 %v3822, %v3821
  %v3931 = vpack.c.b16 %v3824, %v3823
  %v3932 = vpack.c.b16 %v3826, %v3825
  %v3933 = vpack.c.b16 %v3828, %v3827
  %v3934 = vpack.c.b16 %v3830, %v3829
  %v3935 = vpack.c.b16 %v3832, %v3831
  %v3936 = vpack.c.b16 %v3834, %v3833
  %v3937 = vpack.c.b16 %v3836, %v3835
  %v3938 = vpack.c.b16 %v3838, %v3837
  %v3939 = vpack.c.b16 %v3840, %v3839
  %v3940 = vpack.c.b16 %v3842, %v3841
  %v3941 = vpack.c.b16 %v3844, %v3843
  %v3942 = vpack.c.b16 %v3846, %v3845
  %v3943 = vpack.c.b16 %v3848, %v3847
  %v3944 = vpack.c.b16 %v3850, %v3849
  %v3945 = vpack.c.b16 %v3852, %v3851
  %v3946 = vpack.c.b16 %v3854, %v3853
  %v3947 = vpack.c.b16 %v3856, %v3855
  %v3948 = vpack.c.b16 %v3858, %v3857
  %v3949 = vpack.c.b16 %v3860, %v3859
  %v3950 = vpack.c.b16 %v3862, %v3861
  %v3951 = vpack.c.b16 %v3864, %v3863
  %v3952 = vpack.c.b16 %v3866, %v3865
  %v3953 = vpack.c.b16 %v3868, %v3867
  %v3954 = vpack.c.b16 %v3870, %v3869
  %v3955 = vpack.c.b16 %v3872, %v3871
  %v3956 = vpack.c.b16 %v3874, %v3873
  %v3957 = vpack.c.b16 %v3876, %v3875
  %v3958 = vpack.c.b16 %v3878, %v3877
  %v3959 = vpack.c.b16 %v3880, %v3879
  %v3960 = vpack.c.b16 %v3882, %v3881
  %v3961 = vpack.c.b16 %v3884, %v3883
  %v3962 = vpack.c.b16 %v3886, %v3885
  %v3963 = vpack.c.b16 %v3888, %v3887
  %v3964 = vpack.c.b16 %v3890, %v3889
  %v3965 = vpack.c.b16 %v3892, %v3891
  %v3966 = vpack.c.b16 %v3894, %v3893
  %v3967 = vpack.c.b16 %v3896, %v3895
  %v3968 = vpack.c.b16 %v3898, %v3897
  %v3969 = vpack.c.b16 %v3900, %v3899
  %v3970 = vpack.c.b16 %v3902, %v3901
  %v3971 = vpack.c.b16 %v3904, %v3903
  %v3972 = vpack.c.b16 %v3906, %v3905
  %v3973 = vpack.c.b16 %v3908, %v3907
  %v3974 = vpack.c.b16 %v3910, %v3909
  %v3975 = vpack.c.b16 %v3912, %v3911
  %v3976 = vpack.c.b16 %v3914, %v3913
  %v3977 = vpack.c.b16 %v3916, %v3915
  %v3978 = vpack.c.b16 %v3918, %v3917
  %v3979 = vpack.c.b16 %v3920, %v3919
  %v3980 = vpack.c.b16 %v3922, %v3921
  %v3981 = vpack.c.b16 %v3924, %v3923
  %v3982 = vpack.c.b16 %v3926, %v3925
  %4039 = vmatprep.subr.bf16.mxu0 0
  %4040 = vmatpush1.bf16.msra.mxu0 %v3927
  %4041 = vmatprep.subr.bf16.mxu0 0
  %4042 = vmatpush1.bf16.msra.mxu0 %v3928
  %4043 = vmatprep.subr.bf16.mxu0 0
  %4044 = vmatpush1.bf16.msra.mxu0 %v3929
  %4045 = vmatprep.subr.bf16.mxu0 0
  %4046 = vmatpush1.bf16.msra.mxu0 %v3930
  %4047 = vmatprep.subr.bf16.mxu0 0
  %4048 = vmatpush1.bf16.msra.mxu0 %v3931
  %4049 = vmatprep.subr.bf16.mxu0 0
  %4050 = vmatpush1.bf16.msra.mxu0 %v3932
  %4051 = vmatprep.subr.bf16.mxu0 0
  %4052 = vmatpush1.bf16.msra.mxu0 %v3933
  %4053 = vmatprep.subr.bf16.mxu0 0
  %4054 = vmatpush1.bf16.msra.mxu0 %v3934
  %4055 = vmatprep.subr.bf16.mxu0 0
  %4056 = vmatpush1.bf16.msra.mxu0 %v3935
  %4057 = vmatprep.subr.bf16.mxu0 0
  %4058 = vmatpush1.bf16.msra.mxu0 %v3936
  %4059 = vmatprep.subr.bf16.mxu0 0
  %4060 = vmatpush1.bf16.msra.mxu0 %v3937
  %4061 = vmatprep.subr.bf16.mxu0 0
  %4062 = vmatpush1.bf16.msra.mxu0 %v3938
  %4063 = vmatprep.subr.bf16.mxu0 0
  %4064 = vmatpush1.bf16.msra.mxu0 %v3939
  %4065 = vmatprep.subr.bf16.mxu0 0
  %4066 = vmatpush1.bf16.msra.mxu0 %v3940
  %4067 = vmatprep.subr.bf16.mxu0 0
  %4068 = vmatpush1.bf16.msra.mxu0 %v3941
  %4069 = vmatprep.subr.bf16.mxu0 0
  %4070 = vmatpush1.bf16.msra.mxu0 %v3942
  %4071 = vmatprep.mubr.bf16.mxu0 %v3578
  %4072 = vmatmul.mubr.bf16.gmra.mrb[0].mxu0 %v3577
  %v4073 = vpop.f32.mrb[0].mxu0
  %v4074 = vadd.f32 %v3701, %v4073
  %v4075 = vpop.f32.mrb[0].mxu0
  %v4076 = vpop.f32.mrb[0].mxu0
  %v4077 = vpop.f32.mrb[0].mxu0
  %4078 = vdwg.mxu0
  %4079 = vmatprep.subr.bf16.mxu0 0
  %4080 = vmatpush1.bf16.msra.mxu0 %v3943
  %4081 = vmatprep.subr.bf16.mxu0 0
  %4082 = vmatpush1.bf16.msra.mxu0 %v3944
  %4083 = vmatprep.subr.bf16.mxu0 0
  %4084 = vmatpush1.bf16.msra.mxu0 %v3945
  %4085 = vmatprep.subr.bf16.mxu0 0
  %4086 = vmatpush1.bf16.msra.mxu0 %v3946
  %4087 = vmatprep.subr.bf16.mxu0 0
  %4088 = vmatpush1.bf16.msra.mxu0 %v3947
  %4089 = vmatprep.subr.bf16.mxu0 0
  %4090 = vmatpush1.bf16.msra.mxu0 %v3948
  %4091 = vmatprep.subr.bf16.mxu0 0
  %4092 = vmatpush1.bf16.msra.mxu0 %v3949
  %4093 = vmatprep.subr.bf16.mxu0 0
  %4094 = vmatpush1.bf16.msra.mxu0 %v3950
  %4095 = vmatprep.subr.bf16.mxu0 0
  %4096 = vmatpush1.bf16.msra.mxu0 %v3951
  %4097 = vmatprep.subr.bf16.mxu0 0
  %4098 = vmatpush1.bf16.msra.mxu0 %v3952
  %4099 = vmatprep.subr.bf16.mxu0 0
  %4100 = vmatpush1.bf16.msra.mxu0 %v3953
  %4101 = vmatprep.subr.bf16.mxu0 0
  %4102 = vmatpush1.bf16.msra.mxu0 %v3954
  %4103 = vmatprep.subr.bf16.mxu0 0
  %4104 = vmatpush1.bf16.msra.mxu0 %v3955
  %4105 = vmatprep.subr.bf16.mxu0 0
  %4106 = vmatpush1.bf16.msra.mxu0 %v3956
  %4107 = vmatprep.subr.bf16.mxu0 0
  %4108 = vmatpush1.bf16.msra.mxu0 %v3957
  %4109 = vmatprep.subr.bf16.mxu0 0
  %4110 = vmatpush1.bf16.msra.mxu0 %v3958
  %4111 = vmatprep.mubr.bf16.mxu0 %v3580
  %4112 = vmatmul.mubr.bf16.gmra.mrb[0].mxu0 %v3579
  %v4113 = vpop.f32.mrb[0].mxu0
  %v4114 = vadd.f32 %v4074, %v4113
  %v4115 = vpop.f32.mrb[0].mxu0
  %v4116 = vpop.f32.mrb[0].mxu0
  %v4117 = vpop.f32.mrb[0].mxu0
  %4118 = vdwg.mxu0
  %4119 = vmatprep.subr.bf16.mxu0 0
  %4120 = vmatpush1.bf16.msra.mxu0 %v3959
  %4121 = vmatprep.subr.bf16.mxu0 0
  %4122 = vmatpush1.bf16.msra.mxu0 %v3960
  %4123 = vmatprep.subr.bf16.mxu0 0
  %4124 = vmatpush1.bf16.msra.mxu0 %v3961
  %4125 = vmatprep.subr.bf16.mxu0 0
  %4126 = vmatpush1.bf16.msra.mxu0 %v3962
  %4127 = vmatprep.subr.bf16.mxu0 0
  %4128 = vmatpush1.bf16.msra.mxu0 %v3963
  %4129 = vmatprep.subr.bf16.mxu0 0
  %4130 = vmatpush1.bf16.msra.mxu0 %v3964
  %4131 = vmatprep.subr.bf16.mxu0 0
  %4132 = vmatpush1.bf16.msra.mxu0 %v3965
  %4133 = vmatprep.subr.bf16.mxu0 0
  %4134 = vmatpush1.bf16.msra.mxu0 %v3966
  %4135 = vmatprep.subr.bf16.mxu0 0
  %4136 = vmatpush1.bf16.msra.mxu0 %v3967
  %4137 = vmatprep.subr.bf16.mxu0 0
  %4138 = vmatpush1.bf16.msra.mxu0 %v3968
  %4139 = vmatprep.subr.bf16.mxu0 0
  %4140 = vmatpush1.bf16.msra.mxu0 %v3969
  %4141 = vmatprep.subr.bf16.mxu0 0
  %4142 = vmatpush1.bf16.msra.mxu0 %v3970
  %4143 = vmatprep.subr.bf16.mxu0 0
  %4144 = vmatpush1.bf16.msra.mxu0 %v3971
  %4145 = vmatprep.subr.bf16.mxu0 0
  %4146 = vmatpush1.bf16.msra.mxu0 %v3972
  %4147 = vmatprep.subr.bf16.mxu0 0
  %4148 = vmatpush1.bf16.msra.mxu0 %v3973
  %4149 = vmatprep.subr.bf16.mxu0 0
  %4150 = vmatpush1.bf16.msra.mxu0 %v3974
  %4151 = vmatprep.mubr.bf16.mxu0 %v3582
  %4152 = vmatmul.mubr.bf16.gmra.mrb[0].mxu0 %v3581
  %v4153 = vpop.f32.mrb[0].mxu0
  %v4154 = vadd.f32 %v4114, %v4153
  %v4155 = vpop.f32.mrb[0].mxu0
  %v4156 = vpop.f32.mrb[0].mxu0
  %v4157 = vpop.f32.mrb[0].mxu0
  %4158 = vdwg.mxu0
  %4159 = vmatprep.subr.bf16.mxu0 0
  %4160 = vmatpush1.bf16.msra.mxu0 %v3975
  %4161 = vmatprep.subr.bf16.mxu0 0
  %4162 = vmatpush1.bf16.msra.mxu0 %v3976
  %4163 = vmatprep.subr.bf16.mxu0 0
  %4164 = vmatpush1.bf16.msra.mxu0 %v3977
  %4165 = vmatprep.subr.bf16.mxu0 0
  %4166 = vmatpush1.bf16.msra.mxu0 %v3978
  %4167 = vmatprep.subr.bf16.mxu0 0
  %4168 = vmatpush1.bf16.msra.mxu0 %v3979
  %4169 = vmatprep.subr.bf16.mxu0 0
  %4170 = vmatpush1.bf16.msra.mxu0 %v3980
  %4171 = vmatprep.subr.bf16.mxu0 0
  %4172 = vmatpush1.bf16.msra.mxu0 %v3981
  %4173 = vmatprep.subr.bf16.mxu0 0
  %4174 = vmatpush1.bf16.msra.mxu0 %v3982
  %4175 = vmatprep.subr.bf16.mxu0 0
  %4176 = vmatpush1.bf16.msra.mxu0 0
  %4177 = vmatprep.subr.bf16.mxu0 0
  %4178 = vmatpush1.bf16.msra.mxu0 0
  %4179 = vmatprep.subr.bf16.mxu0 0
  %4180 = vmatpush1.bf16.msra.mxu0 0
  %4181 = vmatprep.subr.bf16.mxu0 0
  %4182 = vmatpush1.bf16.msra.mxu0 0
  %4183 = vmatprep.subr.bf16.mxu0 0
  %4184 = vmatpush1.bf16.msra.mxu0 0
  %4185 = vmatprep.subr.bf16.mxu0 0
  %4186 = vmatpush1.bf16.msra.mxu0 0
  %4187 = vmatprep.subr.bf16.mxu0 0
  %4188 = vmatpush1.bf16.msra.mxu0 0
  %4189 = vmatprep.subr.bf16.mxu0 0
  %4190 = vmatpush1.bf16.msra.mxu0 0
  %4191 = vmatprep.mubr.bf16.mxu0 0
  %4192 = vmatmul.mubr.bf16.gmra.mrb[0].mxu0 %v3583
  %v4193 = vpop.f32.mrb[0].mxu0
  %v4194 = vadd.f32 %v4154, %v4193
  %v4195 = vpop.f32.mrb[0].mxu0
  %v4196 = vpop.f32.mrb[0].mxu0
  %v4197 = vpop.f32.mrb[0].mxu0
  %4198 = vdwg.mxu0
  %v4199 = vmax.f32 %v4194, 0.0
  %v4200 = vpack.c.bf16 %v4199, %v4199
  %v4201 = vld [vmem:[%s5] sm:$0xf]
  %v4202 = vld [vmem:[%s5 + $0x4] sm:$0xf]
  %v4203 = vld [vmem:[%s5 + $0x8] sm:$0xf]
  %v4204 = vld [vmem:[%s5 + $0xc] sm:$0xf]
  %v4205 = vld [vmem:[%s5 + $0x10] sm:$0xf]
  %v4206 = vld [vmem:[%s5 + $0x14] sm:$0xf]
  %v4207 = vld [vmem:[%s5 + $0x18] sm:$0xf]
  %v4208 = vld [vmem:[%s5 + $0x1c] sm:$0xf]
  %v4209 = vld [vmem:[%s5 + $0x20] sm:$0xf]
  %v4210 = vld [vmem:[%s5 + $0x24] sm:$0xf]
  %v4211 = vld [vmem:[%s5 + $0x28] sm:$0xf]
  %v4212 = vld [vmem:[%s5 + $0x2c] sm:$0xf]
  %v4213 = vld [vmem:[%s5 + $0x30] sm:$0xf]
  %v4214 = vld [vmem:[%s5 + $0x34] sm:$0xf]
  %v4215 = vld [vmem:[%s5 + $0x38] sm:$0xf]
  %v4216 = vld [vmem:[%s5 + $0x3c] sm:$0xf]
  %v4217 = vld [vmem:[%s6] sm:$0x1]
  %v4219 = vlaneseq
  %v4220 = vshrl.u32 %v4219, 7
  %v4221 = vsub.s32 0, %v4220
  %v4222 = vrot.slane %v4217, %v4221
  %v4240 = vunpack.c.l.b16 %v4201
  %v4241 = vunpack.c.l.b16 %v4202
  %v4242 = vunpack.c.l.b16 %v4203
  %v4243 = vunpack.c.l.b16 %v4204
  %v4244 = vunpack.c.l.b16 %v4205
  %v4245 = vunpack.c.l.b16 %v4206
  %v4246 = vunpack.c.l.b16 %v4207
  %v4247 = vunpack.c.l.b16 %v4208
  %v4248 = vunpack.c.l.b16 %v4209
  %v4249 = vunpack.c.l.b16 %v4210
  %v4250 = vunpack.c.l.b16 %v4211
  %v4251 = vunpack.c.l.b16 %v4212
  %v4252 = vunpack.c.l.b16 %v4213
  %v4253 = vunpack.c.l.b16 %v4214
  %v4254 = vunpack.c.l.b16 %v4215
  %v4255 = vunpack.c.l.b16 %v4216
  %v4256 = vpack.c.b16 %v4241, %v4240
  %v4257 = vpack.c.b16 %v4243, %v4242
  %v4258 = vpack.c.b16 %v4245, %v4244
  %v4259 = vpack.c.b16 %v4247, %v4246
  %v4260 = vpack.c.b16 %v4249, %v4248
  %v4261 = vpack.c.b16 %v4251, %v4250
  %v4262 = vpack.c.b16 %v4253, %v4252
  %v4263 = vpack.c.b16 %v4255, %v4254
  %4272 = vmatprep.subr.bf16.mxu0 0
  %4273 = vmatpush1.bf16.msra.mxu0 %v4256
  %4274 = vmatprep.subr.bf16.mxu0 0
  %4275 = vmatpush1.bf16.msra.mxu0 %v4257
  %4276 = vmatprep.subr.bf16.mxu0 0
  %4277 = vmatpush1.bf16.msra.mxu0 %v4258
  %4278 = vmatprep.subr.bf16.mxu0 0
  %4279 = vmatpush1.bf16.msra.mxu0 %v4259
  %4280 = vmatprep.subr.bf16.mxu0 0
  %4281 = vmatpush1.bf16.msra.mxu0 %v4260
  %4282 = vmatprep.subr.bf16.mxu0 0
  %4283 = vmatpush1.bf16.msra.mxu0 %v4261
  %4284 = vmatprep.subr.bf16.mxu0 0
  %4285 = vmatpush1.bf16.msra.mxu0 %v4262
  %4286 = vmatprep.subr.bf16.mxu0 0
  %4287 = vmatpush1.bf16.msra.mxu0 %v4263
  %4288 = vmatprep.subr.bf16.mxu0 0
  %4289 = vmatpush1.bf16.msra.mxu0 0
  %4290 = vmatprep.subr.bf16.mxu0 0
  %4291 = vmatpush1.bf16.msra.mxu0 0
  %4292 = vmatprep.subr.bf16.mxu0 0
  %4293 = vmatpush1.bf16.msra.mxu0 0
  %4294 = vmatprep.subr.bf16.mxu0 0
  %4295 = vmatpush1.bf16.msra.mxu0 0
  %4296 = vmatprep.subr.bf16.mxu0 0
  %4297 = vmatpush1.bf16.msra.mxu0 0
  %4298 = vmatprep.subr.bf16.mxu0 0
  %4299 = vmatpush1.bf16.msra.mxu0 0
  %4300 = vmatprep.subr.bf16.mxu0 0
  %4301 = vmatpush1.bf16.msra.mxu0 0
  %4302 = vmatprep.subr.bf16.mxu0 0
  %4303 = vmatpush1.bf16.msra.mxu0 0
  %4304 = vmatprep.mubr.bf16.mxu0 0
  %4305 = vmatmul.mubr.bf16.gmra.mrb[0].mxu0 %v4200
  %v4306 = vpop.f32.mrb[0].mxu0
  %v4307 = vadd.f32 %v4222, %v4306
  %v4308 = vpop.f32.mrb[0].mxu0
  %v4309 = vpop.f32.mrb[0].mxu0
  %v4310 = vpop.f32.mrb[0].mxu0
  %4311 = vdwg.mxu0
  %v4312 = vmax.f32 %v4307, 0.0
  %v4313 = vpack.c.bf16 %v4312, %v4312
  %v4314 = vld [vmem:[%s7] sm:$0xf]
  %v4315 = vld [vmem:[%s7 + $0x4] sm:$0xf]
  %v4316 = vld [vmem:[%s7 + $0x8] sm:$0xf]
  %v4317 = vld [vmem:[%s7 + $0xc] sm:$0xf]
  %v4318 = vld [vmem:[%s7 + $0x10] sm:$0xf]
  %v4319 = vld [vmem:[%s7 + $0x14] sm:$0xf]
  %v4320 = vld [vmem:[%s7 + $0x18] sm:$0xf]
  %v4321 = vld [vmem:[%s7 + $0x1c] sm:$0xf]
  %v4322 = vld [vmem:[%s7 + $0x20] sm:$0xf]
  %v4323 = vld [vmem:[%s7 + $0x24] sm:$0xf]
  %v4324 = vld [vmem:[%s7 + $0x28] sm:$0xf]
  %v4325 = vld [vmem:[%s7 + $0x2c] sm:$0xf]
  %v4326 = vld [vmem:[%s7 + $0x30] sm:$0xf]
  %v4327 = vld [vmem:[%s7 + $0x34] sm:$0xf]
  %v4328 = vld [vmem:[%s7 + $0x38] sm:$0xf]
  %v4329 = vld [vmem:[%s7 + $0x3c] sm:$0xf]
  %v4330 = vld [vmem:[%s8] sm:$0x1]
  %v4332 = vlaneseq
  %v4333 = vshrl.u32 %v4332, 7
  %v4334 = vsub.s32 0, %v4333
  %v4335 = vrot.slane %v4330, %v4334
  %v4353 = vunpack.c.l.b16 %v4314
  %v4354 = vunpack.c.l.b16 %v4315
  %v4355 = vunpack.c.l.b16 %v4316
  %v4356 = vunpack.c.l.b16 %v4317
  %v4357 = vunpack.c.l.b16 %v4318
  %v4358 = vunpack.c.l.b16 %v4319
  %v4359 = vunpack.c.l.b16 %v4320
  %v4360 = vunpack.c.l.b16 %v4321
  %v4361 = vunpack.c.l.b16 %v4322
  %v4362 = vunpack.c.l.b16 %v4323
  %v4363 = vunpack.c.l.b16 %v4324
  %v4364 = vunpack.c.l.b16 %v4325
  %v4365 = vunpack.c.l.b16 %v4326
  %v4366 = vunpack.c.l.b16 %v4327
  %v4367 = vunpack.c.l.b16 %v4328
  %v4368 = vunpack.c.l.b16 %v4329
  %v4369 = vpack.c.b16 %v4354, %v4353
  %v4370 = vpack.c.b16 %v4356, %v4355
  %v4371 = vpack.c.b16 %v4358, %v4357
  %v4372 = vpack.c.b16 %v4360, %v4359
  %v4373 = vpack.c.b16 %v4362, %v4361
  %v4374 = vpack.c.b16 %v4364, %v4363
  %v4375 = vpack.c.b16 %v4366, %v4365
  %v4376 = vpack.c.b16 %v4368, %v4367
  %4385 = vmatprep.subr.bf16.mxu0 0
  %4386 = vmatpush1.bf16.msra.mxu0 %v4369
  %4387 = vmatprep.subr.bf16.mxu0 0
  %4388 = vmatpush1.bf16.msra.mxu0 %v4370
  %4389 = vmatprep.subr.bf16.mxu0 0
  %4390 = vmatpush1.bf16.msra.mxu0 %v4371
  %4391 = vmatprep.subr.bf16.mxu0 0
  %4392 = vmatpush1.bf16.msra.mxu0 %v4372
  %4393 = vmatprep.subr.bf16.mxu0 0
  %4394 = vmatpush1.bf16.msra.mxu0 %v4373
  %4395 = vmatprep.subr.bf16.mxu0 0
  %4396 = vmatpush1.bf16.msra.mxu0 %v4374
  %4397 = vmatprep.subr.bf16.mxu0 0
  %4398 = vmatpush1.bf16.msra.mxu0 %v4375
  %4399 = vmatprep.subr.bf16.mxu0 0
  %4400 = vmatpush1.bf16.msra.mxu0 %v4376
  %4401 = vmatprep.subr.bf16.mxu0 0
  %4402 = vmatpush1.bf16.msra.mxu0 0
  %4403 = vmatprep.subr.bf16.mxu0 0
  %4404 = vmatpush1.bf16.msra.mxu0 0
  %4405 = vmatprep.subr.bf16.mxu0 0
  %4406 = vmatpush1.bf16.msra.mxu0 0
  %4407 = vmatprep.subr.bf16.mxu0 0
  %4408 = vmatpush1.bf16.msra.mxu0 0
  %4409 = vmatprep.subr.bf16.mxu0 0
  %4410 = vmatpush1.bf16.msra.mxu0 0
  %4411 = vmatprep.subr.bf16.mxu0 0
  %4412 = vmatpush1.bf16.msra.mxu0 0
  %4413 = vmatprep.subr.bf16.mxu0 0
  %4414 = vmatpush1.bf16.msra.mxu0 0
  %4415 = vmatprep.subr.bf16.mxu0 0
  %4416 = vmatpush1.bf16.msra.mxu0 0
  %4417 = vmatprep.mubr.bf16.mxu0 0
  %4418 = vmatmul.mubr.bf16.gmra.mrb[0].mxu0 %v4313
  %v4419 = vpop.f32.mrb[0].mxu0
  %v4420 = vadd.f32 %v4335, %v4419
  %v4421 = vpop.f32.mrb[0].mxu0
  %v4422 = vpop.f32.mrb[0].mxu0
  %v4423 = vpop.f32.mrb[0].mxu0
  %4424 = vdwg.mxu0
  %4425 = vst [vmem:[%s9] sm:$0xff] %v4420
  // Predicated region
  $region38: #{_lambda_.1} parent=0 // pred_check
    _
  $region39: #{_lambda_.1} parent=0 // pred_check_branch
    %4427 = sbr.rel (0) target = $region41
  $region40: #{_lambda_.1} parent=0 // pred_region
    _
  $region41: #{_lambda_.1} parent=0 // pred_fallthru
    _
  // Predicated region
  $region42: #{_lambda_.1} parent=0 // pred_check
    _
  $region43: #{_lambda_.1} parent=0 // pred_check_branch
    %4429 = sbr.rel (0) target = $region45
  $region44: #{_lambda_.1} parent=0 // pred_region
    _
  $region45: #{_lambda_.1} parent=0 // pred_fallthru
    _

</llo_original>
